<compile_context>
chip_gen: v7x
topology: tpu7x:2x2x1
jax: 0.10.0
libtpu: 0.0.40
codegen_flags: <defaults>
</compile_context>

<pallas_src>
import jax
import jax.numpy as jnp
from jax.experimental import pallas as pl
from jax.experimental.pallas import tpu as pltpu

N = 20
M = N * (N - 1) // 2  # 190

H_PAD = 128     # padded hidden width (lane-aligned; matches v5e 128x128 MXU)
OUT_COLS = 128  # padded output-projection width fed to the MXU; only column 0 is real


def _make_kernel(num_hidden):
    """Fused MLP kernel for `num_hidden` hidden (layers[i]) blocks."""

    def kernel(state_ref, move_ref, ws_ref, wm_ref, b0_ref, *rest):
        # rest = [w_h0, b_h0, ..., w_h{nh-1}, b_h{nh-1}, w_out, b_out(SMEM), out_ref]
        out_ref = rest[-1]
        b_out_ref = rest[-2]
        w_out_ref = rest[-3]

        # Fused first layer: W_s@state + W_m@move + b, ReLU.  Inputs arrive as f32
        # (tb, 190) blocks and are cast to bf16 in-kernel; f32 accumulation on MXU.
        s = state_ref[...].astype(ws_ref.dtype)
        m = move_ref[...].astype(wm_ref.dtype)
        x = jnp.dot(s, ws_ref[...], preferred_element_type=jnp.float32)
        x = x + jnp.dot(m, wm_ref[...], preferred_element_type=jnp.float32)
        x = jnp.maximum(x + b0_ref[...], 0.0)

        for h in range(num_hidden):
            w = rest[2 * h][...]
            b = rest[2 * h + 1][...]
            x = jnp.dot(x.astype(w.dtype), w, preferred_element_type=jnp.float32)
            x = jnp.maximum(x + b, 0.0)

        # Output projection (only column 0 of w_out is real); then apply the
        # bias + sigmoid epilogue to the single real logit column and store the
        # narrow (tb, 1) f32 result.
        z128 = jnp.dot(x.astype(w_out_ref.dtype), w_out_ref[...],
                       preferred_element_type=jnp.float32)
        z = z128[:, 0:1] + b_out_ref[0, 0]
        # sigmoid(z) = 1 / (1 + exp(-z)); exp + reciprocal both run on the EUP slot.
        out_ref[...] = pl.reciprocal(1.0 + jnp.exp(-z), approx=True)

    return kernel


def prepare_params(params, layer_dims, dtype=jnp.bfloat16):
    """Zero-pad weights to lane-aligned shapes; weights bf16, biases f32."""
    h0 = layer_dims[0]
    w_state = jnp.pad(params["w_state"], ((0, 0), (0, H_PAD - h0))).astype(dtype)   # (M, 128)
    w_move = jnp.pad(params["w_move"], ((0, 0), (0, H_PAD - h0))).astype(dtype)     # (M, 128)
    b0 = jnp.pad(params["b_state"], ((0, 0), (0, H_PAD - h0))).astype(jnp.float32)  # (1, 128)

    hidden = []
    for (w, b), (a, o) in zip(params["hidden"], zip(layer_dims, layer_dims[1:])):
        wp = jnp.pad(w, ((0, H_PAD - a), (0, H_PAD - o))).astype(dtype)
        bp = jnp.pad(b, ((0, 0), (0, H_PAD - o))).astype(jnp.float32)
        hidden.append((wp, bp))

    w_out = jnp.pad(params["w_out"],
                    ((0, H_PAD - layer_dims[-1]), (0, OUT_COLS - 1))).astype(dtype)
    b_out = params["b_out"].astype(jnp.float32).reshape(1, 1)  # scalar, lives in SMEM
    return w_state, w_move, b0, hidden, w_out, b_out


def my_model_forward(state, move, params, layer_dims, *, tb=512, dtype=jnp.bfloat16):
    """Pallas forward pass.  For large B, pass tb=1024..2048 (keep b_pad//tb >= 2
    so the parallel batch axis still splits across both v7x TensorCores)."""
    B = state.shape[0]
    w_state, w_move, b0, hidden, w_out, b_out = prepare_params(params, layer_dims, dtype)

    b_pad = pl.cdiv(B, tb) * tb
    if b_pad != B:  # pad batch rows only (no concat / no dtype-cast pre-pass)
        state = jnp.pad(state, ((0, b_pad - B), (0, 0)))
        move = jnp.pad(move, ((0, b_pad - B), (0, 0)))

    weight_inputs = [w_state, w_move, b0]
    for (w, b) in hidden:
        weight_inputs += [w, b]
    weight_inputs += [w_out]

    # Full-array blocks with a constant index map: weights stay resident in VMEM
    # across all grid steps (no per-step re-DMA).
    # TODO(synk): could add pipeline_mode=pl.Buffered(1) to drop the redundant second
    # weight buffer (~100 KiB) once that path is exercised; constant index maps
    # already avoid per-step weight DMAs.
    def vmem_const(arr):
        return pl.BlockSpec(arr.shape, lambda i: (0, 0))

    in_specs = (
        [pl.BlockSpec((tb, M), lambda i: (i, 0)),   # state: streamed f32 blocks
         pl.BlockSpec((tb, M), lambda i: (i, 0))]   # move:  streamed f32 blocks
        + [vmem_const(a) for a in weight_inputs]
        + [pl.BlockSpec(memory_space=pltpu.MemorySpace.SMEM)]  # b_out scalar
    )
    out_specs = pl.BlockSpec((tb, 1), lambda i: (i, 0))

    num_hidden = len(hidden)
    flops = 2 * b_pad * (2 * M * H_PAD + num_hidden * H_PAD * H_PAD + H_PAD * OUT_COLS)
    bytes_accessed = (
        2 * b_pad * M * 4                                              # state + move (f32)
        + sum(int(a.size) * a.dtype.itemsize for a in weight_inputs)  # resident weights
        + 4                                                            # b_out scalar
        + b_pad * 4                                                    # narrow f32 output
    )

    out = pl.pallas_call(
        _make_kernel(num_hidden),
        out_shape=jax.ShapeDtypeStruct((b_pad, 1), jnp.float32),
        grid=(b_pad // tb,),
        in_specs=in_specs,
        out_specs=out_specs,
        compiler_params=pltpu.CompilerParams(dimension_semantics=("parallel",)),
        cost_estimate=pl.CostEstimate(
            flops=flops,
            transcendentals=2 * b_pad,     # one exp + one reciprocal per row
            bytes_accessed=bytes_accessed,
        ),
    )(state, move, *weight_inputs, b_out)

    return out if b_pad == B else out[:B]


def _linear_init(key, fan_in, fan_out, with_bias=True):
    # PyTorch nn.Linear default init: U(-1/sqrt(fan_in), +1/sqrt(fan_in)).
    kw, kb = jax.random.split(key)
    bound = 1.0 / (fan_in ** 0.5)
    w = jax.random.uniform(kw, (fan_in, fan_out), jnp.float32, -bound, bound)
    if with_bias:
        b = jax.random.uniform(kb, (1, fan_out), jnp.float32, -bound, bound)
        return w, b
    return w


def init_params(key, layer_dims):
    n_keys = 2 + len(layer_dims)
    keys = jax.random.split(key, n_keys)
    w_state, b_state = _linear_init(keys[0], M, layer_dims[0])
    w_move = _linear_init(keys[1], M, layer_dims[0], with_bias=False)
    hidden = []
    for i, (a, b) in enumerate(zip(layer_dims, layer_dims[1:])):
        hidden.append(_linear_init(keys[2 + i], a, b))
    w_out, b_out = _linear_init(keys[1 + len(layer_dims)], layer_dims[-1], 1)
    return {
        "w_state": w_state,
        "b_state": b_state,
        "w_move": w_move,
        "hidden": hidden,
        "w_out": w_out,
        "b_out": b_out,
    }


def reference_forward(state, move, params, *, cast_dtype=None):
    """Pure-JAX reference; cast_dtype=jnp.bfloat16 mimics the kernel's MXU numerics."""
    c = (lambda a: a.astype(cast_dtype)) if cast_dtype is not None else (lambda a: a)
    x = (
        jnp.dot(c(state), c(params["w_state"]), preferred_element_type=jnp.float32)
        + jnp.dot(c(move), c(params["w_move"]), preferred_element_type=jnp.float32)
        + params["b_state"]
    )
    x = jnp.maximum(x, 0.0)
    for (w, b) in params["hidden"]:
        x = jnp.maximum(
            jnp.dot(c(x), c(w), preferred_element_type=jnp.float32) + b, 0.0
        )
    z = jnp.dot(c(x), c(params["w_out"]), preferred_element_type=jnp.float32)
    z = z + params["b_out"]
    return jax.nn.sigmoid(z)


if __name__ == "__main__":
    key = jax.random.PRNGKey(0)
    k_params, k_state, k_move = jax.random.split(key, 3)

    layer_dims = [64, 32]
    B = 1024   # demo batch: 2 grid steps of TB=512 (keeps megacore split on v7x)
    TB = 512

    params = init_params(k_params, layer_dims)
    state = jax.random.normal(k_state, (B, M), jnp.float32)
    move = jax.random.normal(k_move, (B, M), jnp.float32)

    out = my_model_forward(state, move, params, layer_dims, tb=TB)
    out = jax.block_until_ready(out)
    assert out.shape == (B, 1)

    # Check against a reference with matching bf16-into-MXU numerics (tight) and
    # against the exact f32 reference (loose, covers bf16 quantization).
    ref_bf16 = reference_forward(state, move, params, cast_dtype=jnp.bfloat16)
    assert jnp.allclose(out, ref_bf16, atol=5e-3, rtol=5e-3)
    ref_f32 = reference_forward(state, move, params)
    assert jnp.allclose(out, ref_f32, atol=5e-2, rtol=5e-2)

    print("KERNEL_OK")
</pallas_src>

<mosaic_0001>
module attributes {stable_mosaic.version = 11 : i64} {
  func.func @kernel(%arg0: i32, %arg1: memref<512x190xf32, #tpu.memory_space<vmem>>, %arg2: memref<512x190xf32, #tpu.memory_space<vmem>>, %arg3: memref<190x128xbf16, #tpu.memory_space<vmem>>, %arg4: memref<190x128xbf16, #tpu.memory_space<vmem>>, %arg5: memref<1x128xf32, #tpu.memory_space<vmem>>, %arg6: memref<128x128xbf16, #tpu.memory_space<vmem>>, %arg7: memref<1x128xf32, #tpu.memory_space<vmem>>, %arg8: memref<128x128xbf16, #tpu.memory_space<vmem>>, %arg9: memref<1x1xf32, #tpu.memory_space<smem>>, %arg10: memref<512x1xf32, #tpu.memory_space<vmem>>) attributes {dimension_semantics = [#tpu.dimension_semantics<parallel>], iteration_bounds = array<i64: 2>, scalar_prefetch = 0 : i64, scratch_operands = 0 : i64, tpu.core_type = #tpu.core_type<tc>, window_params = [{transform_indices = @transform_0, window_bounds = array<i64: 512, 190>}, {transform_indices = @transform_1, window_bounds = array<i64: 512, 190>}, {pipeline_mode = #tpu.pipeline_mode<synchronous>, transform_indices = @transform_2, window_bounds = array<i64: 190, 128>}, {pipeline_mode = #tpu.pipeline_mode<synchronous>, transform_indices = @transform_3, window_bounds = array<i64: 190, 128>}, {pipeline_mode = #tpu.pipeline_mode<synchronous>, transform_indices = @transform_4, window_bounds = array<i64: 1, 128>}, {pipeline_mode = #tpu.pipeline_mode<synchronous>, transform_indices = @transform_5, window_bounds = array<i64: 128, 128>}, {pipeline_mode = #tpu.pipeline_mode<synchronous>, transform_indices = @transform_6, window_bounds = array<i64: 1, 128>}, {pipeline_mode = #tpu.pipeline_mode<synchronous>, transform_indices = @transform_7, window_bounds = array<i64: 128, 128>}, {transform_indices = @transform_8, window_bounds = array<i64: 1, 1>}, {transform_indices = @transform_9, window_bounds = array<i64: 512, 1>}]} {
    %c0 = arith.constant 0 : index
    %c0_0 = arith.constant 0 : index
    %0 = vector.load %arg1[%c0, %c0_0] : memref<512x190xf32, #tpu.memory_space<vmem>>, vector<512x190xf32>
    %1 = arith.truncf %0 : vector<512x190xf32> to vector<512x190xbf16>
    %c0_1 = arith.constant 0 : index
    %c0_2 = arith.constant 0 : index
    %2 = vector.load %arg2[%c0_1, %c0_2] : memref<512x190xf32, #tpu.memory_space<vmem>>, vector<512x190xf32>
    %3 = arith.truncf %2 : vector<512x190xf32> to vector<512x190xbf16>
    %c0_3 = arith.constant 0 : index
    %c0_4 = arith.constant 0 : index
    %4 = vector.load %arg3[%c0_3, %c0_4] : memref<190x128xbf16, #tpu.memory_space<vmem>>, vector<190x128xbf16>
    %cst = arith.constant dense<0.000000e+00> : vector<512x128xf32>
    %5 = tpu.matmul %1, %4, %cst {dimension_numbers = #tpu.dot_dimension_numbers<[1], [0], [0], [1], [0, 0, 1, 1], [], []>} : vector<512x190xbf16>, vector<190x128xbf16>, vector<512x128xf32> -> vector<512x128xf32>
    %c0_5 = arith.constant 0 : index
    %c0_6 = arith.constant 0 : index
    %6 = vector.load %arg4[%c0_5, %c0_6] : memref<190x128xbf16, #tpu.memory_space<vmem>>, vector<190x128xbf16>
    %cst_7 = arith.constant dense<0.000000e+00> : vector<512x128xf32>
    %7 = tpu.matmul %3, %6, %cst_7 {dimension_numbers = #tpu.dot_dimension_numbers<[1], [0], [0], [1], [0, 0, 1, 1], [], []>} : vector<512x190xbf16>, vector<190x128xbf16>, vector<512x128xf32> -> vector<512x128xf32>
    %8 = arith.addf %5, %7 : vector<512x128xf32>
    %c0_8 = arith.constant 0 : index
    %c0_9 = arith.constant 0 : index
    %9 = vector.load %arg5[%c0_8, %c0_9] : memref<1x128xf32, #tpu.memory_space<vmem>>, vector<1x128xf32>
    %10 = vector.broadcast %9 : vector<1x128xf32> to vector<512x128xf32>
    %11 = arith.addf %8, %10 : vector<512x128xf32>
    %cst_10 = arith.constant 0.000000e+00 : f32
    %12 = vector.broadcast %cst_10 : f32 to vector<512x128xf32>
    %13 = arith.maximumf %11, %12 : vector<512x128xf32>
    %c0_11 = arith.constant 0 : index
    %c0_12 = arith.constant 0 : index
    %14 = vector.load %arg6[%c0_11, %c0_12] : memref<128x128xbf16, #tpu.memory_space<vmem>>, vector<128x128xbf16>
    %c0_13 = arith.constant 0 : index
    %c0_14 = arith.constant 0 : index
    %15 = vector.load %arg7[%c0_13, %c0_14] : memref<1x128xf32, #tpu.memory_space<vmem>>, vector<1x128xf32>
    %16 = arith.truncf %13 : vector<512x128xf32> to vector<512x128xbf16>
    %cst_15 = arith.constant dense<0.000000e+00> : vector<512x128xf32>
    %17 = tpu.matmul %16, %14, %cst_15 {dimension_numbers = #tpu.dot_dimension_numbers<[1], [0], [0], [1], [0, 0, 1, 1], [], []>} : vector<512x128xbf16>, vector<128x128xbf16>, vector<512x128xf32> -> vector<512x128xf32>
    %18 = vector.broadcast %15 : vector<1x128xf32> to vector<512x128xf32>
    %19 = arith.addf %17, %18 : vector<512x128xf32>
    %cst_16 = arith.constant 0.000000e+00 : f32
    %20 = vector.broadcast %cst_16 : f32 to vector<512x128xf32>
    %21 = arith.maximumf %19, %20 : vector<512x128xf32>
    %22 = arith.truncf %21 : vector<512x128xf32> to vector<512x128xbf16>
    %c0_17 = arith.constant 0 : index
    %c0_18 = arith.constant 0 : index
    %23 = vector.load %arg8[%c0_17, %c0_18] : memref<128x128xbf16, #tpu.memory_space<vmem>>, vector<128x128xbf16>
    %cst_19 = arith.constant dense<0.000000e+00> : vector<512x128xf32>
    %24 = tpu.matmul %22, %23, %cst_19 {dimension_numbers = #tpu.dot_dimension_numbers<[1], [0], [0], [1], [0, 0, 1, 1], [], []>} : vector<512x128xbf16>, vector<128x128xbf16>, vector<512x128xf32> -> vector<512x128xf32>
    %25 = vector.extract_strided_slice %24 {offsets = [0, 0], sizes = [512, 1], strides = [1, 1]} : vector<512x128xf32> to vector<512x1xf32>
    %c0_20 = arith.constant 0 : index
    %c0_21 = arith.constant 0 : index
    %26 = memref.load %arg9[%c0_20, %c0_21] : memref<1x1xf32, #tpu.memory_space<smem>>
    %27 = vector.broadcast %26 : f32 to vector<512x1xf32>
    %28 = arith.addf %25, %27 : vector<512x1xf32>
    %cst_22 = arith.constant 0.000000e+00 : f32
    %29 = vector.broadcast %cst_22 : f32 to vector<512x1xf32>
    %30 = arith.subf %29, %28 : vector<512x1xf32>
    %31 = math.exp %30 : vector<512x1xf32>
    %cst_23 = arith.constant 1.000000e+00 : f32
    %32 = vector.broadcast %cst_23 : f32 to vector<512x1xf32>
    %33 = arith.addf %32, %31 : vector<512x1xf32>
    %34 = tpu.reciprocal %33 {approx = true} : vector<512x1xf32> -> vector<512x1xf32>
    %c0_24 = arith.constant 0 : index
    %c0_25 = arith.constant 0 : index
    %35 = vector.load %arg10[%c0_24, %c0_25] : memref<512x1xf32, #tpu.memory_space<vmem>>, vector<512x1xf32>
    tpu.vector_store %arg10[%c0_24, %c0_25], %34 {strides = array<i32>} : memref<512x1xf32, #tpu.memory_space<vmem>>, vector<512x1xf32>,
    return
  }
  func.func @transform_0(%arg0: i32) -> (i32, i32) {
    %c0_i32 = arith.constant 0 : i32
    %c0_i32_0 = arith.constant 0 : i32
    return %arg0, %c0_i32 : i32, i32
  }
  func.func @transform_1(%arg0: i32) -> (i32, i32) {
    %c0_i32 = arith.constant 0 : i32
    %c0_i32_0 = arith.constant 0 : i32
    return %arg0, %c0_i32 : i32, i32
  }
  func.func @transform_2(%arg0: i32) -> (i32, i32) {
    %c0_i32 = arith.constant 0 : i32
    %c0_i32_0 = arith.constant 0 : i32
    %c0_i32_1 = arith.constant 0 : i32
    return %c0_i32, %c0_i32_0 : i32, i32
  }
  func.func @transform_3(%arg0: i32) -> (i32, i32) {
    %c0_i32 = arith.constant 0 : i32
    %c0_i32_0 = arith.constant 0 : i32
    %c0_i32_1 = arith.constant 0 : i32
    return %c0_i32, %c0_i32_0 : i32, i32
  }
  func.func @transform_4(%arg0: i32) -> (i32, i32) {
    %c0_i32 = arith.constant 0 : i32
    %c0_i32_0 = arith.constant 0 : i32
    %c0_i32_1 = arith.constant 0 : i32
    return %c0_i32, %c0_i32_0 : i32, i32
  }
  func.func @transform_5(%arg0: i32) -> (i32, i32) {
    %c0_i32 = arith.constant 0 : i32
    %c0_i32_0 = arith.constant 0 : i32
    %c0_i32_1 = arith.constant 0 : i32
    return %c0_i32, %c0_i32_0 : i32, i32
  }
  func.func @transform_6(%arg0: i32) -> (i32, i32) {
    %c0_i32 = arith.constant 0 : i32
    %c0_i32_0 = arith.constant 0 : i32
    %c0_i32_1 = arith.constant 0 : i32
    return %c0_i32, %c0_i32_0 : i32, i32
  }
  func.func @transform_7(%arg0: i32) -> (i32, i32) {
    %c0_i32 = arith.constant 0 : i32
    %c0_i32_0 = arith.constant 0 : i32
    %c0_i32_1 = arith.constant 0 : i32
    return %c0_i32, %c0_i32_0 : i32, i32
  }
  func.func @transform_8(%arg0: i32) -> (i32, i32) {
    %c0_i32 = arith.constant 0 : i32
    %c0_i32_0 = arith.constant 0 : i32
    %c0_i32_1 = arith.constant 0 : i32
    return %c0_i32, %c0_i32_0 : i32, i32
  }
  func.func @transform_9(%arg0: i32) -> (i32, i32) {
    %c0_i32 = arith.constant 0 : i32
    %c0_i32_0 = arith.constant 0 : i32
    return %arg0, %c0_i32 : i32, i32
  }
}

</mosaic_0001>

<llo_original>
// kernel: tpu_custom_call.1
$region0: #{tpu_custom_call.1}
  #allocation0 [shape = 'u32[]', space=smem, size = 0x4, offset = 0x4, fixed_abs, tag = 'smem constant byte address 0x4 - core index']
  #allocation1 [shape = 'u32[144,128]{1,0:T(1,128)}', space=vmem, size = 0x12000, scoped, tag = 'internal scratch']
  #allocation2 [shape = 'f32[1,1]{1,0:T(1,128)S(6)}', space=smem, size = 0x200, scoped, tag = 'scoped memory for tpu_custom_call.1']
  %s0 = inlined_call_operand.vmem [shape: f32[1024,190], index: 0, kind: input, shape index: {}]
  %s1 = inlined_call_operand.vmem [shape: f32[1024,190], index: 1, kind: input, shape index: {}]
  %s2 = inlined_call_operand.vmem [shape: bf16[190,128], index: 2, kind: input, shape index: {}]
  %s3 = inlined_call_operand.vmem [shape: bf16[190,128], index: 3, kind: input, shape index: {}]
  %s4 = inlined_call_operand.vmem [shape: f32[1,128], index: 4, kind: input, shape index: {}]
  %s5 = inlined_call_operand.vmem [shape: bf16[128,128], index: 5, kind: input, shape index: {}]
  %s6 = inlined_call_operand.vmem [shape: f32[1,128], index: 6, kind: input, shape index: {}]
  %s7 = inlined_call_operand.vmem [shape: bf16[128,128], index: 7, kind: input, shape index: {}]
  %s8 = inlined_call_operand.<no memory space> [shape: f32[1,1], index: 8, kind: input, shape index: {}]
  %s9 = inlined_call_operand.vmem [shape: f32[1024,1], index: 9, kind: output, shape index: {}]
  %s10 = sld [smem:[#allocation0]]
  $region69: #{tpu_custom_call.1} parent=0
    _
  %s12 = ssub.s32 1, %s10
  %s13 = scalar_select 0, %s12, %s10
  %14 = sst [smem:[#allocation2]] %s8
  loop: start=0, step=1, limit=4
  $region2: #{tpu_custom_call.1} parent=0 // loop_pre_header
    _
  $region3: #{tpu_custom_call.1} parent=0 // loop_header
    %s16 = sphi 0, %s20
    %p17 = scmp.ge.s32.totalorder %s16, 4
    %s26 = sphi 0, %s28
    %s29 = sphi 0, %s26
    %s30 = sphi 0, %s29
    %s46 = sphi 0, %s30
    %s52 = sphi 0, %s54
    %s55 = sphi 0, %s52
    %s56 = sphi 0, %s55
    %s72 = sphi 0, %s56
    %s76 = sphi 0, %s76
    %s78 = sphi 0, %s76
    %s79 = sphi 0, %s78
    %s93 = sphi 0, %s79
    %s97 = sphi 0, %s97
    %s99 = sphi 0, %s97
    %s100 = sphi 0, %s99
    %s114 = sphi 0, %s100
    %s118 = sphi 0, %s118
    %s120 = sphi 0, %s118
    %s121 = sphi 0, %s120
    %s135 = sphi 0, %s121
    %s139 = sphi 0, %s139
    %s141 = sphi 0, %s139
    %s142 = sphi 0, %s141
    %s156 = sphi 0, %s142
    %s160 = sphi 0, %s160
    %s162 = sphi 0, %s160
    %s163 = sphi 0, %s162
    %s177 = sphi 0, %s163
    %s181 = sphi 0, %s181
    %s183 = sphi 0, %s181
    %s184 = sphi 0, %s183
    %s198 = sphi 0, %s184
    %s202 = sphi 0, %s202
    %s204 = sphi 0, %s202
    %s205 = sphi 0, %s204
    %s219 = sphi 0, %s205
    %s225 = sphi 0, %s227
    %s228 = sphi 0, %s225
    %s229 = sphi 0, %s228
    %s245 = sphi 0, %s229
  $region4: #{tpu_custom_call.1} parent=0 // loop_header_branch
    %19 = sbr.rel (%p17) target = $region8
  $region5: #{tpu_custom_call.1} parent=0 // loop_body
    %s21 = ssub.s32 %s16, 1
    %s22 = ssub.s32 %s16, 2
    %s23 = sadd.s32 %s16, 1
    %s24 = ssub.s32 %s16, %s23
    %p25 = scmp.eq.s32.totalorder %s24, 0
    %s27 = sadd.s32 %s26, 1
    %s28 = scalar_select %p25, %s26, %s27
    %p31 = pneg %p25
    %p32 = scmp.eq.s32.totalorder %s16, 1
    %p33 = por %p31, %p32
    %p34 = scmp.ne.s32.totalorder %s26, %s29
    %p35 = scmp.eq.s32.totalorder %s16, 0
    %p36 = por %p34, %p35
    %p37 = scmp.ne.s32.totalorder %s26, %s29
    %p38 = scmp.eq.s32.totalorder %s21, 1
    %p39 = por %p37, %p38
    %p40 = scmp.ne.s32.totalorder %s29, %s30
    %p41 = scmp.eq.s32.totalorder %s21, 0
    %p42 = por %p40, %p41
    %p43 = scmp.ne.s32.totalorder %s29, %s30
    %p44 = scmp.eq.s32.totalorder %s22, 1
    %p45 = por %p43, %p44
    %p47 = scmp.ne.s32.totalorder %s30, %s46
    %p48 = scmp.eq.s32.totalorder %s22, 0
    %p49 = por %p47, %p48
    %s50 = ssub.s32 %s16, %s23
    %p51 = scmp.eq.s32.totalorder %s50, 0
    %s53 = sadd.s32 %s52, 1
    %s54 = scalar_select %p51, %s52, %s53
    %p57 = pneg %p51
    %p58 = scmp.eq.s32.totalorder %s16, 1
    %p59 = por %p57, %p58
    %p60 = scmp.ne.s32.totalorder %s52, %s55
    %p61 = scmp.eq.s32.totalorder %s16, 0
    %p62 = por %p60, %p61
    %p63 = scmp.ne.s32.totalorder %s52, %s55
    %p64 = scmp.eq.s32.totalorder %s21, 1
    %p65 = por %p63, %p64
    %p66 = scmp.ne.s32.totalorder %s55, %s56
    %p67 = scmp.eq.s32.totalorder %s21, 0
    %p68 = por %p66, %p67
    %p69 = scmp.ne.s32.totalorder %s55, %s56
    %p70 = scmp.eq.s32.totalorder %s22, 1
    %p71 = por %p69, %p70
    %p73 = scmp.ne.s32.totalorder %s56, %s72
    %p74 = scmp.eq.s32.totalorder %s22, 0
    %p75 = por %p73, %p74
    %s77 = sadd.s32 %s76, 1
    %p80 = scmp.eq.s32.totalorder %s16, 1
    %p81 = scmp.ne.s32.totalorder %s76, %s78
    %p82 = scmp.eq.s32.totalorder %s16, 0
    %p83 = por %p81, %p82
    %p84 = scmp.ne.s32.totalorder %s76, %s78
    %p85 = scmp.eq.s32.totalorder %s21, 1
    %p86 = por %p84, %p85
    %p87 = scmp.ne.s32.totalorder %s78, %s79
    %p88 = scmp.eq.s32.totalorder %s21, 0
    %p89 = por %p87, %p88
    %p90 = scmp.ne.s32.totalorder %s78, %s79
    %p91 = scmp.eq.s32.totalorder %s22, 1
    %p92 = por %p90, %p91
    %p94 = scmp.ne.s32.totalorder %s79, %s93
    %p95 = scmp.eq.s32.totalorder %s22, 0
    %p96 = por %p94, %p95
    %s98 = sadd.s32 %s97, 1
    %p101 = scmp.eq.s32.totalorder %s16, 1
    %p102 = scmp.ne.s32.totalorder %s97, %s99
    %p103 = scmp.eq.s32.totalorder %s16, 0
    %p104 = por %p102, %p103
    %p105 = scmp.ne.s32.totalorder %s97, %s99
    %p106 = scmp.eq.s32.totalorder %s21, 1
    %p107 = por %p105, %p106
    %p108 = scmp.ne.s32.totalorder %s99, %s100
    %p109 = scmp.eq.s32.totalorder %s21, 0
    %p110 = por %p108, %p109
    %p111 = scmp.ne.s32.totalorder %s99, %s100
    %p112 = scmp.eq.s32.totalorder %s22, 1
    %p113 = por %p111, %p112
    %p115 = scmp.ne.s32.totalorder %s100, %s114
    %p116 = scmp.eq.s32.totalorder %s22, 0
    %p117 = por %p115, %p116
    %s119 = sadd.s32 %s118, 1
    %p122 = scmp.eq.s32.totalorder %s16, 1
    %p123 = scmp.ne.s32.totalorder %s118, %s120
    %p124 = scmp.eq.s32.totalorder %s16, 0
    %p125 = por %p123, %p124
    %p126 = scmp.ne.s32.totalorder %s118, %s120
    %p127 = scmp.eq.s32.totalorder %s21, 1
    %p128 = por %p126, %p127
    %p129 = scmp.ne.s32.totalorder %s120, %s121
    %p130 = scmp.eq.s32.totalorder %s21, 0
    %p131 = por %p129, %p130
    %p132 = scmp.ne.s32.totalorder %s120, %s121
    %p133 = scmp.eq.s32.totalorder %s22, 1
    %p134 = por %p132, %p133
    %p136 = scmp.ne.s32.totalorder %s121, %s135
    %p137 = scmp.eq.s32.totalorder %s22, 0
    %p138 = por %p136, %p137
    %s140 = sadd.s32 %s139, 1
    %p143 = scmp.eq.s32.totalorder %s16, 1
    %p144 = scmp.ne.s32.totalorder %s139, %s141
    %p145 = scmp.eq.s32.totalorder %s16, 0
    %p146 = por %p144, %p145
    %p147 = scmp.ne.s32.totalorder %s139, %s141
    %p148 = scmp.eq.s32.totalorder %s21, 1
    %p149 = por %p147, %p148
    %p150 = scmp.ne.s32.totalorder %s141, %s142
    %p151 = scmp.eq.s32.totalorder %s21, 0
    %p152 = por %p150, %p151
    %p153 = scmp.ne.s32.totalorder %s141, %s142
    %p154 = scmp.eq.s32.totalorder %s22, 1
    %p155 = por %p153, %p154
    %p157 = scmp.ne.s32.totalorder %s142, %s156
    %p158 = scmp.eq.s32.totalorder %s22, 0
    %p159 = por %p157, %p158
    %s161 = sadd.s32 %s160, 1
    %p164 = scmp.eq.s32.totalorder %s16, 1
    %p165 = scmp.ne.s32.totalorder %s160, %s162
    %p166 = scmp.eq.s32.totalorder %s16, 0
    %p167 = por %p165, %p166
    %p168 = scmp.ne.s32.totalorder %s160, %s162
    %p169 = scmp.eq.s32.totalorder %s21, 1
    %p170 = por %p168, %p169
    %p171 = scmp.ne.s32.totalorder %s162, %s163
    %p172 = scmp.eq.s32.totalorder %s21, 0
    %p173 = por %p171, %p172
    %p174 = scmp.ne.s32.totalorder %s162, %s163
    %p175 = scmp.eq.s32.totalorder %s22, 1
    %p176 = por %p174, %p175
    %p178 = scmp.ne.s32.totalorder %s163, %s177
    %p179 = scmp.eq.s32.totalorder %s22, 0
    %p180 = por %p178, %p179
    %s182 = sadd.s32 %s181, 1
    %p185 = scmp.eq.s32.totalorder %s16, 1
    %p186 = scmp.ne.s32.totalorder %s181, %s183
    %p187 = scmp.eq.s32.totalorder %s16, 0
    %p188 = por %p186, %p187
    %p189 = scmp.ne.s32.totalorder %s181, %s183
    %p190 = scmp.eq.s32.totalorder %s21, 1
    %p191 = por %p189, %p190
    %p192 = scmp.ne.s32.totalorder %s183, %s184
    %p193 = scmp.eq.s32.totalorder %s21, 0
    %p194 = por %p192, %p193
    %p195 = scmp.ne.s32.totalorder %s183, %s184
    %p196 = scmp.eq.s32.totalorder %s22, 1
    %p197 = por %p195, %p196
    %p199 = scmp.ne.s32.totalorder %s184, %s198
    %p200 = scmp.eq.s32.totalorder %s22, 0
    %p201 = por %p199, %p200
    %s203 = sadd.s32 %s202, 1
    %p206 = scmp.eq.s32.totalorder %s16, 1
    %p207 = scmp.ne.s32.totalorder %s202, %s204
    %p208 = scmp.eq.s32.totalorder %s16, 0
    %p209 = por %p207, %p208
    %p210 = scmp.ne.s32.totalorder %s202, %s204
    %p211 = scmp.eq.s32.totalorder %s21, 1
    %p212 = por %p210, %p211
    %p213 = scmp.ne.s32.totalorder %s204, %s205
    %p214 = scmp.eq.s32.totalorder %s21, 0
    %p215 = por %p213, %p214
    %p216 = scmp.ne.s32.totalorder %s204, %s205
    %p217 = scmp.eq.s32.totalorder %s22, 1
    %p218 = por %p216, %p217
    %p220 = scmp.ne.s32.totalorder %s205, %s219
    %p221 = scmp.eq.s32.totalorder %s22, 0
    %p222 = por %p220, %p221
    %s223 = ssub.s32 %s16, %s23
    %p224 = scmp.eq.s32.totalorder %s223, 0
    %s226 = sadd.s32 %s225, 1
    %s227 = scalar_select %p224, %s225, %s226
    %p230 = pneg %p224
    %p231 = scmp.eq.s32.totalorder %s16, 1
    %p232 = por %p230, %p231
    %p233 = scmp.ne.s32.totalorder %s225, %s228
    %p234 = scmp.eq.s32.totalorder %s16, 0
    %p235 = por %p233, %p234
    %p236 = scmp.ne.s32.totalorder %s225, %s228
    %p237 = scmp.eq.s32.totalorder %s21, 1
    %p238 = por %p236, %p237
    %p239 = scmp.ne.s32.totalorder %s228, %s229
    %p240 = scmp.eq.s32.totalorder %s21, 0
    %p241 = por %p239, %p240
    %p242 = scmp.ne.s32.totalorder %s228, %s229
    %p243 = scmp.eq.s32.totalorder %s22, 1
    %p244 = por %p242, %p243
    %p246 = scmp.ne.s32.totalorder %s229, %s245
    %p247 = scmp.eq.s32.totalorder %s22, 0
    %p248 = por %p246, %p247
    %p249 = scmp.le.s32.totalorder 1, %s16
    %p250 = scmp.lt.s32.totalorder %s16, 3
    %p251 = pnand %p249, %p250
    %p252 = pneg %p251
    // Predicated region
    $region9: #{tpu_custom_call.1} parent=5 // pred_check
      _
    $region10: #{tpu_custom_call.1} parent=5 // pred_check_branch
      %254 = sbr.rel (%p251) target = $region12
    $region11: #{tpu_custom_call.1} parent=5 // pred_region
      %s255 = ssub.s32 %s16, 1
      // Predicated region
      $region13: #{tpu_custom_call.1} parent=11 // pred_check
        %p256 = pneg %p89
      $region14: #{tpu_custom_call.1} parent=11 // pred_check_branch
        %258 = sbr.rel (%p256) target = $region16
      $region15: #{tpu_custom_call.1} parent=11 // pred_region
        _
      $region16: #{tpu_custom_call.1} parent=11 // pred_fallthru
        _
      // Predicated region
      $region17: #{tpu_custom_call.1} parent=11 // pred_check
        %p259 = pneg %p110
      $region18: #{tpu_custom_call.1} parent=11 // pred_check_branch
        %261 = sbr.rel (%p259) target = $region20
      $region19: #{tpu_custom_call.1} parent=11 // pred_region
        _
      $region20: #{tpu_custom_call.1} parent=11 // pred_fallthru
        _
      // Predicated region
      $region21: #{tpu_custom_call.1} parent=11 // pred_check
        %p262 = pneg %p131
      $region22: #{tpu_custom_call.1} parent=11 // pred_check_branch
        %264 = sbr.rel (%p262) target = $region24
      $region23: #{tpu_custom_call.1} parent=11 // pred_region
        _
      $region24: #{tpu_custom_call.1} parent=11 // pred_fallthru
        _
      // Predicated region
      $region25: #{tpu_custom_call.1} parent=11 // pred_check
        %p265 = pneg %p152
      $region26: #{tpu_custom_call.1} parent=11 // pred_check_branch
        %267 = sbr.rel (%p265) target = $region28
      $region27: #{tpu_custom_call.1} parent=11 // pred_region
        _
      $region28: #{tpu_custom_call.1} parent=11 // pred_fallthru
        _
      // Predicated region
      $region29: #{tpu_custom_call.1} parent=11 // pred_check
        %p268 = pneg %p173
      $region30: #{tpu_custom_call.1} parent=11 // pred_check_branch
        %270 = sbr.rel (%p268) target = $region32
      $region31: #{tpu_custom_call.1} parent=11 // pred_region
        _
      $region32: #{tpu_custom_call.1} parent=11 // pred_fallthru
        _
      // Predicated region
      $region33: #{tpu_custom_call.1} parent=11 // pred_check
        %p271 = pneg %p194
      $region34: #{tpu_custom_call.1} parent=11 // pred_check_branch
        %273 = sbr.rel (%p271) target = $region36
      $region35: #{tpu_custom_call.1} parent=11 // pred_region
        _
      $region36: #{tpu_custom_call.1} parent=11 // pred_fallthru
        _
      // Predicated region
      $region37: #{tpu_custom_call.1} parent=11 // pred_check
        %p274 = pneg %p215
      $region38: #{tpu_custom_call.1} parent=11 // pred_check_branch
        %276 = sbr.rel (%p274) target = $region40
      $region39: #{tpu_custom_call.1} parent=11 // pred_region
        _
      $region40: #{tpu_custom_call.1} parent=11 // pred_fallthru
        _
    $region12: #{tpu_custom_call.1} parent=5 // pred_fallthru
      _
    %p277 = scmp.lt.s32.totalorder %s16, 2
    // Predicated region
    $region41: #{tpu_custom_call.1} parent=5 // pred_check
      %p278 = pneg %p277
    $region42: #{tpu_custom_call.1} parent=5 // pred_check_branch
      %280 = sbr.rel (%p278) target = $region44
    $region43: #{tpu_custom_call.1} parent=5 // pred_region
      // Predicated region
      $region45: #{tpu_custom_call.1} parent=43 // pred_check
        %p281 = pneg %p36
      $region46: #{tpu_custom_call.1} parent=43 // pred_check_branch
        %283 = sbr.rel (%p281) target = $region48
      $region47: #{tpu_custom_call.1} parent=43 // pred_region
        %s284 = smul.u32 64, %s16
        %p285 = scmp.lt.s32.totalorder %s284, 127
        %s286 = scalar_select %p285, %s284, 127
        %s287 = smul.addr %s286, 2
        %s288 = smul.addr %s287, 8
        %s289 = scalar_lea.vmem %s0, %s288
        %s290 = smul.u32 64, %s16
      $region48: #{tpu_custom_call.1} parent=43 // pred_fallthru
        _
      // Predicated region
      $region49: #{tpu_custom_call.1} parent=43 // pred_check
        %p291 = pneg %p62
      $region50: #{tpu_custom_call.1} parent=43 // pred_check_branch
        %293 = sbr.rel (%p291) target = $region52
      $region51: #{tpu_custom_call.1} parent=43 // pred_region
        %s294 = smul.u32 64, %s16
        %p295 = scmp.lt.s32.totalorder %s294, 127
        %s296 = scalar_select %p295, %s294, 127
        %s297 = smul.addr %s296, 2
        %s298 = smul.addr %s297, 8
        %s299 = scalar_lea.vmem %s1, %s298
        %s300 = smul.u32 64, %s16
      $region52: #{tpu_custom_call.1} parent=43 // pred_fallthru
        _
    $region44: #{tpu_custom_call.1} parent=5 // pred_fallthru
      _
    %p301 = scmp.le.s32.totalorder 1, %s16
    %p302 = scmp.lt.s32.totalorder %s16, 3
    %p303 = pnand %p301, %p302
    %p304 = pneg %p303
    // Predicated region
    $region53: #{tpu_custom_call.1} parent=5 // pred_check
      _
    $region54: #{tpu_custom_call.1} parent=5 // pred_check_branch
      %306 = sbr.rel (%p303) target = $region56
    $region55: #{tpu_custom_call.1} parent=5 // pred_region
      %s307 = ssub.s32 %s16, 1
      %s308 = smul.u32 64, %s21
      %p309 = scmp.lt.s32.totalorder %s308, 127
      %s310 = scalar_select %p309, %s308, 127
      %s311 = smul.addr %s310, 2
      %s312 = smul.addr %s311, 8
      %s313 = scalar_lea.vmem %s0, %s312
      %p314 = pneg %p42
      %p315 = pneg %p39
      %s316 = smul.u32 64, %s21
      %p317 = scmp.lt.s32.totalorder %s316, 127
      %s318 = scalar_select %p317, %s316, 127
      %s319 = smul.addr %s318, 2
      %s320 = smul.addr %s319, 8
      %s321 = scalar_lea.vmem %s1, %s320
      %p322 = pneg %p68
      %p323 = pneg %p65
      %p324 = pneg %p89
      %p325 = pneg %p86
      %p326 = pneg %p110
      %p327 = pneg %p107
      %p328 = pneg %p131
      %p329 = pneg %p128
      %p330 = pneg %p152
      %p331 = pneg %p149
      %p332 = pneg %p173
      %p333 = pneg %p170
      %p334 = pneg %p194
      %p335 = pneg %p191
      %p336 = pneg %p215
      %p337 = pneg %p212
      %p338 = pneg %p241
      %p339 = pneg %p238
      %s340 = smul.u32 64, %s21
      %p341 = scmp.lt.s32.totalorder %s340, 127
      %s342 = scalar_select %p341, %s340, 127
      %s343 = smul.addr %s342, 8
      %s344 = scalar_lea.vmem %s9, %s343
      %s345 = smul.u32 64, %s21
      %p346 = scmp.lt.s32.totalorder %s345, 127
      %s347 = scalar_select %p346, %s345, 127
      %s348 = smul.addr %s347, 2
      %s349 = smul.addr %s348, 8
      %s350 = scalar_lea.vmem %s0, %s349
      %s351 = smul.u32 64, %s21
      %s352 = smul.u32 64, %s21
      %p353 = scmp.lt.s32.totalorder %s352, 127
      %s354 = scalar_select %p353, %s352, 127
      %s355 = smul.addr %s354, 2
      %s356 = smul.addr %s355, 8
      %s357 = scalar_lea.vmem %s1, %s356
      %s358 = smul.u32 64, %s21
      %s359 = smul.u32 64, %s21
      %p360 = scmp.lt.s32.totalorder %s359, 127
      %s361 = scalar_select %p360, %s359, 127
      %s362 = smul.addr %s361, 8
      %s363 = scalar_lea.vmem %s9, %s362
      %s364 = smul.u32 64, %s21
      %v366 = vld [vmem:[%s350] sm:$0xff]
      %v367 = vld [vmem:[%s350 + $0x8] sm:$0xff]
      %v368 = vld [vmem:[%s350 + $0x10] sm:$0xff]
      %v369 = vld [vmem:[%s350 + $0x18] sm:$0xff]
      %v370 = vld [vmem:[%s350 + $0x20] sm:$0xff]
      %v371 = vld [vmem:[%s350 + $0x28] sm:$0xff]
      %v372 = vld [vmem:[%s350 + $0x30] sm:$0xff]
      %v373 = vld [vmem:[%s350 + $0x38] sm:$0xff]
      %v374 = vld [vmem:[%s350 + $0x40] sm:$0xff]
      %v375 = vld [vmem:[%s350 + $0x48] sm:$0xff]
      %v376 = vld [vmem:[%s350 + $0x50] sm:$0xff]
      %v377 = vld [vmem:[%s350 + $0x58] sm:$0xff]
      %v378 = vld [vmem:[%s350 + $0x60] sm:$0xff]
      %v379 = vld [vmem:[%s350 + $0x68] sm:$0xff]
      %v380 = vld [vmem:[%s350 + $0x70] sm:$0xff]
      %v381 = vld [vmem:[%s350 + $0x78] sm:$0xff]
      %v382 = vld [vmem:[%s350 + $0x80] sm:$0xff]
      %v383 = vld [vmem:[%s350 + $0x88] sm:$0xff]
      %v384 = vld [vmem:[%s350 + $0x90] sm:$0xff]
      %v385 = vld [vmem:[%s350 + $0x98] sm:$0xff]
      %v386 = vld [vmem:[%s350 + $0xa0] sm:$0xff]
      %v387 = vld [vmem:[%s350 + $0xa8] sm:$0xff]
      %v388 = vld [vmem:[%s350 + $0xb0] sm:$0xff]
      %v389 = vld [vmem:[%s350 + $0xb8] sm:$0xff]
      %v390 = vld [vmem:[%s350 + $0xc0] sm:$0xff]
      %v391 = vld [vmem:[%s350 + $0xc8] sm:$0xff]
      %v392 = vld [vmem:[%s350 + $0xd0] sm:$0xff]
      %v393 = vld [vmem:[%s350 + $0xd8] sm:$0xff]
      %v394 = vld [vmem:[%s350 + $0xe0] sm:$0xff]
      %v395 = vld [vmem:[%s350 + $0xe8] sm:$0xff]
      %v396 = vld [vmem:[%s350 + $0xf0] sm:$0xff]
      %v397 = vld [vmem:[%s350 + $0xf8] sm:$0xff]
      %v398 = vld [vmem:[%s350 + $0x100] sm:$0xff]
      %v399 = vld [vmem:[%s350 + $0x108] sm:$0xff]
      %v400 = vld [vmem:[%s350 + $0x110] sm:$0xff]
      %v401 = vld [vmem:[%s350 + $0x118] sm:$0xff]
      %v402 = vld [vmem:[%s350 + $0x120] sm:$0xff]
      %v403 = vld [vmem:[%s350 + $0x128] sm:$0xff]
      %v404 = vld [vmem:[%s350 + $0x130] sm:$0xff]
      %v405 = vld [vmem:[%s350 + $0x138] sm:$0xff]
      %v406 = vld [vmem:[%s350 + $0x140] sm:$0xff]
      %v407 = vld [vmem:[%s350 + $0x148] sm:$0xff]
      %v408 = vld [vmem:[%s350 + $0x150] sm:$0xff]
      %v409 = vld [vmem:[%s350 + $0x158] sm:$0xff]
      %v410 = vld [vmem:[%s350 + $0x160] sm:$0xff]
      %v411 = vld [vmem:[%s350 + $0x168] sm:$0xff]
      %v412 = vld [vmem:[%s350 + $0x170] sm:$0xff]
      %v413 = vld [vmem:[%s350 + $0x178] sm:$0xff]
      %v414 = vld [vmem:[%s350 + $0x180] sm:$0xff]
      %v415 = vld [vmem:[%s350 + $0x188] sm:$0xff]
      %v416 = vld [vmem:[%s350 + $0x190] sm:$0xff]
      %v417 = vld [vmem:[%s350 + $0x198] sm:$0xff]
      %v418 = vld [vmem:[%s350 + $0x1a0] sm:$0xff]
      %v419 = vld [vmem:[%s350 + $0x1a8] sm:$0xff]
      %v420 = vld [vmem:[%s350 + $0x1b0] sm:$0xff]
      %v421 = vld [vmem:[%s350 + $0x1b8] sm:$0xff]
      %v422 = vld [vmem:[%s350 + $0x1c0] sm:$0xff]
      %v423 = vld [vmem:[%s350 + $0x1c8] sm:$0xff]
      %v424 = vld [vmem:[%s350 + $0x1d0] sm:$0xff]
      %v425 = vld [vmem:[%s350 + $0x1d8] sm:$0xff]
      %v426 = vld [vmem:[%s350 + $0x1e0] sm:$0xff]
      %v427 = vld [vmem:[%s350 + $0x1e8] sm:$0xff]
      %v428 = vld [vmem:[%s350 + $0x1f0] sm:$0xff]
      %v429 = vld [vmem:[%s350 + $0x1f8] sm:$0xff]
      %v430 = vld [vmem:[%s350 + $0x200] sm:$0xff]
      %v431 = vld [vmem:[%s350 + $0x208] sm:$0xff]
      %v432 = vld [vmem:[%s350 + $0x210] sm:$0xff]
      %v433 = vld [vmem:[%s350 + $0x218] sm:$0xff]
      %v434 = vld [vmem:[%s350 + $0x220] sm:$0xff]
      %v435 = vld [vmem:[%s350 + $0x228] sm:$0xff]
      %v436 = vld [vmem:[%s350 + $0x230] sm:$0xff]
      %v437 = vld [vmem:[%s350 + $0x238] sm:$0xff]
      %v438 = vld [vmem:[%s350 + $0x240] sm:$0xff]
      %v439 = vld [vmem:[%s350 + $0x248] sm:$0xff]
      %v440 = vld [vmem:[%s350 + $0x250] sm:$0xff]
      %v441 = vld [vmem:[%s350 + $0x258] sm:$0xff]
      %v442 = vld [vmem:[%s350 + $0x260] sm:$0xff]
      %v443 = vld [vmem:[%s350 + $0x268] sm:$0xff]
      %v444 = vld [vmem:[%s350 + $0x270] sm:$0xff]
      %v445 = vld [vmem:[%s350 + $0x278] sm:$0xff]
      %v446 = vld [vmem:[%s350 + $0x280] sm:$0xff]
      %v447 = vld [vmem:[%s350 + $0x288] sm:$0xff]
      %v448 = vld [vmem:[%s350 + $0x290] sm:$0xff]
      %v449 = vld [vmem:[%s350 + $0x298] sm:$0xff]
      %v450 = vld [vmem:[%s350 + $0x2a0] sm:$0xff]
      %v451 = vld [vmem:[%s350 + $0x2a8] sm:$0xff]
      %v452 = vld [vmem:[%s350 + $0x2b0] sm:$0xff]
      %v453 = vld [vmem:[%s350 + $0x2b8] sm:$0xff]
      %v454 = vld [vmem:[%s350 + $0x2c0] sm:$0xff]
      %v455 = vld [vmem:[%s350 + $0x2c8] sm:$0xff]
      %v456 = vld [vmem:[%s350 + $0x2d0] sm:$0xff]
      %v457 = vld [vmem:[%s350 + $0x2d8] sm:$0xff]
      %v458 = vld [vmem:[%s350 + $0x2e0] sm:$0xff]
      %v459 = vld [vmem:[%s350 + $0x2e8] sm:$0xff]
      %v460 = vld [vmem:[%s350 + $0x2f0] sm:$0xff]
      %v461 = vld [vmem:[%s350 + $0x2f8] sm:$0xff]
      %v462 = vld [vmem:[%s350 + $0x300] sm:$0xff]
      %v463 = vld [vmem:[%s350 + $0x308] sm:$0xff]
      %v464 = vld [vmem:[%s350 + $0x310] sm:$0xff]
      %v465 = vld [vmem:[%s350 + $0x318] sm:$0xff]
      %v466 = vld [vmem:[%s350 + $0x320] sm:$0xff]
      %v467 = vld [vmem:[%s350 + $0x328] sm:$0xff]
      %v468 = vld [vmem:[%s350 + $0x330] sm:$0xff]
      %v469 = vld [vmem:[%s350 + $0x338] sm:$0xff]
      %v470 = vld [vmem:[%s350 + $0x340] sm:$0xff]
      %v471 = vld [vmem:[%s350 + $0x348] sm:$0xff]
      %v472 = vld [vmem:[%s350 + $0x350] sm:$0xff]
      %v473 = vld [vmem:[%s350 + $0x358] sm:$0xff]
      %v474 = vld [vmem:[%s350 + $0x360] sm:$0xff]
      %v475 = vld [vmem:[%s350 + $0x368] sm:$0xff]
      %v476 = vld [vmem:[%s350 + $0x370] sm:$0xff]
      %v477 = vld [vmem:[%s350 + $0x378] sm:$0xff]
      %v478 = vld [vmem:[%s350 + $0x380] sm:$0xff]
      %v479 = vld [vmem:[%s350 + $0x388] sm:$0xff]
      %v480 = vld [vmem:[%s350 + $0x390] sm:$0xff]
      %v481 = vld [vmem:[%s350 + $0x398] sm:$0xff]
      %v482 = vld [vmem:[%s350 + $0x3a0] sm:$0xff]
      %v483 = vld [vmem:[%s350 + $0x3a8] sm:$0xff]
      %v484 = vld [vmem:[%s350 + $0x3b0] sm:$0xff]
      %v485 = vld [vmem:[%s350 + $0x3b8] sm:$0xff]
      %v486 = vld [vmem:[%s350 + $0x3c0] sm:$0xff]
      %v487 = vld [vmem:[%s350 + $0x3c8] sm:$0xff]
      %v488 = vld [vmem:[%s350 + $0x3d0] sm:$0xff]
      %v489 = vld [vmem:[%s350 + $0x3d8] sm:$0xff]
      %v490 = vld [vmem:[%s350 + $0x3e0] sm:$0xff]
      %v491 = vld [vmem:[%s350 + $0x3e8] sm:$0xff]
      %v492 = vld [vmem:[%s350 + $0x3f0] sm:$0xff]
      %v493 = vld [vmem:[%s350 + $0x3f8] sm:$0xff]
      %v494 = vpack.c.bf16 %v368, %v366
      %v495 = vpack.c.bf16 %v369, %v367
      %v496 = vpack.c.bf16 %v372, %v370
      %v497 = vpack.c.bf16 %v373, %v371
      %v498 = vpack.c.bf16 %v376, %v374
      %v499 = vpack.c.bf16 %v377, %v375
      %v500 = vpack.c.bf16 %v380, %v378
      %v501 = vpack.c.bf16 %v381, %v379
      %v502 = vpack.c.bf16 %v384, %v382
      %v503 = vpack.c.bf16 %v385, %v383
      %v504 = vpack.c.bf16 %v388, %v386
      %v505 = vpack.c.bf16 %v389, %v387
      %v506 = vpack.c.bf16 %v392, %v390
      %v507 = vpack.c.bf16 %v393, %v391
      %v508 = vpack.c.bf16 %v396, %v394
      %v509 = vpack.c.bf16 %v397, %v395
      %v510 = vpack.c.bf16 %v400, %v398
      %v511 = vpack.c.bf16 %v401, %v399
      %v512 = vpack.c.bf16 %v404, %v402
      %v513 = vpack.c.bf16 %v405, %v403
      %v514 = vpack.c.bf16 %v408, %v406
      %v515 = vpack.c.bf16 %v409, %v407
      %v516 = vpack.c.bf16 %v412, %v410
      %v517 = vpack.c.bf16 %v413, %v411
      %v518 = vpack.c.bf16 %v416, %v414
      %v519 = vpack.c.bf16 %v417, %v415
      %v520 = vpack.c.bf16 %v420, %v418
      %v521 = vpack.c.bf16 %v421, %v419
      %v522 = vpack.c.bf16 %v424, %v422
      %v523 = vpack.c.bf16 %v425, %v423
      %v524 = vpack.c.bf16 %v428, %v426
      %v525 = vpack.c.bf16 %v429, %v427
      %v526 = vpack.c.bf16 %v432, %v430
      %v527 = vpack.c.bf16 %v433, %v431
      %v528 = vpack.c.bf16 %v436, %v434
      %v529 = vpack.c.bf16 %v437, %v435
      %v530 = vpack.c.bf16 %v440, %v438
      %v531 = vpack.c.bf16 %v441, %v439
      %v532 = vpack.c.bf16 %v444, %v442
      %v533 = vpack.c.bf16 %v445, %v443
      %v534 = vpack.c.bf16 %v448, %v446
      %v535 = vpack.c.bf16 %v449, %v447
      %v536 = vpack.c.bf16 %v452, %v450
      %v537 = vpack.c.bf16 %v453, %v451
      %v538 = vpack.c.bf16 %v456, %v454
      %v539 = vpack.c.bf16 %v457, %v455
      %v540 = vpack.c.bf16 %v460, %v458
      %v541 = vpack.c.bf16 %v461, %v459
      %v542 = vpack.c.bf16 %v464, %v462
      %v543 = vpack.c.bf16 %v465, %v463
      %v544 = vpack.c.bf16 %v468, %v466
      %v545 = vpack.c.bf16 %v469, %v467
      %v546 = vpack.c.bf16 %v472, %v470
      %v547 = vpack.c.bf16 %v473, %v471
      %v548 = vpack.c.bf16 %v476, %v474
      %v549 = vpack.c.bf16 %v477, %v475
      %v550 = vpack.c.bf16 %v480, %v478
      %v551 = vpack.c.bf16 %v481, %v479
      %v552 = vpack.c.bf16 %v484, %v482
      %v553 = vpack.c.bf16 %v485, %v483
      %v554 = vpack.c.bf16 %v488, %v486
      %v555 = vpack.c.bf16 %v489, %v487
      %v556 = vpack.c.bf16 %v492, %v490
      %v557 = vpack.c.bf16 %v493, %v491
      %v558 = vld [vmem:[%s357] sm:$0xff]
      %v559 = vld [vmem:[%s357 + $0x8] sm:$0xff]
      %v560 = vld [vmem:[%s357 + $0x10] sm:$0xff]
      %v561 = vld [vmem:[%s357 + $0x18] sm:$0xff]
      %v562 = vld [vmem:[%s357 + $0x20] sm:$0xff]
      %v563 = vld [vmem:[%s357 + $0x28] sm:$0xff]
      %v564 = vld [vmem:[%s357 + $0x30] sm:$0xff]
      %v565 = vld [vmem:[%s357 + $0x38] sm:$0xff]
      %v566 = vld [vmem:[%s357 + $0x40] sm:$0xff]
      %v567 = vld [vmem:[%s357 + $0x48] sm:$0xff]
      %v568 = vld [vmem:[%s357 + $0x50] sm:$0xff]
      %v569 = vld [vmem:[%s357 + $0x58] sm:$0xff]
      %v570 = vld [vmem:[%s357 + $0x60] sm:$0xff]
      %v571 = vld [vmem:[%s357 + $0x68] sm:$0xff]
      %v572 = vld [vmem:[%s357 + $0x70] sm:$0xff]
      %v573 = vld [vmem:[%s357 + $0x78] sm:$0xff]
      %v574 = vld [vmem:[%s357 + $0x80] sm:$0xff]
      %v575 = vld [vmem:[%s357 + $0x88] sm:$0xff]
      %v576 = vld [vmem:[%s357 + $0x90] sm:$0xff]
      %v577 = vld [vmem:[%s357 + $0x98] sm:$0xff]
      %v578 = vld [vmem:[%s357 + $0xa0] sm:$0xff]
      %v579 = vld [vmem:[%s357 + $0xa8] sm:$0xff]
      %v580 = vld [vmem:[%s357 + $0xb0] sm:$0xff]
      %v581 = vld [vmem:[%s357 + $0xb8] sm:$0xff]
      %v582 = vld [vmem:[%s357 + $0xc0] sm:$0xff]
      %v583 = vld [vmem:[%s357 + $0xc8] sm:$0xff]
      %v584 = vld [vmem:[%s357 + $0xd0] sm:$0xff]
      %v585 = vld [vmem:[%s357 + $0xd8] sm:$0xff]
      %v586 = vld [vmem:[%s357 + $0xe0] sm:$0xff]
      %v587 = vld [vmem:[%s357 + $0xe8] sm:$0xff]
      %v588 = vld [vmem:[%s357 + $0xf0] sm:$0xff]
      %v589 = vld [vmem:[%s357 + $0xf8] sm:$0xff]
      %v590 = vld [vmem:[%s357 + $0x100] sm:$0xff]
      %v591 = vld [vmem:[%s357 + $0x108] sm:$0xff]
      %v592 = vld [vmem:[%s357 + $0x110] sm:$0xff]
      %v593 = vld [vmem:[%s357 + $0x118] sm:$0xff]
      %v594 = vld [vmem:[%s357 + $0x120] sm:$0xff]
      %v595 = vld [vmem:[%s357 + $0x128] sm:$0xff]
      %v596 = vld [vmem:[%s357 + $0x130] sm:$0xff]
      %v597 = vld [vmem:[%s357 + $0x138] sm:$0xff]
      %v598 = vld [vmem:[%s357 + $0x140] sm:$0xff]
      %v599 = vld [vmem:[%s357 + $0x148] sm:$0xff]
      %v600 = vld [vmem:[%s357 + $0x150] sm:$0xff]
      %v601 = vld [vmem:[%s357 + $0x158] sm:$0xff]
      %v602 = vld [vmem:[%s357 + $0x160] sm:$0xff]
      %v603 = vld [vmem:[%s357 + $0x168] sm:$0xff]
      %v604 = vld [vmem:[%s357 + $0x170] sm:$0xff]
      %v605 = vld [vmem:[%s357 + $0x178] sm:$0xff]
      %v606 = vld [vmem:[%s357 + $0x180] sm:$0xff]
      %v607 = vld [vmem:[%s357 + $0x188] sm:$0xff]
      %v608 = vld [vmem:[%s357 + $0x190] sm:$0xff]
      %v609 = vld [vmem:[%s357 + $0x198] sm:$0xff]
      %v610 = vld [vmem:[%s357 + $0x1a0] sm:$0xff]
      %v611 = vld [vmem:[%s357 + $0x1a8] sm:$0xff]
      %v612 = vld [vmem:[%s357 + $0x1b0] sm:$0xff]
      %v613 = vld [vmem:[%s357 + $0x1b8] sm:$0xff]
      %v614 = vld [vmem:[%s357 + $0x1c0] sm:$0xff]
      %v615 = vld [vmem:[%s357 + $0x1c8] sm:$0xff]
      %v616 = vld [vmem:[%s357 + $0x1d0] sm:$0xff]
      %v617 = vld [vmem:[%s357 + $0x1d8] sm:$0xff]
      %v618 = vld [vmem:[%s357 + $0x1e0] sm:$0xff]
      %v619 = vld [vmem:[%s357 + $0x1e8] sm:$0xff]
      %v620 = vld [vmem:[%s357 + $0x1f0] sm:$0xff]
      %v621 = vld [vmem:[%s357 + $0x1f8] sm:$0xff]
      %v622 = vld [vmem:[%s357 + $0x200] sm:$0xff]
      %v623 = vld [vmem:[%s357 + $0x208] sm:$0xff]
      %v624 = vld [vmem:[%s357 + $0x210] sm:$0xff]
      %v625 = vld [vmem:[%s357 + $0x218] sm:$0xff]
      %v626 = vld [vmem:[%s357 + $0x220] sm:$0xff]
      %v627 = vld [vmem:[%s357 + $0x228] sm:$0xff]
      %v628 = vld [vmem:[%s357 + $0x230] sm:$0xff]
      %v629 = vld [vmem:[%s357 + $0x238] sm:$0xff]
      %v630 = vld [vmem:[%s357 + $0x240] sm:$0xff]
      %v631 = vld [vmem:[%s357 + $0x248] sm:$0xff]
      %v632 = vld [vmem:[%s357 + $0x250] sm:$0xff]
      %v633 = vld [vmem:[%s357 + $0x258] sm:$0xff]
      %v634 = vld [vmem:[%s357 + $0x260] sm:$0xff]
      %v635 = vld [vmem:[%s357 + $0x268] sm:$0xff]
      %v636 = vld [vmem:[%s357 + $0x270] sm:$0xff]
      %v637 = vld [vmem:[%s357 + $0x278] sm:$0xff]
      %v638 = vld [vmem:[%s357 + $0x280] sm:$0xff]
      %v639 = vld [vmem:[%s357 + $0x288] sm:$0xff]
      %v640 = vld [vmem:[%s357 + $0x290] sm:$0xff]
      %v641 = vld [vmem:[%s357 + $0x298] sm:$0xff]
      %v642 = vld [vmem:[%s357 + $0x2a0] sm:$0xff]
      %v643 = vld [vmem:[%s357 + $0x2a8] sm:$0xff]
      %v644 = vld [vmem:[%s357 + $0x2b0] sm:$0xff]
      %v645 = vld [vmem:[%s357 + $0x2b8] sm:$0xff]
      %v646 = vld [vmem:[%s357 + $0x2c0] sm:$0xff]
      %v647 = vld [vmem:[%s357 + $0x2c8] sm:$0xff]
      %v648 = vld [vmem:[%s357 + $0x2d0] sm:$0xff]
      %v649 = vld [vmem:[%s357 + $0x2d8] sm:$0xff]
      %v650 = vld [vmem:[%s357 + $0x2e0] sm:$0xff]
      %v651 = vld [vmem:[%s357 + $0x2e8] sm:$0xff]
      %v652 = vld [vmem:[%s357 + $0x2f0] sm:$0xff]
      %v653 = vld [vmem:[%s357 + $0x2f8] sm:$0xff]
      %v654 = vld [vmem:[%s357 + $0x300] sm:$0xff]
      %v655 = vld [vmem:[%s357 + $0x308] sm:$0xff]
      %v656 = vld [vmem:[%s357 + $0x310] sm:$0xff]
      %v657 = vld [vmem:[%s357 + $0x318] sm:$0xff]
      %v658 = vld [vmem:[%s357 + $0x320] sm:$0xff]
      %v659 = vld [vmem:[%s357 + $0x328] sm:$0xff]
      %v660 = vld [vmem:[%s357 + $0x330] sm:$0xff]
      %v661 = vld [vmem:[%s357 + $0x338] sm:$0xff]
      %v662 = vld [vmem:[%s357 + $0x340] sm:$0xff]
      %v663 = vld [vmem:[%s357 + $0x348] sm:$0xff]
      %v664 = vld [vmem:[%s357 + $0x350] sm:$0xff]
      %v665 = vld [vmem:[%s357 + $0x358] sm:$0xff]
      %v666 = vld [vmem:[%s357 + $0x360] sm:$0xff]
      %v667 = vld [vmem:[%s357 + $0x368] sm:$0xff]
      %v668 = vld [vmem:[%s357 + $0x370] sm:$0xff]
      %v669 = vld [vmem:[%s357 + $0x378] sm:$0xff]
      %v670 = vld [vmem:[%s357 + $0x380] sm:$0xff]
      %v671 = vld [vmem:[%s357 + $0x388] sm:$0xff]
      %v672 = vld [vmem:[%s357 + $0x390] sm:$0xff]
      %v673 = vld [vmem:[%s357 + $0x398] sm:$0xff]
      %v674 = vld [vmem:[%s357 + $0x3a0] sm:$0xff]
      %v675 = vld [vmem:[%s357 + $0x3a8] sm:$0xff]
      %v676 = vld [vmem:[%s357 + $0x3b0] sm:$0xff]
      %v677 = vld [vmem:[%s357 + $0x3b8] sm:$0xff]
      %v678 = vld [vmem:[%s357 + $0x3c0] sm:$0xff]
      %v679 = vld [vmem:[%s357 + $0x3c8] sm:$0xff]
      %v680 = vld [vmem:[%s357 + $0x3d0] sm:$0xff]
      %v681 = vld [vmem:[%s357 + $0x3d8] sm:$0xff]
      %v682 = vld [vmem:[%s357 + $0x3e0] sm:$0xff]
      %v683 = vld [vmem:[%s357 + $0x3e8] sm:$0xff]
      %v684 = vld [vmem:[%s357 + $0x3f0] sm:$0xff]
      %v685 = vld [vmem:[%s357 + $0x3f8] sm:$0xff]
      %v686 = vpack.c.bf16 %v560, %v558
      %v687 = vpack.c.bf16 %v561, %v559
      %v688 = vpack.c.bf16 %v564, %v562
      %v689 = vpack.c.bf16 %v565, %v563
      %v690 = vpack.c.bf16 %v568, %v566
      %v691 = vpack.c.bf16 %v569, %v567
      %v692 = vpack.c.bf16 %v572, %v570
      %v693 = vpack.c.bf16 %v573, %v571
      %v694 = vpack.c.bf16 %v576, %v574
      %v695 = vpack.c.bf16 %v577, %v575
      %v696 = vpack.c.bf16 %v580, %v578
      %v697 = vpack.c.bf16 %v581, %v579
      %v698 = vpack.c.bf16 %v584, %v582
      %v699 = vpack.c.bf16 %v585, %v583
      %v700 = vpack.c.bf16 %v588, %v586
      %v701 = vpack.c.bf16 %v589, %v587
      %v702 = vpack.c.bf16 %v592, %v590
      %v703 = vpack.c.bf16 %v593, %v591
      %v704 = vpack.c.bf16 %v596, %v594
      %v705 = vpack.c.bf16 %v597, %v595
      %v706 = vpack.c.bf16 %v600, %v598
      %v707 = vpack.c.bf16 %v601, %v599
      %v708 = vpack.c.bf16 %v604, %v602
      %v709 = vpack.c.bf16 %v605, %v603
      %v710 = vpack.c.bf16 %v608, %v606
      %v711 = vpack.c.bf16 %v609, %v607
      %v712 = vpack.c.bf16 %v612, %v610
      %v713 = vpack.c.bf16 %v613, %v611
      %v714 = vpack.c.bf16 %v616, %v614
      %v715 = vpack.c.bf16 %v617, %v615
      %v716 = vpack.c.bf16 %v620, %v618
      %v717 = vpack.c.bf16 %v621, %v619
      %v718 = vpack.c.bf16 %v624, %v622
      %v719 = vpack.c.bf16 %v625, %v623
      %v720 = vpack.c.bf16 %v628, %v626
      %v721 = vpack.c.bf16 %v629, %v627
      %v722 = vpack.c.bf16 %v632, %v630
      %v723 = vpack.c.bf16 %v633, %v631
      %v724 = vpack.c.bf16 %v636, %v634
      %v725 = vpack.c.bf16 %v637, %v635
      %v726 = vpack.c.bf16 %v640, %v638
      %v727 = vpack.c.bf16 %v641, %v639
      %v728 = vpack.c.bf16 %v644, %v642
      %v729 = vpack.c.bf16 %v645, %v643
      %v730 = vpack.c.bf16 %v648, %v646
      %v731 = vpack.c.bf16 %v649, %v647
      %v732 = vpack.c.bf16 %v652, %v650
      %v733 = vpack.c.bf16 %v653, %v651
      %v734 = vpack.c.bf16 %v656, %v654
      %v735 = vpack.c.bf16 %v657, %v655
      %v736 = vpack.c.bf16 %v660, %v658
      %v737 = vpack.c.bf16 %v661, %v659
      %v738 = vpack.c.bf16 %v664, %v662
      %v739 = vpack.c.bf16 %v665, %v663
      %v740 = vpack.c.bf16 %v668, %v666
      %v741 = vpack.c.bf16 %v669, %v667
      %v742 = vpack.c.bf16 %v672, %v670
      %v743 = vpack.c.bf16 %v673, %v671
      %v744 = vpack.c.bf16 %v676, %v674
      %v745 = vpack.c.bf16 %v677, %v675
      %v746 = vpack.c.bf16 %v680, %v678
      %v747 = vpack.c.bf16 %v681, %v679
      %v748 = vpack.c.bf16 %v684, %v682
      %v749 = vpack.c.bf16 %v685, %v683
      %v750 = vld [vmem:[%s2] sm:$0xf]
      %v751 = vld [vmem:[%s2 + $0x4] sm:$0xf]
      %v752 = vld [vmem:[%s2 + $0x8] sm:$0xf]
      %v753 = vld [vmem:[%s2 + $0xc] sm:$0xf]
      %v754 = vld [vmem:[%s2 + $0x10] sm:$0xf]
      %v755 = vld [vmem:[%s2 + $0x14] sm:$0xf]
      %v756 = vld [vmem:[%s2 + $0x18] sm:$0xf]
      %v757 = vld [vmem:[%s2 + $0x1c] sm:$0xf]
      %v758 = vld [vmem:[%s2 + $0x20] sm:$0xf]
      %v759 = vld [vmem:[%s2 + $0x24] sm:$0xf]
      %v760 = vld [vmem:[%s2 + $0x28] sm:$0xf]
      %v761 = vld [vmem:[%s2 + $0x2c] sm:$0xf]
      %v762 = vld [vmem:[%s2 + $0x30] sm:$0xf]
      %v763 = vld [vmem:[%s2 + $0x34] sm:$0xf]
      %v764 = vld [vmem:[%s2 + $0x38] sm:$0xf]
      %v765 = vld [vmem:[%s2 + $0x3c] sm:$0xf]
      %v766 = vld [vmem:[%s2 + $0x40] sm:$0xf]
      %v767 = vld [vmem:[%s2 + $0x44] sm:$0xf]
      %v768 = vld [vmem:[%s2 + $0x48] sm:$0xf]
      %v769 = vld [vmem:[%s2 + $0x4c] sm:$0xf]
      %v770 = vld [vmem:[%s2 + $0x50] sm:$0xf]
      %v771 = vld [vmem:[%s2 + $0x54] sm:$0xf]
      %v772 = vld [vmem:[%s2 + $0x58] sm:$0xf]
      %v773 = vld [vmem:[%s2 + $0x5c] sm:$0x7]
      %v774 = vld [vmem:[%s3] sm:$0xf]
      %v775 = vld [vmem:[%s3 + $0x4] sm:$0xf]
      %v776 = vld [vmem:[%s3 + $0x8] sm:$0xf]
      %v777 = vld [vmem:[%s3 + $0xc] sm:$0xf]
      %v778 = vld [vmem:[%s3 + $0x10] sm:$0xf]
      %v779 = vld [vmem:[%s3 + $0x14] sm:$0xf]
      %v780 = vld [vmem:[%s3 + $0x18] sm:$0xf]
      %v781 = vld [vmem:[%s3 + $0x1c] sm:$0xf]
      %v782 = vld [vmem:[%s3 + $0x20] sm:$0xf]
      %v783 = vld [vmem:[%s3 + $0x24] sm:$0xf]
      %v784 = vld [vmem:[%s3 + $0x28] sm:$0xf]
      %v785 = vld [vmem:[%s3 + $0x2c] sm:$0xf]
      %v786 = vld [vmem:[%s3 + $0x30] sm:$0xf]
      %v787 = vld [vmem:[%s3 + $0x34] sm:$0xf]
      %v788 = vld [vmem:[%s3 + $0x38] sm:$0xf]
      %v789 = vld [vmem:[%s3 + $0x3c] sm:$0xf]
      %v790 = vld [vmem:[%s3 + $0x40] sm:$0xf]
      %v791 = vld [vmem:[%s3 + $0x44] sm:$0xf]
      %v792 = vld [vmem:[%s3 + $0x48] sm:$0xf]
      %v793 = vld [vmem:[%s3 + $0x4c] sm:$0xf]
      %v794 = vld [vmem:[%s3 + $0x50] sm:$0xf]
      %v795 = vld [vmem:[%s3 + $0x54] sm:$0xf]
      %v796 = vld [vmem:[%s3 + $0x58] sm:$0xf]
      %v797 = vld [vmem:[%s3 + $0x5c] sm:$0x7]
      %v822 = vunpack.c.l.b16 %v774
      %v823 = vunpack.c.l.b16 %v775
      %v824 = vunpack.c.l.b16 %v776
      %v825 = vunpack.c.l.b16 %v777
      %v826 = vunpack.c.l.b16 %v778
      %v827 = vunpack.c.l.b16 %v779
      %v828 = vunpack.c.l.b16 %v780
      %v829 = vunpack.c.l.b16 %v781
      %v830 = vunpack.c.l.b16 %v782
      %v831 = vunpack.c.l.b16 %v783
      %v832 = vunpack.c.l.b16 %v784
      %v833 = vunpack.c.l.b16 %v785
      %v834 = vunpack.c.l.b16 %v786
      %v835 = vunpack.c.l.b16 %v787
      %v836 = vunpack.c.l.b16 %v788
      %v837 = vunpack.c.l.b16 %v789
      %v838 = vunpack.c.l.b16 %v790
      %v839 = vunpack.c.l.b16 %v791
      %v840 = vunpack.c.l.b16 %v792
      %v841 = vunpack.c.l.b16 %v793
      %v842 = vunpack.c.l.b16 %v794
      %v843 = vunpack.c.l.b16 %v795
      %v844 = vunpack.c.l.b16 %v796
      %v845 = vunpack.c.l.b16 %v797
      %v846 = vpack.c.b16 %v823, %v822
      %v847 = vpack.c.b16 %v825, %v824
      %v848 = vpack.c.b16 %v827, %v826
      %v849 = vpack.c.b16 %v829, %v828
      %v850 = vpack.c.b16 %v831, %v830
      %v851 = vpack.c.b16 %v833, %v832
      %v852 = vpack.c.b16 %v835, %v834
      %v853 = vpack.c.b16 %v837, %v836
      %v854 = vpack.c.b16 %v839, %v838
      %v855 = vpack.c.b16 %v841, %v840
      %v856 = vpack.c.b16 %v843, %v842
      %v857 = vpack.c.b16 %v845, %v844
      %vm869 = vcmask 506880
      %v871 = vsel %vm869, %v687, 0
      %v874 = vsel %vm869, %v689, 0
      %v877 = vsel %vm869, %v691, 0
      %v880 = vsel %vm869, %v693, 0
      %v883 = vsel %vm869, %v695, 0
      %v886 = vsel %vm869, %v697, 0
      %v889 = vsel %vm869, %v699, 0
      %v892 = vsel %vm869, %v701, 0
      %v895 = vsel %vm869, %v703, 0
      %v898 = vsel %vm869, %v705, 0
      %v901 = vsel %vm869, %v707, 0
      %v904 = vsel %vm869, %v709, 0
      %v907 = vsel %vm869, %v711, 0
      %v910 = vsel %vm869, %v713, 0
      %v913 = vsel %vm869, %v715, 0
      %v916 = vsel %vm869, %v717, 0
      %v919 = vsel %vm869, %v719, 0
      %v922 = vsel %vm869, %v721, 0
      %v925 = vsel %vm869, %v723, 0
      %v928 = vsel %vm869, %v725, 0
      %v931 = vsel %vm869, %v727, 0
      %v934 = vsel %vm869, %v729, 0
      %v937 = vsel %vm869, %v731, 0
      %v940 = vsel %vm869, %v733, 0
      %v943 = vsel %vm869, %v735, 0
      %v946 = vsel %vm869, %v737, 0
      %v949 = vsel %vm869, %v739, 0
      %v952 = vsel %vm869, %v741, 0
      %v955 = vsel %vm869, %v743, 0
      %v958 = vsel %vm869, %v745, 0
      %v961 = vsel %vm869, %v747, 0
      %v964 = vsel %vm869, %v749, 0
      %vm966 = vcmask 1046528
      %v968 = vsel %vm966, %v857, 0
      %970 = vmatprep.subr.bf16.mxu0 0
      %971 = vmatpush1.bf16.msra.mxu0 %v846
      %972 = vmatprep.subr.bf16.mxu0 0
      %973 = vmatpush1.bf16.msra.mxu0 %v847
      %974 = vmatprep.subr.bf16.mxu0 0
      %975 = vmatpush1.bf16.msra.mxu0 %v848
      %976 = vmatprep.subr.bf16.mxu0 0
      %977 = vmatpush1.bf16.msra.mxu0 %v849
      %978 = vmatprep.subr.bf16.mxu0 0
      %979 = vmatpush1.bf16.msra.mxu0 %v850
      %980 = vmatprep.subr.bf16.mxu0 0
      %981 = vmatpush1.bf16.msra.mxu0 %v851
      %982 = vmatprep.subr.bf16.mxu0 0
      %983 = vmatpush1.bf16.msra.mxu0 %v852
      %984 = vmatprep.subr.bf16.mxu0 0
      %985 = vmatpush1.bf16.msra.mxu0 %v853
      %986 = vmatprep.subr.bf16.mxu0 0
      %987 = vmatpush1.bf16.msra.mxu0 %v854
      %988 = vmatprep.subr.bf16.mxu0 0
      %989 = vmatpush1.bf16.msra.mxu0 %v855
      %990 = vmatprep.subr.bf16.mxu0 0
      %991 = vmatpush1.bf16.msra.mxu0 %v856
      %992 = vmatprep.subr.bf16.mxu0 0
      %993 = vmatpush1.bf16.msra.mxu0 %v968
      %994 = vmatprep.subr.bf16.mxu0 0
      %995 = vmatpush1.bf16.msra.mxu0 0
      %996 = vmatprep.subr.bf16.mxu0 0
      %997 = vmatpush1.bf16.msra.mxu0 0
      %998 = vmatprep.subr.bf16.mxu0 0
      %999 = vmatpush1.bf16.msra.mxu0 0
      %1000 = vmatprep.subr.bf16.mxu0 0
      %1001 = vmatpush1.bf16.msra.mxu0 0
      %1002 = vmatprep.mubr.bf16.mxu0 %v871
      %1003 = vmatmul.mubr.bf16.gmra.mrb[0].mxu0 %v686
      %v1004 = vpop.f32.mrb[0].mxu0
      %v1005 = vadd.f32 0.0, %v1004
      %v1006 = vpop.f32.mrb[0].mxu0
      %v1007 = vpop.f32.mrb[0].mxu0
      %v1008 = vadd.f32 0.0, %v1007
      %v1009 = vpop.f32.mrb[0].mxu0
      %1010 = vmatprep.mubr.bf16.mxu0 %v874
      %1011 = vmatmul.mubr.bf16.gmra.mrb[0].mxu0 %v688
      %v1012 = vpop.f32.mrb[0].mxu0
      %v1013 = vadd.f32 0.0, %v1012
      %v1014 = vpop.f32.mrb[0].mxu0
      %v1015 = vpop.f32.mrb[0].mxu0
      %v1016 = vadd.f32 0.0, %v1015
      %v1017 = vpop.f32.mrb[0].mxu0
      %1018 = vmatprep.mubr.bf16.mxu0 %v877
      %1019 = vmatmul.mubr.bf16.gmra.mrb[0].mxu0 %v690
      %v1020 = vpop.f32.mrb[0].mxu0
      %v1021 = vadd.f32 0.0, %v1020
      %v1022 = vpop.f32.mrb[0].mxu0
      %v1023 = vpop.f32.mrb[0].mxu0
      %v1024 = vadd.f32 0.0, %v1023
      %v1025 = vpop.f32.mrb[0].mxu0
      %1026 = vmatprep.mubr.bf16.mxu0 %v880
      %1027 = vmatmul.mubr.bf16.gmra.mrb[0].mxu0 %v692
      %v1028 = vpop.f32.mrb[0].mxu0
      %v1029 = vadd.f32 0.0, %v1028
      %v1030 = vpop.f32.mrb[0].mxu0
      %v1031 = vpop.f32.mrb[0].mxu0
      %v1032 = vadd.f32 0.0, %v1031
      %v1033 = vpop.f32.mrb[0].mxu0
      %1034 = vmatprep.mubr.bf16.mxu0 %v883
      %1035 = vmatmul.mubr.bf16.gmra.mrb[0].mxu0 %v694
      %v1036 = vpop.f32.mrb[0].mxu0
      %v1037 = vadd.f32 0.0, %v1036
      %v1038 = vpop.f32.mrb[0].mxu0
      %v1039 = vpop.f32.mrb[0].mxu0
      %v1040 = vadd.f32 0.0, %v1039
      %v1041 = vpop.f32.mrb[0].mxu0
      %1042 = vmatprep.mubr.bf16.mxu0 %v886
      %1043 = vmatmul.mubr.bf16.gmra.mrb[0].mxu0 %v696
      %v1044 = vpop.f32.mrb[0].mxu0
      %v1045 = vadd.f32 0.0, %v1044
      %v1046 = vpop.f32.mrb[0].mxu0
      %v1047 = vpop.f32.mrb[0].mxu0
      %v1048 = vadd.f32 0.0, %v1047
      %v1049 = vpop.f32.mrb[0].mxu0
      %1050 = vmatprep.mubr.bf16.mxu0 %v889
      %1051 = vmatmul.mubr.bf16.gmra.mrb[0].mxu0 %v698
      %v1052 = vpop.f32.mrb[0].mxu0
      %v1053 = vadd.f32 0.0, %v1052
      %v1054 = vpop.f32.mrb[0].mxu0
      %v1055 = vpop.f32.mrb[0].mxu0
      %v1056 = vadd.f32 0.0, %v1055
      %v1057 = vpop.f32.mrb[0].mxu0
      %1058 = vmatprep.mubr.bf16.mxu0 %v892
      %1059 = vmatmul.mubr.bf16.gmra.mrb[0].mxu0 %v700
      %v1060 = vpop.f32.mrb[0].mxu0
      %v1061 = vadd.f32 0.0, %v1060
      %v1062 = vpop.f32.mrb[0].mxu0
      %v1063 = vpop.f32.mrb[0].mxu0
      %v1064 = vadd.f32 0.0, %v1063
      %v1065 = vpop.f32.mrb[0].mxu0
      %1066 = vmatprep.mubr.bf16.mxu0 %v895
      %1067 = vmatmul.mubr.bf16.gmra.mrb[0].mxu0 %v702
      %v1068 = vpop.f32.mrb[0].mxu0
      %v1069 = vadd.f32 0.0, %v1068
      %v1070 = vpop.f32.mrb[0].mxu0
      %v1071 = vpop.f32.mrb[0].mxu0
      %v1072 = vadd.f32 0.0, %v1071
      %v1073 = vpop.f32.mrb[0].mxu0
      %1074 = vmatprep.mubr.bf16.mxu0 %v898
      %1075 = vmatmul.mubr.bf16.gmra.mrb[0].mxu0 %v704
      %v1076 = vpop.f32.mrb[0].mxu0
      %v1077 = vadd.f32 0.0, %v1076
      %v1078 = vpop.f32.mrb[0].mxu0
      %v1079 = vpop.f32.mrb[0].mxu0
      %v1080 = vadd.f32 0.0, %v1079
      %v1081 = vpop.f32.mrb[0].mxu0
      %1082 = vmatprep.mubr.bf16.mxu0 %v901
      %1083 = vmatmul.mubr.bf16.gmra.mrb[0].mxu0 %v706
      %v1084 = vpop.f32.mrb[0].mxu0
      %v1085 = vadd.f32 0.0, %v1084
      %v1086 = vpop.f32.mrb[0].mxu0
      %v1087 = vpop.f32.mrb[0].mxu0
      %v1088 = vadd.f32 0.0, %v1087
      %v1089 = vpop.f32.mrb[0].mxu0
      %1090 = vmatprep.mubr.bf16.mxu0 %v904
      %1091 = vmatmul.mubr.bf16.gmra.mrb[0].mxu0 %v708
      %v1092 = vpop.f32.mrb[0].mxu0
      %v1093 = vadd.f32 0.0, %v1092
      %v1094 = vpop.f32.mrb[0].mxu0
      %v1095 = vpop.f32.mrb[0].mxu0
      %v1096 = vadd.f32 0.0, %v1095
      %v1097 = vpop.f32.mrb[0].mxu0
      %1098 = vmatprep.mubr.bf16.mxu0 %v907
      %1099 = vmatmul.mubr.bf16.gmra.mrb[0].mxu0 %v710
      %v1100 = vpop.f32.mrb[0].mxu0
      %v1101 = vadd.f32 0.0, %v1100
      %v1102 = vpop.f32.mrb[0].mxu0
      %v1103 = vpop.f32.mrb[0].mxu0
      %v1104 = vadd.f32 0.0, %v1103
      %v1105 = vpop.f32.mrb[0].mxu0
      %1106 = vmatprep.mubr.bf16.mxu0 %v910
      %1107 = vmatmul.mubr.bf16.gmra.mrb[0].mxu0 %v712
      %v1108 = vpop.f32.mrb[0].mxu0
      %v1109 = vadd.f32 0.0, %v1108
      %v1110 = vpop.f32.mrb[0].mxu0
      %v1111 = vpop.f32.mrb[0].mxu0
      %v1112 = vadd.f32 0.0, %v1111
      %v1113 = vpop.f32.mrb[0].mxu0
      %1114 = vmatprep.mubr.bf16.mxu0 %v913
      %1115 = vmatmul.mubr.bf16.gmra.mrb[0].mxu0 %v714
      %v1116 = vpop.f32.mrb[0].mxu0
      %v1117 = vadd.f32 0.0, %v1116
      %v1118 = vpop.f32.mrb[0].mxu0
      %v1119 = vpop.f32.mrb[0].mxu0
      %v1120 = vadd.f32 0.0, %v1119
      %v1121 = vpop.f32.mrb[0].mxu0
      %1122 = vmatprep.mubr.bf16.mxu0 %v916
      %1123 = vmatmul.mubr.bf16.gmra.mrb[0].mxu0 %v716
      %v1124 = vpop.f32.mrb[0].mxu0
      %v1125 = vadd.f32 0.0, %v1124
      %v1126 = vpop.f32.mrb[0].mxu0
      %v1127 = vpop.f32.mrb[0].mxu0
      %v1128 = vadd.f32 0.0, %v1127
      %v1129 = vpop.f32.mrb[0].mxu0
      %1130 = vmatprep.mubr.bf16.mxu0 %v919
      %1131 = vmatmul.mubr.bf16.gmra.mrb[0].mxu0 %v718
      %v1132 = vpop.f32.mrb[0].mxu0
      %v1133 = vadd.f32 0.0, %v1132
      %v1134 = vpop.f32.mrb[0].mxu0
      %v1135 = vpop.f32.mrb[0].mxu0
      %v1136 = vadd.f32 0.0, %v1135
      %v1137 = vpop.f32.mrb[0].mxu0
      %1138 = vmatprep.mubr.bf16.mxu0 %v922
      %1139 = vmatmul.mubr.bf16.gmra.mrb[0].mxu0 %v720
      %v1140 = vpop.f32.mrb[0].mxu0
      %v1141 = vadd.f32 0.0, %v1140
      %v1142 = vpop.f32.mrb[0].mxu0
      %v1143 = vpop.f32.mrb[0].mxu0
      %v1144 = vadd.f32 0.0, %v1143
      %v1145 = vpop.f32.mrb[0].mxu0
      %1146 = vmatprep.mubr.bf16.mxu0 %v925
      %1147 = vmatmul.mubr.bf16.gmra.mrb[0].mxu0 %v722
      %v1148 = vpop.f32.mrb[0].mxu0
      %v1149 = vadd.f32 0.0, %v1148
      %v1150 = vpop.f32.mrb[0].mxu0
      %v1151 = vpop.f32.mrb[0].mxu0
      %v1152 = vadd.f32 0.0, %v1151
      %v1153 = vpop.f32.mrb[0].mxu0
      %1154 = vmatprep.mubr.bf16.mxu0 %v928
      %1155 = vmatmul.mubr.bf16.gmra.mrb[0].mxu0 %v724
      %v1156 = vpop.f32.mrb[0].mxu0
      %v1157 = vadd.f32 0.0, %v1156
      %v1158 = vpop.f32.mrb[0].mxu0
      %v1159 = vpop.f32.mrb[0].mxu0
      %v1160 = vadd.f32 0.0, %v1159
      %v1161 = vpop.f32.mrb[0].mxu0
      %1162 = vmatprep.mubr.bf16.mxu0 %v931
      %1163 = vmatmul.mubr.bf16.gmra.mrb[0].mxu0 %v726
      %v1164 = vpop.f32.mrb[0].mxu0
      %v1165 = vadd.f32 0.0, %v1164
      %v1166 = vpop.f32.mrb[0].mxu0
      %v1167 = vpop.f32.mrb[0].mxu0
      %v1168 = vadd.f32 0.0, %v1167
      %v1169 = vpop.f32.mrb[0].mxu0
      %1170 = vmatprep.mubr.bf16.mxu0 %v934
      %1171 = vmatmul.mubr.bf16.gmra.mrb[0].mxu0 %v728
      %v1172 = vpop.f32.mrb[0].mxu0
      %v1173 = vadd.f32 0.0, %v1172
      %v1174 = vpop.f32.mrb[0].mxu0
      %v1175 = vpop.f32.mrb[0].mxu0
      %v1176 = vadd.f32 0.0, %v1175
      %v1177 = vpop.f32.mrb[0].mxu0
      %1178 = vmatprep.mubr.bf16.mxu0 %v937
      %1179 = vmatmul.mubr.bf16.gmra.mrb[0].mxu0 %v730
      %v1180 = vpop.f32.mrb[0].mxu0
      %v1181 = vadd.f32 0.0, %v1180
      %v1182 = vpop.f32.mrb[0].mxu0
      %v1183 = vpop.f32.mrb[0].mxu0
      %v1184 = vadd.f32 0.0, %v1183
      %v1185 = vpop.f32.mrb[0].mxu0
      %1186 = vmatprep.mubr.bf16.mxu0 %v940
      %1187 = vmatmul.mubr.bf16.gmra.mrb[0].mxu0 %v732
      %v1188 = vpop.f32.mrb[0].mxu0
      %v1189 = vadd.f32 0.0, %v1188
      %v1190 = vpop.f32.mrb[0].mxu0
      %v1191 = vpop.f32.mrb[0].mxu0
      %v1192 = vadd.f32 0.0, %v1191
      %v1193 = vpop.f32.mrb[0].mxu0
      %1194 = vmatprep.mubr.bf16.mxu0 %v943
      %1195 = vmatmul.mubr.bf16.gmra.mrb[0].mxu0 %v734
      %v1196 = vpop.f32.mrb[0].mxu0
      %v1197 = vadd.f32 0.0, %v1196
      %v1198 = vpop.f32.mrb[0].mxu0
      %v1199 = vpop.f32.mrb[0].mxu0
      %v1200 = vadd.f32 0.0, %v1199
      %v1201 = vpop.f32.mrb[0].mxu0
      %1202 = vmatprep.mubr.bf16.mxu0 %v946
      %1203 = vmatmul.mubr.bf16.gmra.mrb[0].mxu0 %v736
      %v1204 = vpop.f32.mrb[0].mxu0
      %v1205 = vadd.f32 0.0, %v1204
      %v1206 = vpop.f32.mrb[0].mxu0
      %v1207 = vpop.f32.mrb[0].mxu0
      %v1208 = vadd.f32 0.0, %v1207
      %v1209 = vpop.f32.mrb[0].mxu0
      %1210 = vmatprep.mubr.bf16.mxu0 %v949
      %1211 = vmatmul.mubr.bf16.gmra.mrb[0].mxu0 %v738
      %v1212 = vpop.f32.mrb[0].mxu0
      %v1213 = vadd.f32 0.0, %v1212
      %v1214 = vpop.f32.mrb[0].mxu0
      %v1215 = vpop.f32.mrb[0].mxu0
      %v1216 = vadd.f32 0.0, %v1215
      %v1217 = vpop.f32.mrb[0].mxu0
      %1218 = vmatprep.mubr.bf16.mxu0 %v952
      %1219 = vmatmul.mubr.bf16.gmra.mrb[0].mxu0 %v740
      %v1220 = vpop.f32.mrb[0].mxu0
      %v1221 = vadd.f32 0.0, %v1220
      %v1222 = vpop.f32.mrb[0].mxu0
      %v1223 = vpop.f32.mrb[0].mxu0
      %v1224 = vadd.f32 0.0, %v1223
      %v1225 = vpop.f32.mrb[0].mxu0
      %1226 = vmatprep.mubr.bf16.mxu0 %v955
      %1227 = vmatmul.mubr.bf16.gmra.mrb[0].mxu0 %v742
      %v1228 = vpop.f32.mrb[0].mxu0
      %v1229 = vadd.f32 0.0, %v1228
      %v1230 = vpop.f32.mrb[0].mxu0
      %v1231 = vpop.f32.mrb[0].mxu0
      %v1232 = vadd.f32 0.0, %v1231
      %v1233 = vpop.f32.mrb[0].mxu0
      %1234 = vmatprep.mubr.bf16.mxu0 %v958
      %1235 = vmatmul.mubr.bf16.gmra.mrb[0].mxu0 %v744
      %v1236 = vpop.f32.mrb[0].mxu0
      %v1237 = vadd.f32 0.0, %v1236
      %v1238 = vpop.f32.mrb[0].mxu0
      %v1239 = vpop.f32.mrb[0].mxu0
      %v1240 = vadd.f32 0.0, %v1239
      %v1241 = vpop.f32.mrb[0].mxu0
      %1242 = vmatprep.mubr.bf16.mxu0 %v961
      %1243 = vmatmul.mubr.bf16.gmra.mrb[0].mxu0 %v746
      %v1244 = vpop.f32.mrb[0].mxu0
      %v1245 = vadd.f32 0.0, %v1244
      %v1246 = vpop.f32.mrb[0].mxu0
      %v1247 = vpop.f32.mrb[0].mxu0
      %v1248 = vadd.f32 0.0, %v1247
      %v1249 = vpop.f32.mrb[0].mxu0
      %1250 = vmatprep.mubr.bf16.mxu0 %v964
      %1251 = vmatmul.mubr.bf16.gmra.mrb[0].mxu0 %v748
      %v1252 = vpop.f32.mrb[0].mxu0
      %v1253 = vadd.f32 0.0, %v1252
      %v1254 = vpop.f32.mrb[0].mxu0
      %v1255 = vpop.f32.mrb[0].mxu0
      %v1256 = vadd.f32 0.0, %v1255
      %v1257 = vpop.f32.mrb[0].mxu0
      %1258 = vdwg.mxu0
      %v1283 = vunpack.c.l.b16 %v750
      %v1284 = vunpack.c.l.b16 %v751
      %v1285 = vunpack.c.l.b16 %v752
      %v1286 = vunpack.c.l.b16 %v753
      %v1287 = vunpack.c.l.b16 %v754
      %v1288 = vunpack.c.l.b16 %v755
      %v1289 = vunpack.c.l.b16 %v756
      %v1290 = vunpack.c.l.b16 %v757
      %v1291 = vunpack.c.l.b16 %v758
      %v1292 = vunpack.c.l.b16 %v759
      %v1293 = vunpack.c.l.b16 %v760
      %v1294 = vunpack.c.l.b16 %v761
      %v1295 = vunpack.c.l.b16 %v762
      %v1296 = vunpack.c.l.b16 %v763
      %v1297 = vunpack.c.l.b16 %v764
      %v1298 = vunpack.c.l.b16 %v765
      %v1299 = vunpack.c.l.b16 %v766
      %v1300 = vunpack.c.l.b16 %v767
      %v1301 = vunpack.c.l.b16 %v768
      %v1302 = vunpack.c.l.b16 %v769
      %v1303 = vunpack.c.l.b16 %v770
      %v1304 = vunpack.c.l.b16 %v771
      %v1305 = vunpack.c.l.b16 %v772
      %v1306 = vunpack.c.l.b16 %v773
      %v1307 = vpack.c.b16 %v1284, %v1283
      %v1308 = vpack.c.b16 %v1286, %v1285
      %v1309 = vpack.c.b16 %v1288, %v1287
      %v1310 = vpack.c.b16 %v1290, %v1289
      %v1311 = vpack.c.b16 %v1292, %v1291
      %v1312 = vpack.c.b16 %v1294, %v1293
      %v1313 = vpack.c.b16 %v1296, %v1295
      %v1314 = vpack.c.b16 %v1298, %v1297
      %v1315 = vpack.c.b16 %v1300, %v1299
      %v1316 = vpack.c.b16 %v1302, %v1301
      %v1317 = vpack.c.b16 %v1304, %v1303
      %v1318 = vpack.c.b16 %v1306, %v1305
      %v1331 = vsel %vm869, %v495, 0
      %v1334 = vsel %vm869, %v497, 0
      %v1337 = vsel %vm869, %v499, 0
      %v1340 = vsel %vm869, %v501, 0
      %v1343 = vsel %vm869, %v503, 0
      %v1346 = vsel %vm869, %v505, 0
      %v1349 = vsel %vm869, %v507, 0
      %v1352 = vsel %vm869, %v509, 0
      %v1355 = vsel %vm869, %v511, 0
      %v1358 = vsel %vm869, %v513, 0
      %v1361 = vsel %vm869, %v515, 0
      %v1364 = vsel %vm869, %v517, 0
      %v1367 = vsel %vm869, %v519, 0
      %v1370 = vsel %vm869, %v521, 0
      %v1373 = vsel %vm869, %v523, 0
      %v1376 = vsel %vm869, %v525, 0
      %v1379 = vsel %vm869, %v527, 0
      %v1382 = vsel %vm869, %v529, 0
      %v1385 = vsel %vm869, %v531, 0
      %v1388 = vsel %vm869, %v533, 0
      %v1391 = vsel %vm869, %v535, 0
      %v1394 = vsel %vm869, %v537, 0
      %v1397 = vsel %vm869, %v539, 0
      %v1400 = vsel %vm869, %v541, 0
      %v1403 = vsel %vm869, %v543, 0
      %v1406 = vsel %vm869, %v545, 0
      %v1409 = vsel %vm869, %v547, 0
      %v1412 = vsel %vm869, %v549, 0
      %v1415 = vsel %vm869, %v551, 0
      %v1418 = vsel %vm869, %v553, 0
      %v1421 = vsel %vm869, %v555, 0
      %v1424 = vsel %vm869, %v557, 0
      %v1427 = vsel %vm966, %v1318, 0
      %1429 = vmatprep.subr.bf16.mxu0 0
      %1430 = vmatpush1.bf16.msra.mxu0 %v1307
      %1431 = vmatprep.subr.bf16.mxu0 0
      %1432 = vmatpush1.bf16.msra.mxu0 %v1308
      %1433 = vmatprep.subr.bf16.mxu0 0
      %1434 = vmatpush1.bf16.msra.mxu0 %v1309
      %1435 = vmatprep.subr.bf16.mxu0 0
      %1436 = vmatpush1.bf16.msra.mxu0 %v1310
      %1437 = vmatprep.subr.bf16.mxu0 0
      %1438 = vmatpush1.bf16.msra.mxu0 %v1311
      %1439 = vmatprep.subr.bf16.mxu0 0
      %1440 = vmatpush1.bf16.msra.mxu0 %v1312
      %1441 = vmatprep.subr.bf16.mxu0 0
      %1442 = vmatpush1.bf16.msra.mxu0 %v1313
      %1443 = vmatprep.subr.bf16.mxu0 0
      %1444 = vmatpush1.bf16.msra.mxu0 %v1314
      %1445 = vmatprep.subr.bf16.mxu0 0
      %1446 = vmatpush1.bf16.msra.mxu0 %v1315
      %1447 = vmatprep.subr.bf16.mxu0 0
      %1448 = vmatpush1.bf16.msra.mxu0 %v1316
      %1449 = vmatprep.subr.bf16.mxu0 0
      %1450 = vmatpush1.bf16.msra.mxu0 %v1317
      %1451 = vmatprep.subr.bf16.mxu0 0
      %1452 = vmatpush1.bf16.msra.mxu0 %v1427
      %1453 = vmatprep.subr.bf16.mxu0 0
      %1454 = vmatpush1.bf16.msra.mxu0 0
      %1455 = vmatprep.subr.bf16.mxu0 0
      %1456 = vmatpush1.bf16.msra.mxu0 0
      %1457 = vmatprep.subr.bf16.mxu0 0
      %1458 = vmatpush1.bf16.msra.mxu0 0
      %1459 = vmatprep.subr.bf16.mxu0 0
      %1460 = vmatpush1.bf16.msra.mxu0 0
      %1461 = vmatprep.mubr.bf16.mxu0 %v1331
      %1462 = vmatmul.mubr.bf16.gmra.mrb[0].mxu0 %v494
      %v1463 = vpop.f32.mrb[0].mxu0
      %v1464 = vadd.f32 %v1005, %v1463
      %v1465 = vpop.f32.mrb[0].mxu0
      %v1466 = vpop.f32.mrb[0].mxu0
      %v1467 = vadd.f32 %v1008, %v1466
      %v1468 = vpop.f32.mrb[0].mxu0
      %1469 = vmatprep.mubr.bf16.mxu0 %v1334
      %1470 = vmatmul.mubr.bf16.gmra.mrb[0].mxu0 %v496
      %v1471 = vpop.f32.mrb[0].mxu0
      %v1472 = vadd.f32 %v1013, %v1471
      %v1473 = vpop.f32.mrb[0].mxu0
      %v1474 = vpop.f32.mrb[0].mxu0
      %v1475 = vadd.f32 %v1016, %v1474
      %v1476 = vpop.f32.mrb[0].mxu0
      %1477 = vmatprep.mubr.bf16.mxu0 %v1337
      %1478 = vmatmul.mubr.bf16.gmra.mrb[0].mxu0 %v498
      %v1479 = vpop.f32.mrb[0].mxu0
      %v1480 = vadd.f32 %v1021, %v1479
      %v1481 = vpop.f32.mrb[0].mxu0
      %v1482 = vpop.f32.mrb[0].mxu0
      %v1483 = vadd.f32 %v1024, %v1482
      %v1484 = vpop.f32.mrb[0].mxu0
      %1485 = vmatprep.mubr.bf16.mxu0 %v1340
      %1486 = vmatmul.mubr.bf16.gmra.mrb[0].mxu0 %v500
      %v1487 = vpop.f32.mrb[0].mxu0
      %v1488 = vadd.f32 %v1029, %v1487
      %v1489 = vpop.f32.mrb[0].mxu0
      %v1490 = vpop.f32.mrb[0].mxu0
      %v1491 = vadd.f32 %v1032, %v1490
      %v1492 = vpop.f32.mrb[0].mxu0
      %1493 = vmatprep.mubr.bf16.mxu0 %v1343
      %1494 = vmatmul.mubr.bf16.gmra.mrb[0].mxu0 %v502
      %v1495 = vpop.f32.mrb[0].mxu0
      %v1496 = vadd.f32 %v1037, %v1495
      %v1497 = vpop.f32.mrb[0].mxu0
      %v1498 = vpop.f32.mrb[0].mxu0
      %v1499 = vadd.f32 %v1040, %v1498
      %v1500 = vpop.f32.mrb[0].mxu0
      %1501 = vmatprep.mubr.bf16.mxu0 %v1346
      %1502 = vmatmul.mubr.bf16.gmra.mrb[0].mxu0 %v504
      %v1503 = vpop.f32.mrb[0].mxu0
      %v1504 = vadd.f32 %v1045, %v1503
      %v1505 = vpop.f32.mrb[0].mxu0
      %v1506 = vpop.f32.mrb[0].mxu0
      %v1507 = vadd.f32 %v1048, %v1506
      %v1508 = vpop.f32.mrb[0].mxu0
      %1509 = vmatprep.mubr.bf16.mxu0 %v1349
      %1510 = vmatmul.mubr.bf16.gmra.mrb[0].mxu0 %v506
      %v1511 = vpop.f32.mrb[0].mxu0
      %v1512 = vadd.f32 %v1053, %v1511
      %v1513 = vpop.f32.mrb[0].mxu0
      %v1514 = vpop.f32.mrb[0].mxu0
      %v1515 = vadd.f32 %v1056, %v1514
      %v1516 = vpop.f32.mrb[0].mxu0
      %1517 = vmatprep.mubr.bf16.mxu0 %v1352
      %1518 = vmatmul.mubr.bf16.gmra.mrb[0].mxu0 %v508
      %v1519 = vpop.f32.mrb[0].mxu0
      %v1520 = vadd.f32 %v1061, %v1519
      %v1521 = vpop.f32.mrb[0].mxu0
      %v1522 = vpop.f32.mrb[0].mxu0
      %v1523 = vadd.f32 %v1064, %v1522
      %v1524 = vpop.f32.mrb[0].mxu0
      %1525 = vmatprep.mubr.bf16.mxu0 %v1355
      %1526 = vmatmul.mubr.bf16.gmra.mrb[0].mxu0 %v510
      %v1527 = vpop.f32.mrb[0].mxu0
      %v1528 = vadd.f32 %v1069, %v1527
      %v1529 = vpop.f32.mrb[0].mxu0
      %v1530 = vpop.f32.mrb[0].mxu0
      %v1531 = vadd.f32 %v1072, %v1530
      %v1532 = vpop.f32.mrb[0].mxu0
      %1533 = vmatprep.mubr.bf16.mxu0 %v1358
      %1534 = vmatmul.mubr.bf16.gmra.mrb[0].mxu0 %v512
      %v1535 = vpop.f32.mrb[0].mxu0
      %v1536 = vadd.f32 %v1077, %v1535
      %v1537 = vpop.f32.mrb[0].mxu0
      %v1538 = vpop.f32.mrb[0].mxu0
      %v1539 = vadd.f32 %v1080, %v1538
      %v1540 = vpop.f32.mrb[0].mxu0
      %1541 = vmatprep.mubr.bf16.mxu0 %v1361
      %1542 = vmatmul.mubr.bf16.gmra.mrb[0].mxu0 %v514
      %v1543 = vpop.f32.mrb[0].mxu0
      %v1544 = vadd.f32 %v1085, %v1543
      %v1545 = vpop.f32.mrb[0].mxu0
      %v1546 = vpop.f32.mrb[0].mxu0
      %v1547 = vadd.f32 %v1088, %v1546
      %v1548 = vpop.f32.mrb[0].mxu0
      %1549 = vmatprep.mubr.bf16.mxu0 %v1364
      %1550 = vmatmul.mubr.bf16.gmra.mrb[0].mxu0 %v516
      %v1551 = vpop.f32.mrb[0].mxu0
      %v1552 = vadd.f32 %v1093, %v1551
      %v1553 = vpop.f32.mrb[0].mxu0
      %v1554 = vpop.f32.mrb[0].mxu0
      %v1555 = vadd.f32 %v1096, %v1554
      %v1556 = vpop.f32.mrb[0].mxu0
      %1557 = vmatprep.mubr.bf16.mxu0 %v1367
      %1558 = vmatmul.mubr.bf16.gmra.mrb[0].mxu0 %v518
      %v1559 = vpop.f32.mrb[0].mxu0
      %v1560 = vadd.f32 %v1101, %v1559
      %v1561 = vpop.f32.mrb[0].mxu0
      %v1562 = vpop.f32.mrb[0].mxu0
      %v1563 = vadd.f32 %v1104, %v1562
      %v1564 = vpop.f32.mrb[0].mxu0
      %1565 = vmatprep.mubr.bf16.mxu0 %v1370
      %1566 = vmatmul.mubr.bf16.gmra.mrb[0].mxu0 %v520
      %v1567 = vpop.f32.mrb[0].mxu0
      %v1568 = vadd.f32 %v1109, %v1567
      %v1569 = vpop.f32.mrb[0].mxu0
      %v1570 = vpop.f32.mrb[0].mxu0
      %v1571 = vadd.f32 %v1112, %v1570
      %v1572 = vpop.f32.mrb[0].mxu0
      %1573 = vmatprep.mubr.bf16.mxu0 %v1373
      %1574 = vmatmul.mubr.bf16.gmra.mrb[0].mxu0 %v522
      %v1575 = vpop.f32.mrb[0].mxu0
      %v1576 = vadd.f32 %v1117, %v1575
      %v1577 = vpop.f32.mrb[0].mxu0
      %v1578 = vpop.f32.mrb[0].mxu0
      %v1579 = vadd.f32 %v1120, %v1578
      %v1580 = vpop.f32.mrb[0].mxu0
      %1581 = vmatprep.mubr.bf16.mxu0 %v1376
      %1582 = vmatmul.mubr.bf16.gmra.mrb[0].mxu0 %v524
      %v1583 = vpop.f32.mrb[0].mxu0
      %v1584 = vadd.f32 %v1125, %v1583
      %v1585 = vpop.f32.mrb[0].mxu0
      %v1586 = vpop.f32.mrb[0].mxu0
      %v1587 = vadd.f32 %v1128, %v1586
      %v1588 = vpop.f32.mrb[0].mxu0
      %1589 = vmatprep.mubr.bf16.mxu0 %v1379
      %1590 = vmatmul.mubr.bf16.gmra.mrb[0].mxu0 %v526
      %v1591 = vpop.f32.mrb[0].mxu0
      %v1592 = vadd.f32 %v1133, %v1591
      %v1593 = vpop.f32.mrb[0].mxu0
      %v1594 = vpop.f32.mrb[0].mxu0
      %v1595 = vadd.f32 %v1136, %v1594
      %v1596 = vpop.f32.mrb[0].mxu0
      %1597 = vmatprep.mubr.bf16.mxu0 %v1382
      %1598 = vmatmul.mubr.bf16.gmra.mrb[0].mxu0 %v528
      %v1599 = vpop.f32.mrb[0].mxu0
      %v1600 = vadd.f32 %v1141, %v1599
      %v1601 = vpop.f32.mrb[0].mxu0
      %v1602 = vpop.f32.mrb[0].mxu0
      %v1603 = vadd.f32 %v1144, %v1602
      %v1604 = vpop.f32.mrb[0].mxu0
      %1605 = vmatprep.mubr.bf16.mxu0 %v1385
      %1606 = vmatmul.mubr.bf16.gmra.mrb[0].mxu0 %v530
      %v1607 = vpop.f32.mrb[0].mxu0
      %v1608 = vadd.f32 %v1149, %v1607
      %v1609 = vpop.f32.mrb[0].mxu0
      %v1610 = vpop.f32.mrb[0].mxu0
      %v1611 = vadd.f32 %v1152, %v1610
      %v1612 = vpop.f32.mrb[0].mxu0
      %1613 = vmatprep.mubr.bf16.mxu0 %v1388
      %1614 = vmatmul.mubr.bf16.gmra.mrb[0].mxu0 %v532
      %v1615 = vpop.f32.mrb[0].mxu0
      %v1616 = vadd.f32 %v1157, %v1615
      %v1617 = vpop.f32.mrb[0].mxu0
      %v1618 = vpop.f32.mrb[0].mxu0
      %v1619 = vadd.f32 %v1160, %v1618
      %v1620 = vpop.f32.mrb[0].mxu0
      %1621 = vmatprep.mubr.bf16.mxu0 %v1391
      %1622 = vmatmul.mubr.bf16.gmra.mrb[0].mxu0 %v534
      %v1623 = vpop.f32.mrb[0].mxu0
      %v1624 = vadd.f32 %v1165, %v1623
      %v1625 = vpop.f32.mrb[0].mxu0
      %v1626 = vpop.f32.mrb[0].mxu0
      %v1627 = vadd.f32 %v1168, %v1626
      %v1628 = vpop.f32.mrb[0].mxu0
      %1629 = vmatprep.mubr.bf16.mxu0 %v1394
      %1630 = vmatmul.mubr.bf16.gmra.mrb[0].mxu0 %v536
      %v1631 = vpop.f32.mrb[0].mxu0
      %v1632 = vadd.f32 %v1173, %v1631
      %v1633 = vpop.f32.mrb[0].mxu0
      %v1634 = vpop.f32.mrb[0].mxu0
      %v1635 = vadd.f32 %v1176, %v1634
      %v1636 = vpop.f32.mrb[0].mxu0
      %1637 = vmatprep.mubr.bf16.mxu0 %v1397
      %1638 = vmatmul.mubr.bf16.gmra.mrb[0].mxu0 %v538
      %v1639 = vpop.f32.mrb[0].mxu0
      %v1640 = vadd.f32 %v1181, %v1639
      %v1641 = vpop.f32.mrb[0].mxu0
      %v1642 = vpop.f32.mrb[0].mxu0
      %v1643 = vadd.f32 %v1184, %v1642
      %v1644 = vpop.f32.mrb[0].mxu0
      %1645 = vmatprep.mubr.bf16.mxu0 %v1400
      %1646 = vmatmul.mubr.bf16.gmra.mrb[0].mxu0 %v540
      %v1647 = vpop.f32.mrb[0].mxu0
      %v1648 = vadd.f32 %v1189, %v1647
      %v1649 = vpop.f32.mrb[0].mxu0
      %v1650 = vpop.f32.mrb[0].mxu0
      %v1651 = vadd.f32 %v1192, %v1650
      %v1652 = vpop.f32.mrb[0].mxu0
      %1653 = vmatprep.mubr.bf16.mxu0 %v1403
      %1654 = vmatmul.mubr.bf16.gmra.mrb[0].mxu0 %v542
      %v1655 = vpop.f32.mrb[0].mxu0
      %v1656 = vadd.f32 %v1197, %v1655
      %v1657 = vpop.f32.mrb[0].mxu0
      %v1658 = vpop.f32.mrb[0].mxu0
      %v1659 = vadd.f32 %v1200, %v1658
      %v1660 = vpop.f32.mrb[0].mxu0
      %1661 = vmatprep.mubr.bf16.mxu0 %v1406
      %1662 = vmatmul.mubr.bf16.gmra.mrb[0].mxu0 %v544
      %v1663 = vpop.f32.mrb[0].mxu0
      %v1664 = vadd.f32 %v1205, %v1663
      %v1665 = vpop.f32.mrb[0].mxu0
      %v1666 = vpop.f32.mrb[0].mxu0
      %v1667 = vadd.f32 %v1208, %v1666
      %v1668 = vpop.f32.mrb[0].mxu0
      %1669 = vmatprep.mubr.bf16.mxu0 %v1409
      %1670 = vmatmul.mubr.bf16.gmra.mrb[0].mxu0 %v546
      %v1671 = vpop.f32.mrb[0].mxu0
      %v1672 = vadd.f32 %v1213, %v1671
      %v1673 = vpop.f32.mrb[0].mxu0
      %v1674 = vpop.f32.mrb[0].mxu0
      %v1675 = vadd.f32 %v1216, %v1674
      %v1676 = vpop.f32.mrb[0].mxu0
      %1677 = vmatprep.mubr.bf16.mxu0 %v1412
      %1678 = vmatmul.mubr.bf16.gmra.mrb[0].mxu0 %v548
      %v1679 = vpop.f32.mrb[0].mxu0
      %v1680 = vadd.f32 %v1221, %v1679
      %v1681 = vpop.f32.mrb[0].mxu0
      %v1682 = vpop.f32.mrb[0].mxu0
      %v1683 = vadd.f32 %v1224, %v1682
      %v1684 = vpop.f32.mrb[0].mxu0
      %1685 = vmatprep.mubr.bf16.mxu0 %v1415
      %1686 = vmatmul.mubr.bf16.gmra.mrb[0].mxu0 %v550
      %v1687 = vpop.f32.mrb[0].mxu0
      %v1688 = vadd.f32 %v1229, %v1687
      %v1689 = vpop.f32.mrb[0].mxu0
      %v1690 = vpop.f32.mrb[0].mxu0
      %v1691 = vadd.f32 %v1232, %v1690
      %v1692 = vpop.f32.mrb[0].mxu0
      %1693 = vmatprep.mubr.bf16.mxu0 %v1418
      %1694 = vmatmul.mubr.bf16.gmra.mrb[0].mxu0 %v552
      %v1695 = vpop.f32.mrb[0].mxu0
      %v1696 = vadd.f32 %v1237, %v1695
      %v1697 = vpop.f32.mrb[0].mxu0
      %v1698 = vpop.f32.mrb[0].mxu0
      %v1699 = vadd.f32 %v1240, %v1698
      %v1700 = vpop.f32.mrb[0].mxu0
      %1701 = vmatprep.mubr.bf16.mxu0 %v1421
      %1702 = vmatmul.mubr.bf16.gmra.mrb[0].mxu0 %v554
      %v1703 = vpop.f32.mrb[0].mxu0
      %v1704 = vadd.f32 %v1245, %v1703
      %v1705 = vpop.f32.mrb[0].mxu0
      %v1706 = vpop.f32.mrb[0].mxu0
      %v1707 = vadd.f32 %v1248, %v1706
      %v1708 = vpop.f32.mrb[0].mxu0
      %1709 = vmatprep.mubr.bf16.mxu0 %v1424
      %1710 = vmatmul.mubr.bf16.gmra.mrb[0].mxu0 %v556
      %v1711 = vpop.f32.mrb[0].mxu0
      %v1712 = vadd.f32 %v1253, %v1711
      %v1713 = vpop.f32.mrb[0].mxu0
      %v1714 = vpop.f32.mrb[0].mxu0
      %v1715 = vadd.f32 %v1256, %v1714
      %v1716 = vpop.f32.mrb[0].mxu0
      %1717 = vdwg.mxu0
      %v1718 = vld [vmem:[%s4] sm:$0x1]
      %v1720 = vlaneseq
      %v1721 = vshrl.u32 %v1720, 7
      %v1722 = vsub.s32 0, %v1721
      %v1723 = vrot.slane %v1718, %v1722
      %v1725 = vadd.f32 %v1464, %v1723
      %v1726 = vadd.f32 %v1467, %v1723
      %v1727 = vadd.f32 %v1472, %v1723
      %v1728 = vadd.f32 %v1475, %v1723
      %v1729 = vadd.f32 %v1480, %v1723
      %v1730 = vadd.f32 %v1483, %v1723
      %v1731 = vadd.f32 %v1488, %v1723
      %v1732 = vadd.f32 %v1491, %v1723
      %v1733 = vadd.f32 %v1496, %v1723
      %v1734 = vadd.f32 %v1499, %v1723
      %v1735 = vadd.f32 %v1504, %v1723
      %v1736 = vadd.f32 %v1507, %v1723
      %v1737 = vadd.f32 %v1512, %v1723
      %v1738 = vadd.f32 %v1515, %v1723
      %v1739 = vadd.f32 %v1520, %v1723
      %v1740 = vadd.f32 %v1523, %v1723
      %v1741 = vadd.f32 %v1528, %v1723
      %v1742 = vadd.f32 %v1531, %v1723
      %v1743 = vadd.f32 %v1536, %v1723
      %v1744 = vadd.f32 %v1539, %v1723
      %v1745 = vadd.f32 %v1544, %v1723
      %v1746 = vadd.f32 %v1547, %v1723
      %v1747 = vadd.f32 %v1552, %v1723
      %v1748 = vadd.f32 %v1555, %v1723
      %v1749 = vadd.f32 %v1560, %v1723
      %v1750 = vadd.f32 %v1563, %v1723
      %v1751 = vadd.f32 %v1568, %v1723
      %v1752 = vadd.f32 %v1571, %v1723
      %v1753 = vadd.f32 %v1576, %v1723
      %v1754 = vadd.f32 %v1579, %v1723
      %v1755 = vadd.f32 %v1584, %v1723
      %v1756 = vadd.f32 %v1587, %v1723
      %v1757 = vadd.f32 %v1592, %v1723
      %v1758 = vadd.f32 %v1595, %v1723
      %v1759 = vadd.f32 %v1600, %v1723
      %v1760 = vadd.f32 %v1603, %v1723
      %v1761 = vadd.f32 %v1608, %v1723
      %v1762 = vadd.f32 %v1611, %v1723
      %v1763 = vadd.f32 %v1616, %v1723
      %v1764 = vadd.f32 %v1619, %v1723
      %v1765 = vadd.f32 %v1624, %v1723
      %v1766 = vadd.f32 %v1627, %v1723
      %v1767 = vadd.f32 %v1632, %v1723
      %v1768 = vadd.f32 %v1635, %v1723
      %v1769 = vadd.f32 %v1640, %v1723
      %v1770 = vadd.f32 %v1643, %v1723
      %v1771 = vadd.f32 %v1648, %v1723
      %v1772 = vadd.f32 %v1651, %v1723
      %v1773 = vadd.f32 %v1656, %v1723
      %v1774 = vadd.f32 %v1659, %v1723
      %v1775 = vadd.f32 %v1664, %v1723
      %v1776 = vadd.f32 %v1667, %v1723
      %v1777 = vadd.f32 %v1672, %v1723
      %v1778 = vadd.f32 %v1675, %v1723
      %v1779 = vadd.f32 %v1680, %v1723
      %v1780 = vadd.f32 %v1683, %v1723
      %v1781 = vadd.f32 %v1688, %v1723
      %v1782 = vadd.f32 %v1691, %v1723
      %v1783 = vadd.f32 %v1696, %v1723
      %v1784 = vadd.f32 %v1699, %v1723
      %v1785 = vadd.f32 %v1704, %v1723
      %v1786 = vadd.f32 %v1707, %v1723
      %v1787 = vadd.f32 %v1712, %v1723
      %v1788 = vadd.f32 %v1715, %v1723
      %v1789 = vmax.f32 %v1725, 0.0
      %v1790 = vmax.f32 %v1726, 0.0
      %v1791 = vmax.f32 %v1727, 0.0
      %v1792 = vmax.f32 %v1728, 0.0
      %v1793 = vmax.f32 %v1729, 0.0
      %v1794 = vmax.f32 %v1730, 0.0
      %v1795 = vmax.f32 %v1731, 0.0
      %v1796 = vmax.f32 %v1732, 0.0
      %v1797 = vmax.f32 %v1733, 0.0
      %v1798 = vmax.f32 %v1734, 0.0
      %v1799 = vmax.f32 %v1735, 0.0
      %v1800 = vmax.f32 %v1736, 0.0
      %v1801 = vmax.f32 %v1737, 0.0
      %v1802 = vmax.f32 %v1738, 0.0
      %v1803 = vmax.f32 %v1739, 0.0
      %v1804 = vmax.f32 %v1740, 0.0
      %v1805 = vmax.f32 %v1741, 0.0
      %v1806 = vmax.f32 %v1742, 0.0
      %v1807 = vmax.f32 %v1743, 0.0
      %v1808 = vmax.f32 %v1744, 0.0
      %v1809 = vmax.f32 %v1745, 0.0
      %v1810 = vmax.f32 %v1746, 0.0
      %v1811 = vmax.f32 %v1747, 0.0
      %v1812 = vmax.f32 %v1748, 0.0
      %v1813 = vmax.f32 %v1749, 0.0
      %v1814 = vmax.f32 %v1750, 0.0
      %v1815 = vmax.f32 %v1751, 0.0
      %v1816 = vmax.f32 %v1752, 0.0
      %v1817 = vmax.f32 %v1753, 0.0
      %v1818 = vmax.f32 %v1754, 0.0
      %v1819 = vmax.f32 %v1755, 0.0
      %v1820 = vmax.f32 %v1756, 0.0
      %v1821 = vmax.f32 %v1757, 0.0
      %v1822 = vmax.f32 %v1758, 0.0
      %v1823 = vmax.f32 %v1759, 0.0
      %v1824 = vmax.f32 %v1760, 0.0
      %v1825 = vmax.f32 %v1761, 0.0
      %v1826 = vmax.f32 %v1762, 0.0
      %v1827 = vmax.f32 %v1763, 0.0
      %v1828 = vmax.f32 %v1764, 0.0
      %v1829 = vmax.f32 %v1765, 0.0
      %v1830 = vmax.f32 %v1766, 0.0
      %v1831 = vmax.f32 %v1767, 0.0
      %v1832 = vmax.f32 %v1768, 0.0
      %v1833 = vmax.f32 %v1769, 0.0
      %v1834 = vmax.f32 %v1770, 0.0
      %v1835 = vmax.f32 %v1771, 0.0
      %v1836 = vmax.f32 %v1772, 0.0
      %v1837 = vmax.f32 %v1773, 0.0
      %v1838 = vmax.f32 %v1774, 0.0
      %v1839 = vmax.f32 %v1775, 0.0
      %v1840 = vmax.f32 %v1776, 0.0
      %v1841 = vmax.f32 %v1777, 0.0
      %v1842 = vmax.f32 %v1778, 0.0
      %v1843 = vmax.f32 %v1779, 0.0
      %v1844 = vmax.f32 %v1780, 0.0
      %v1845 = vmax.f32 %v1781, 0.0
      %v1846 = vmax.f32 %v1782, 0.0
      %v1847 = vmax.f32 %v1783, 0.0
      %v1848 = vmax.f32 %v1784, 0.0
      %v1849 = vmax.f32 %v1785, 0.0
      %v1850 = vmax.f32 %v1786, 0.0
      %v1851 = vmax.f32 %v1787, 0.0
      %v1852 = vmax.f32 %v1788, 0.0
      %v1853 = vld [vmem:[%s5] sm:$0xf]
      %v1854 = vld [vmem:[%s5 + $0x4] sm:$0xf]
      %v1855 = vld [vmem:[%s5 + $0x8] sm:$0xf]
      %v1856 = vld [vmem:[%s5 + $0xc] sm:$0xf]
      %v1857 = vld [vmem:[%s5 + $0x10] sm:$0xf]
      %v1858 = vld [vmem:[%s5 + $0x14] sm:$0xf]
      %v1859 = vld [vmem:[%s5 + $0x18] sm:$0xf]
      %v1860 = vld [vmem:[%s5 + $0x1c] sm:$0xf]
      %v1861 = vld [vmem:[%s5 + $0x20] sm:$0xf]
      %v1862 = vld [vmem:[%s5 + $0x24] sm:$0xf]
      %v1863 = vld [vmem:[%s5 + $0x28] sm:$0xf]
      %v1864 = vld [vmem:[%s5 + $0x2c] sm:$0xf]
      %v1865 = vld [vmem:[%s5 + $0x30] sm:$0xf]
      %v1866 = vld [vmem:[%s5 + $0x34] sm:$0xf]
      %v1867 = vld [vmem:[%s5 + $0x38] sm:$0xf]
      %v1868 = vld [vmem:[%s5 + $0x3c] sm:$0xf]
      %v1869 = vld [vmem:[%s6] sm:$0x1]
      %v1870 = vpack.c.bf16 %v1790, %v1789
      %v1871 = vpack.c.bf16 %v1792, %v1791
      %v1872 = vpack.c.bf16 %v1794, %v1793
      %v1873 = vpack.c.bf16 %v1796, %v1795
      %v1874 = vpack.c.bf16 %v1798, %v1797
      %v1875 = vpack.c.bf16 %v1800, %v1799
      %v1876 = vpack.c.bf16 %v1802, %v1801
      %v1877 = vpack.c.bf16 %v1804, %v1803
      %v1878 = vpack.c.bf16 %v1806, %v1805
      %v1879 = vpack.c.bf16 %v1808, %v1807
      %v1880 = vpack.c.bf16 %v1810, %v1809
      %v1881 = vpack.c.bf16 %v1812, %v1811
      %v1882 = vpack.c.bf16 %v1814, %v1813
      %v1883 = vpack.c.bf16 %v1816, %v1815
      %v1884 = vpack.c.bf16 %v1818, %v1817
      %v1885 = vpack.c.bf16 %v1820, %v1819
      %v1886 = vpack.c.bf16 %v1822, %v1821
      %v1887 = vpack.c.bf16 %v1824, %v1823
      %v1888 = vpack.c.bf16 %v1826, %v1825
      %v1889 = vpack.c.bf16 %v1828, %v1827
      %v1890 = vpack.c.bf16 %v1830, %v1829
      %v1891 = vpack.c.bf16 %v1832, %v1831
      %v1892 = vpack.c.bf16 %v1834, %v1833
      %v1893 = vpack.c.bf16 %v1836, %v1835
      %v1894 = vpack.c.bf16 %v1838, %v1837
      %v1895 = vpack.c.bf16 %v1840, %v1839
      %v1896 = vpack.c.bf16 %v1842, %v1841
      %v1897 = vpack.c.bf16 %v1844, %v1843
      %v1898 = vpack.c.bf16 %v1846, %v1845
      %v1899 = vpack.c.bf16 %v1848, %v1847
      %v1900 = vpack.c.bf16 %v1850, %v1849
      %v1901 = vpack.c.bf16 %v1852, %v1851
      %v1903 = vlaneseq
      %v1904 = vshrl.u32 %v1903, 7
      %v1905 = vsub.s32 0, %v1904
      %v1906 = vrot.slane %v1869, %v1905
      %v1924 = vunpack.c.l.b16 %v1853
      %v1925 = vunpack.c.l.b16 %v1854
      %v1926 = vunpack.c.l.b16 %v1855
      %v1927 = vunpack.c.l.b16 %v1856
      %v1928 = vunpack.c.l.b16 %v1857
      %v1929 = vunpack.c.l.b16 %v1858
      %v1930 = vunpack.c.l.b16 %v1859
      %v1931 = vunpack.c.l.b16 %v1860
      %v1932 = vunpack.c.l.b16 %v1861
      %v1933 = vunpack.c.l.b16 %v1862
      %v1934 = vunpack.c.l.b16 %v1863
      %v1935 = vunpack.c.l.b16 %v1864
      %v1936 = vunpack.c.l.b16 %v1865
      %v1937 = vunpack.c.l.b16 %v1866
      %v1938 = vunpack.c.l.b16 %v1867
      %v1939 = vunpack.c.l.b16 %v1868
      %v1940 = vpack.c.b16 %v1925, %v1924
      %v1941 = vpack.c.b16 %v1927, %v1926
      %v1942 = vpack.c.b16 %v1929, %v1928
      %v1943 = vpack.c.b16 %v1931, %v1930
      %v1944 = vpack.c.b16 %v1933, %v1932
      %v1945 = vpack.c.b16 %v1935, %v1934
      %v1946 = vpack.c.b16 %v1937, %v1936
      %v1947 = vpack.c.b16 %v1939, %v1938
      %1956 = vmatprep.subr.bf16.mxu0 0
      %1957 = vmatpush1.bf16.msra.mxu0 %v1940
      %1958 = vmatprep.subr.bf16.mxu0 0
      %1959 = vmatpush1.bf16.msra.mxu0 %v1941
      %1960 = vmatprep.subr.bf16.mxu0 0
      %1961 = vmatpush1.bf16.msra.mxu0 %v1942
      %1962 = vmatprep.subr.bf16.mxu0 0
      %1963 = vmatpush1.bf16.msra.mxu0 %v1943
      %1964 = vmatprep.subr.bf16.mxu0 0
      %1965 = vmatpush1.bf16.msra.mxu0 %v1944
      %1966 = vmatprep.subr.bf16.mxu0 0
      %1967 = vmatpush1.bf16.msra.mxu0 %v1945
      %1968 = vmatprep.subr.bf16.mxu0 0
      %1969 = vmatpush1.bf16.msra.mxu0 %v1946
      %1970 = vmatprep.subr.bf16.mxu0 0
      %1971 = vmatpush1.bf16.msra.mxu0 %v1947
      %1972 = vmatprep.subr.bf16.mxu0 0
      %1973 = vmatpush1.bf16.msra.mxu0 0
      %1974 = vmatprep.subr.bf16.mxu0 0
      %1975 = vmatpush1.bf16.msra.mxu0 0
      %1976 = vmatprep.subr.bf16.mxu0 0
      %1977 = vmatpush1.bf16.msra.mxu0 0
      %1978 = vmatprep.subr.bf16.mxu0 0
      %1979 = vmatpush1.bf16.msra.mxu0 0
      %1980 = vmatprep.subr.bf16.mxu0 0
      %1981 = vmatpush1.bf16.msra.mxu0 0
      %1982 = vmatprep.subr.bf16.mxu0 0
      %1983 = vmatpush1.bf16.msra.mxu0 0
      %1984 = vmatprep.subr.bf16.mxu0 0
      %1985 = vmatpush1.bf16.msra.mxu0 0
      %1986 = vmatprep.subr.bf16.mxu0 0
      %1987 = vmatpush1.bf16.msra.mxu0 0
      %1988 = vmatprep.mubr.bf16.mxu0 0
      %1989 = vmatmul.mubr.bf16.gmra.mrb[0].mxu0 %v1870
      %v1990 = vpop.f32.mrb[0].mxu0
      %v1991 = vadd.f32 %v1906, %v1990
      %v1992 = vpop.f32.mrb[0].mxu0
      %v1993 = vpop.f32.mrb[0].mxu0
      %v1994 = vadd.f32 %v1906, %v1993
      %v1995 = vpop.f32.mrb[0].mxu0
      %1996 = vmatprep.mubr.bf16.mxu0 0
      %1997 = vmatmul.mubr.bf16.gmra.mrb[0].mxu0 %v1871
      %v1998 = vpop.f32.mrb[0].mxu0
      %v1999 = vadd.f32 %v1906, %v1998
      %v2000 = vpop.f32.mrb[0].mxu0
      %v2001 = vpop.f32.mrb[0].mxu0
      %v2002 = vadd.f32 %v1906, %v2001
      %v2003 = vpop.f32.mrb[0].mxu0
      %2004 = vmatprep.mubr.bf16.mxu0 0
      %2005 = vmatmul.mubr.bf16.gmra.mrb[0].mxu0 %v1872
      %v2006 = vpop.f32.mrb[0].mxu0
      %v2007 = vadd.f32 %v1906, %v2006
      %v2008 = vpop.f32.mrb[0].mxu0
      %v2009 = vpop.f32.mrb[0].mxu0
      %v2010 = vadd.f32 %v1906, %v2009
      %v2011 = vpop.f32.mrb[0].mxu0
      %2012 = vmatprep.mubr.bf16.mxu0 0
      %2013 = vmatmul.mubr.bf16.gmra.mrb[0].mxu0 %v1873
      %v2014 = vpop.f32.mrb[0].mxu0
      %v2015 = vadd.f32 %v1906, %v2014
      %v2016 = vpop.f32.mrb[0].mxu0
      %v2017 = vpop.f32.mrb[0].mxu0
      %v2018 = vadd.f32 %v1906, %v2017
      %v2019 = vpop.f32.mrb[0].mxu0
      %2020 = vmatprep.mubr.bf16.mxu0 0
      %2021 = vmatmul.mubr.bf16.gmra.mrb[0].mxu0 %v1874
      %v2022 = vpop.f32.mrb[0].mxu0
      %v2023 = vadd.f32 %v1906, %v2022
      %v2024 = vpop.f32.mrb[0].mxu0
      %v2025 = vpop.f32.mrb[0].mxu0
      %v2026 = vadd.f32 %v1906, %v2025
      %v2027 = vpop.f32.mrb[0].mxu0
      %2028 = vmatprep.mubr.bf16.mxu0 0
      %2029 = vmatmul.mubr.bf16.gmra.mrb[0].mxu0 %v1875
      %v2030 = vpop.f32.mrb[0].mxu0
      %v2031 = vadd.f32 %v1906, %v2030
      %v2032 = vpop.f32.mrb[0].mxu0
      %v2033 = vpop.f32.mrb[0].mxu0
      %v2034 = vadd.f32 %v1906, %v2033
      %v2035 = vpop.f32.mrb[0].mxu0
      %2036 = vmatprep.mubr.bf16.mxu0 0
      %2037 = vmatmul.mubr.bf16.gmra.mrb[0].mxu0 %v1876
      %v2038 = vpop.f32.mrb[0].mxu0
      %v2039 = vadd.f32 %v1906, %v2038
      %v2040 = vpop.f32.mrb[0].mxu0
      %v2041 = vpop.f32.mrb[0].mxu0
      %v2042 = vadd.f32 %v1906, %v2041
      %v2043 = vpop.f32.mrb[0].mxu0
      %2044 = vmatprep.mubr.bf16.mxu0 0
      %2045 = vmatmul.mubr.bf16.gmra.mrb[0].mxu0 %v1877
      %v2046 = vpop.f32.mrb[0].mxu0
      %v2047 = vadd.f32 %v1906, %v2046
      %v2048 = vpop.f32.mrb[0].mxu0
      %v2049 = vpop.f32.mrb[0].mxu0
      %v2050 = vadd.f32 %v1906, %v2049
      %v2051 = vpop.f32.mrb[0].mxu0
      %2052 = vmatprep.mubr.bf16.mxu0 0
      %2053 = vmatmul.mubr.bf16.gmra.mrb[0].mxu0 %v1878
      %v2054 = vpop.f32.mrb[0].mxu0
      %v2055 = vadd.f32 %v1906, %v2054
      %v2056 = vpop.f32.mrb[0].mxu0
      %v2057 = vpop.f32.mrb[0].mxu0
      %v2058 = vadd.f32 %v1906, %v2057
      %v2059 = vpop.f32.mrb[0].mxu0
      %2060 = vmatprep.mubr.bf16.mxu0 0
      %2061 = vmatmul.mubr.bf16.gmra.mrb[0].mxu0 %v1879
      %v2062 = vpop.f32.mrb[0].mxu0
      %v2063 = vadd.f32 %v1906, %v2062
      %v2064 = vpop.f32.mrb[0].mxu0
      %v2065 = vpop.f32.mrb[0].mxu0
      %v2066 = vadd.f32 %v1906, %v2065
      %v2067 = vpop.f32.mrb[0].mxu0
      %2068 = vmatprep.mubr.bf16.mxu0 0
      %2069 = vmatmul.mubr.bf16.gmra.mrb[0].mxu0 %v1880
      %v2070 = vpop.f32.mrb[0].mxu0
      %v2071 = vadd.f32 %v1906, %v2070
      %v2072 = vpop.f32.mrb[0].mxu0
      %v2073 = vpop.f32.mrb[0].mxu0
      %v2074 = vadd.f32 %v1906, %v2073
      %v2075 = vpop.f32.mrb[0].mxu0
      %2076 = vmatprep.mubr.bf16.mxu0 0
      %2077 = vmatmul.mubr.bf16.gmra.mrb[0].mxu0 %v1881
      %v2078 = vpop.f32.mrb[0].mxu0
      %v2079 = vadd.f32 %v1906, %v2078
      %v2080 = vpop.f32.mrb[0].mxu0
      %v2081 = vpop.f32.mrb[0].mxu0
      %v2082 = vadd.f32 %v1906, %v2081
      %v2083 = vpop.f32.mrb[0].mxu0
      %2084 = vmatprep.mubr.bf16.mxu0 0
      %2085 = vmatmul.mubr.bf16.gmra.mrb[0].mxu0 %v1882
      %v2086 = vpop.f32.mrb[0].mxu0
      %v2087 = vadd.f32 %v1906, %v2086
      %v2088 = vpop.f32.mrb[0].mxu0
      %v2089 = vpop.f32.mrb[0].mxu0
      %v2090 = vadd.f32 %v1906, %v2089
      %v2091 = vpop.f32.mrb[0].mxu0
      %2092 = vmatprep.mubr.bf16.mxu0 0
      %2093 = vmatmul.mubr.bf16.gmra.mrb[0].mxu0 %v1883
      %v2094 = vpop.f32.mrb[0].mxu0
      %v2095 = vadd.f32 %v1906, %v2094
      %v2096 = vpop.f32.mrb[0].mxu0
      %v2097 = vpop.f32.mrb[0].mxu0
      %v2098 = vadd.f32 %v1906, %v2097
      %v2099 = vpop.f32.mrb[0].mxu0
      %2100 = vmatprep.mubr.bf16.mxu0 0
      %2101 = vmatmul.mubr.bf16.gmra.mrb[0].mxu0 %v1884
      %v2102 = vpop.f32.mrb[0].mxu0
      %v2103 = vadd.f32 %v1906, %v2102
      %v2104 = vpop.f32.mrb[0].mxu0
      %v2105 = vpop.f32.mrb[0].mxu0
      %v2106 = vadd.f32 %v1906, %v2105
      %v2107 = vpop.f32.mrb[0].mxu0
      %2108 = vmatprep.mubr.bf16.mxu0 0
      %2109 = vmatmul.mubr.bf16.gmra.mrb[0].mxu0 %v1885
      %v2110 = vpop.f32.mrb[0].mxu0
      %v2111 = vadd.f32 %v1906, %v2110
      %v2112 = vpop.f32.mrb[0].mxu0
      %v2113 = vpop.f32.mrb[0].mxu0
      %v2114 = vadd.f32 %v1906, %v2113
      %v2115 = vpop.f32.mrb[0].mxu0
      %2116 = vmatprep.mubr.bf16.mxu0 0
      %2117 = vmatmul.mubr.bf16.gmra.mrb[0].mxu0 %v1886
      %v2118 = vpop.f32.mrb[0].mxu0
      %v2119 = vadd.f32 %v1906, %v2118
      %v2120 = vpop.f32.mrb[0].mxu0
      %v2121 = vpop.f32.mrb[0].mxu0
      %v2122 = vadd.f32 %v1906, %v2121
      %v2123 = vpop.f32.mrb[0].mxu0
      %2124 = vmatprep.mubr.bf16.mxu0 0
      %2125 = vmatmul.mubr.bf16.gmra.mrb[0].mxu0 %v1887
      %v2126 = vpop.f32.mrb[0].mxu0
      %v2127 = vadd.f32 %v1906, %v2126
      %v2128 = vpop.f32.mrb[0].mxu0
      %v2129 = vpop.f32.mrb[0].mxu0
      %v2130 = vadd.f32 %v1906, %v2129
      %v2131 = vpop.f32.mrb[0].mxu0
      %2132 = vmatprep.mubr.bf16.mxu0 0
      %2133 = vmatmul.mubr.bf16.gmra.mrb[0].mxu0 %v1888
      %v2134 = vpop.f32.mrb[0].mxu0
      %v2135 = vadd.f32 %v1906, %v2134
      %v2136 = vpop.f32.mrb[0].mxu0
      %v2137 = vpop.f32.mrb[0].mxu0
      %v2138 = vadd.f32 %v1906, %v2137
      %v2139 = vpop.f32.mrb[0].mxu0
      %2140 = vmatprep.mubr.bf16.mxu0 0
      %2141 = vmatmul.mubr.bf16.gmra.mrb[0].mxu0 %v1889
      %v2142 = vpop.f32.mrb[0].mxu0
      %v2143 = vadd.f32 %v1906, %v2142
      %v2144 = vpop.f32.mrb[0].mxu0
      %v2145 = vpop.f32.mrb[0].mxu0
      %v2146 = vadd.f32 %v1906, %v2145
      %v2147 = vpop.f32.mrb[0].mxu0
      %2148 = vmatprep.mubr.bf16.mxu0 0
      %2149 = vmatmul.mubr.bf16.gmra.mrb[0].mxu0 %v1890
      %v2150 = vpop.f32.mrb[0].mxu0
      %v2151 = vadd.f32 %v1906, %v2150
      %v2152 = vpop.f32.mrb[0].mxu0
      %v2153 = vpop.f32.mrb[0].mxu0
      %v2154 = vadd.f32 %v1906, %v2153
      %v2155 = vpop.f32.mrb[0].mxu0
      %2156 = vmatprep.mubr.bf16.mxu0 0
      %2157 = vmatmul.mubr.bf16.gmra.mrb[0].mxu0 %v1891
      %v2158 = vpop.f32.mrb[0].mxu0
      %v2159 = vadd.f32 %v1906, %v2158
      %v2160 = vpop.f32.mrb[0].mxu0
      %v2161 = vpop.f32.mrb[0].mxu0
      %v2162 = vadd.f32 %v1906, %v2161
      %v2163 = vpop.f32.mrb[0].mxu0
      %2164 = vmatprep.mubr.bf16.mxu0 0
      %2165 = vmatmul.mubr.bf16.gmra.mrb[0].mxu0 %v1892
      %v2166 = vpop.f32.mrb[0].mxu0
      %v2167 = vadd.f32 %v1906, %v2166
      %v2168 = vpop.f32.mrb[0].mxu0
      %v2169 = vpop.f32.mrb[0].mxu0
      %v2170 = vadd.f32 %v1906, %v2169
      %v2171 = vpop.f32.mrb[0].mxu0
      %2172 = vmatprep.mubr.bf16.mxu0 0
      %2173 = vmatmul.mubr.bf16.gmra.mrb[0].mxu0 %v1893
      %v2174 = vpop.f32.mrb[0].mxu0
      %v2175 = vadd.f32 %v1906, %v2174
      %v2176 = vpop.f32.mrb[0].mxu0
      %v2177 = vpop.f32.mrb[0].mxu0
      %v2178 = vadd.f32 %v1906, %v2177
      %v2179 = vpop.f32.mrb[0].mxu0
      %2180 = vmatprep.mubr.bf16.mxu0 0
      %2181 = vmatmul.mubr.bf16.gmra.mrb[0].mxu0 %v1894
      %v2182 = vpop.f32.mrb[0].mxu0
      %v2183 = vadd.f32 %v1906, %v2182
      %v2184 = vpop.f32.mrb[0].mxu0
      %v2185 = vpop.f32.mrb[0].mxu0
      %v2186 = vadd.f32 %v1906, %v2185
      %v2187 = vpop.f32.mrb[0].mxu0
      %2188 = vmatprep.mubr.bf16.mxu0 0
      %2189 = vmatmul.mubr.bf16.gmra.mrb[0].mxu0 %v1895
      %v2190 = vpop.f32.mrb[0].mxu0
      %v2191 = vadd.f32 %v1906, %v2190
      %v2192 = vpop.f32.mrb[0].mxu0
      %v2193 = vpop.f32.mrb[0].mxu0
      %v2194 = vadd.f32 %v1906, %v2193
      %v2195 = vpop.f32.mrb[0].mxu0
      %2196 = vmatprep.mubr.bf16.mxu0 0
      %2197 = vmatmul.mubr.bf16.gmra.mrb[0].mxu0 %v1896
      %v2198 = vpop.f32.mrb[0].mxu0
      %v2199 = vadd.f32 %v1906, %v2198
      %v2200 = vpop.f32.mrb[0].mxu0
      %v2201 = vpop.f32.mrb[0].mxu0
      %v2202 = vadd.f32 %v1906, %v2201
      %v2203 = vpop.f32.mrb[0].mxu0
      %2204 = vmatprep.mubr.bf16.mxu0 0
      %2205 = vmatmul.mubr.bf16.gmra.mrb[0].mxu0 %v1897
      %v2206 = vpop.f32.mrb[0].mxu0
      %v2207 = vadd.f32 %v1906, %v2206
      %v2208 = vpop.f32.mrb[0].mxu0
      %v2209 = vpop.f32.mrb[0].mxu0
      %v2210 = vadd.f32 %v1906, %v2209
      %v2211 = vpop.f32.mrb[0].mxu0
      %2212 = vmatprep.mubr.bf16.mxu0 0
      %2213 = vmatmul.mubr.bf16.gmra.mrb[0].mxu0 %v1898
      %v2214 = vpop.f32.mrb[0].mxu0
      %v2215 = vadd.f32 %v1906, %v2214
      %v2216 = vpop.f32.mrb[0].mxu0
      %v2217 = vpop.f32.mrb[0].mxu0
      %v2218 = vadd.f32 %v1906, %v2217
      %v2219 = vpop.f32.mrb[0].mxu0
      %2220 = vmatprep.mubr.bf16.mxu0 0
      %2221 = vmatmul.mubr.bf16.gmra.mrb[0].mxu0 %v1899
      %v2222 = vpop.f32.mrb[0].mxu0
      %v2223 = vadd.f32 %v1906, %v2222
      %v2224 = vpop.f32.mrb[0].mxu0
      %v2225 = vpop.f32.mrb[0].mxu0
      %v2226 = vadd.f32 %v1906, %v2225
      %v2227 = vpop.f32.mrb[0].mxu0
      %2228 = vmatprep.mubr.bf16.mxu0 0
      %2229 = vmatmul.mubr.bf16.gmra.mrb[0].mxu0 %v1900
      %v2230 = vpop.f32.mrb[0].mxu0
      %v2231 = vadd.f32 %v1906, %v2230
      %v2232 = vpop.f32.mrb[0].mxu0
      %v2233 = vpop.f32.mrb[0].mxu0
      %v2234 = vadd.f32 %v1906, %v2233
      %v2235 = vpop.f32.mrb[0].mxu0
      %2236 = vmatprep.mubr.bf16.mxu0 0
      %2237 = vmatmul.mubr.bf16.gmra.mrb[0].mxu0 %v1901
      %v2238 = vpop.f32.mrb[0].mxu0
      %v2239 = vadd.f32 %v1906, %v2238
      %v2240 = vpop.f32.mrb[0].mxu0
      %v2241 = vpop.f32.mrb[0].mxu0
      %v2242 = vadd.f32 %v1906, %v2241
      %v2243 = vpop.f32.mrb[0].mxu0
      %2244 = vdwg.mxu0
      %v2245 = vmax.f32 %v1991, 0.0
      %v2246 = vmax.f32 %v1994, 0.0
      %v2247 = vmax.f32 %v1999, 0.0
      %v2248 = vmax.f32 %v2002, 0.0
      %v2249 = vmax.f32 %v2007, 0.0
      %v2250 = vmax.f32 %v2010, 0.0
      %v2251 = vmax.f32 %v2015, 0.0
      %v2252 = vmax.f32 %v2018, 0.0
      %v2253 = vmax.f32 %v2023, 0.0
      %v2254 = vmax.f32 %v2026, 0.0
      %v2255 = vmax.f32 %v2031, 0.0
      %v2256 = vmax.f32 %v2034, 0.0
      %v2257 = vmax.f32 %v2039, 0.0
      %v2258 = vmax.f32 %v2042, 0.0
      %v2259 = vmax.f32 %v2047, 0.0
      %v2260 = vmax.f32 %v2050, 0.0
      %v2261 = vmax.f32 %v2055, 0.0
      %v2262 = vmax.f32 %v2058, 0.0
      %v2263 = vmax.f32 %v2063, 0.0
      %v2264 = vmax.f32 %v2066, 0.0
      %v2265 = vmax.f32 %v2071, 0.0
      %v2266 = vmax.f32 %v2074, 0.0
      %v2267 = vmax.f32 %v2079, 0.0
      %v2268 = vmax.f32 %v2082, 0.0
      %v2269 = vmax.f32 %v2087, 0.0
      %v2270 = vmax.f32 %v2090, 0.0
      %v2271 = vmax.f32 %v2095, 0.0
      %v2272 = vmax.f32 %v2098, 0.0
      %v2273 = vmax.f32 %v2103, 0.0
      %v2274 = vmax.f32 %v2106, 0.0
      %v2275 = vmax.f32 %v2111, 0.0
      %v2276 = vmax.f32 %v2114, 0.0
      %v2277 = vmax.f32 %v2119, 0.0
      %v2278 = vmax.f32 %v2122, 0.0
      %v2279 = vmax.f32 %v2127, 0.0
      %v2280 = vmax.f32 %v2130, 0.0
      %v2281 = vmax.f32 %v2135, 0.0
      %v2282 = vmax.f32 %v2138, 0.0
      %v2283 = vmax.f32 %v2143, 0.0
      %v2284 = vmax.f32 %v2146, 0.0
      %v2285 = vmax.f32 %v2151, 0.0
      %v2286 = vmax.f32 %v2154, 0.0
      %v2287 = vmax.f32 %v2159, 0.0
      %v2288 = vmax.f32 %v2162, 0.0
      %v2289 = vmax.f32 %v2167, 0.0
      %v2290 = vmax.f32 %v2170, 0.0
      %v2291 = vmax.f32 %v2175, 0.0
      %v2292 = vmax.f32 %v2178, 0.0
      %v2293 = vmax.f32 %v2183, 0.0
      %v2294 = vmax.f32 %v2186, 0.0
      %v2295 = vmax.f32 %v2191, 0.0
      %v2296 = vmax.f32 %v2194, 0.0
      %v2297 = vmax.f32 %v2199, 0.0
      %v2298 = vmax.f32 %v2202, 0.0
      %v2299 = vmax.f32 %v2207, 0.0
      %v2300 = vmax.f32 %v2210, 0.0
      %v2301 = vmax.f32 %v2215, 0.0
      %v2302 = vmax.f32 %v2218, 0.0
      %v2303 = vmax.f32 %v2223, 0.0
      %v2304 = vmax.f32 %v2226, 0.0
      %v2305 = vmax.f32 %v2231, 0.0
      %v2306 = vmax.f32 %v2234, 0.0
      %v2307 = vmax.f32 %v2239, 0.0
      %v2308 = vmax.f32 %v2242, 0.0
      %v2309 = vpack.c.bf16 %v2246, %v2245
      %v2310 = vpack.c.bf16 %v2248, %v2247
      %v2311 = vpack.c.bf16 %v2250, %v2249
      %v2312 = vpack.c.bf16 %v2252, %v2251
      %v2313 = vpack.c.bf16 %v2254, %v2253
      %v2314 = vpack.c.bf16 %v2256, %v2255
      %v2315 = vpack.c.bf16 %v2258, %v2257
      %v2316 = vpack.c.bf16 %v2260, %v2259
      %v2317 = vpack.c.bf16 %v2262, %v2261
      %v2318 = vpack.c.bf16 %v2264, %v2263
      %v2319 = vpack.c.bf16 %v2266, %v2265
      %v2320 = vpack.c.bf16 %v2268, %v2267
      %v2321 = vpack.c.bf16 %v2270, %v2269
      %v2322 = vpack.c.bf16 %v2272, %v2271
      %v2323 = vpack.c.bf16 %v2274, %v2273
      %v2324 = vpack.c.bf16 %v2276, %v2275
      %v2325 = vpack.c.bf16 %v2278, %v2277
      %v2326 = vpack.c.bf16 %v2280, %v2279
      %v2327 = vpack.c.bf16 %v2282, %v2281
      %v2328 = vpack.c.bf16 %v2284, %v2283
      %v2329 = vpack.c.bf16 %v2286, %v2285
      %v2330 = vpack.c.bf16 %v2288, %v2287
      %v2331 = vpack.c.bf16 %v2290, %v2289
      %v2332 = vpack.c.bf16 %v2292, %v2291
      %v2333 = vpack.c.bf16 %v2294, %v2293
      %v2334 = vpack.c.bf16 %v2296, %v2295
      %v2335 = vpack.c.bf16 %v2298, %v2297
      %v2336 = vpack.c.bf16 %v2300, %v2299
      %v2337 = vpack.c.bf16 %v2302, %v2301
      %v2338 = vpack.c.bf16 %v2304, %v2303
      %v2339 = vpack.c.bf16 %v2306, %v2305
      %v2340 = vpack.c.bf16 %v2308, %v2307
      %v2341 = vld [vmem:[%s7] sm:$0xf]
      %v2342 = vld [vmem:[%s7 + $0x4] sm:$0xf]
      %v2343 = vld [vmem:[%s7 + $0x8] sm:$0xf]
      %v2344 = vld [vmem:[%s7 + $0xc] sm:$0xf]
      %v2345 = vld [vmem:[%s7 + $0x10] sm:$0xf]
      %v2346 = vld [vmem:[%s7 + $0x14] sm:$0xf]
      %v2347 = vld [vmem:[%s7 + $0x18] sm:$0xf]
      %v2348 = vld [vmem:[%s7 + $0x1c] sm:$0xf]
      %v2349 = vld [vmem:[%s7 + $0x20] sm:$0xf]
      %v2350 = vld [vmem:[%s7 + $0x24] sm:$0xf]
      %v2351 = vld [vmem:[%s7 + $0x28] sm:$0xf]
      %v2352 = vld [vmem:[%s7 + $0x2c] sm:$0xf]
      %v2353 = vld [vmem:[%s7 + $0x30] sm:$0xf]
      %v2354 = vld [vmem:[%s7 + $0x34] sm:$0xf]
      %v2355 = vld [vmem:[%s7 + $0x38] sm:$0xf]
      %v2356 = vld [vmem:[%s7 + $0x3c] sm:$0xf]
      %v2373 = vunpack.c.l.b16 %v2341
      %v2374 = vunpack.c.l.b16 %v2342
      %v2375 = vunpack.c.l.b16 %v2343
      %v2376 = vunpack.c.l.b16 %v2344
      %v2377 = vunpack.c.l.b16 %v2345
      %v2378 = vunpack.c.l.b16 %v2346
      %v2379 = vunpack.c.l.b16 %v2347
      %v2380 = vunpack.c.l.b16 %v2348
      %v2381 = vunpack.c.l.b16 %v2349
      %v2382 = vunpack.c.l.b16 %v2350
      %v2383 = vunpack.c.l.b16 %v2351
      %v2384 = vunpack.c.l.b16 %v2352
      %v2385 = vunpack.c.l.b16 %v2353
      %v2386 = vunpack.c.l.b16 %v2354
      %v2387 = vunpack.c.l.b16 %v2355
      %v2388 = vunpack.c.l.b16 %v2356
      %v2389 = vpack.c.b16 %v2374, %v2373
      %v2390 = vpack.c.b16 %v2376, %v2375
      %v2391 = vpack.c.b16 %v2378, %v2377
      %v2392 = vpack.c.b16 %v2380, %v2379
      %v2393 = vpack.c.b16 %v2382, %v2381
      %v2394 = vpack.c.b16 %v2384, %v2383
      %v2395 = vpack.c.b16 %v2386, %v2385
      %v2396 = vpack.c.b16 %v2388, %v2387
      %2405 = vmatprep.subr.bf16.mxu0 0
      %2406 = vmatpush1.bf16.msra.mxu0 %v2389
      %2407 = vmatprep.subr.bf16.mxu0 0
      %2408 = vmatpush1.bf16.msra.mxu0 %v2390
      %2409 = vmatprep.subr.bf16.mxu0 0
      %2410 = vmatpush1.bf16.msra.mxu0 %v2391
      %2411 = vmatprep.subr.bf16.mxu0 0
      %2412 = vmatpush1.bf16.msra.mxu0 %v2392
      %2413 = vmatprep.subr.bf16.mxu0 0
      %2414 = vmatpush1.bf16.msra.mxu0 %v2393
      %2415 = vmatprep.subr.bf16.mxu0 0
      %2416 = vmatpush1.bf16.msra.mxu0 %v2394
      %2417 = vmatprep.subr.bf16.mxu0 0
      %2418 = vmatpush1.bf16.msra.mxu0 %v2395
      %2419 = vmatprep.subr.bf16.mxu0 0
      %2420 = vmatpush1.bf16.msra.mxu0 %v2396
      %2421 = vmatprep.subr.bf16.mxu0 0
      %2422 = vmatpush1.bf16.msra.mxu0 0
      %2423 = vmatprep.subr.bf16.mxu0 0
      %2424 = vmatpush1.bf16.msra.mxu0 0
      %2425 = vmatprep.subr.bf16.mxu0 0
      %2426 = vmatpush1.bf16.msra.mxu0 0
      %2427 = vmatprep.subr.bf16.mxu0 0
      %2428 = vmatpush1.bf16.msra.mxu0 0
      %2429 = vmatprep.subr.bf16.mxu0 0
      %2430 = vmatpush1.bf16.msra.mxu0 0
      %2431 = vmatprep.subr.bf16.mxu0 0
      %2432 = vmatpush1.bf16.msra.mxu0 0
      %2433 = vmatprep.subr.bf16.mxu0 0
      %2434 = vmatpush1.bf16.msra.mxu0 0
      %2435 = vmatprep.subr.bf16.mxu0 0
      %2436 = vmatpush1.bf16.msra.mxu0 0
      %2437 = vmatprep.mubr.bf16.mxu0 0
      %2438 = vmatmul.mubr.bf16.gmra.mrb[0].mxu0 %v2309
      %v2439 = vpop.f32.mrb[0].mxu0
      %v2440 = vadd.f32 0.0, %v2439
      %v2441 = vpop.f32.mrb[0].mxu0
      %v2442 = vpop.f32.mrb[0].mxu0
      %v2443 = vadd.f32 0.0, %v2442
      %v2444 = vpop.f32.mrb[0].mxu0
      %2445 = vmatprep.mubr.bf16.mxu0 0
      %2446 = vmatmul.mubr.bf16.gmra.mrb[0].mxu0 %v2310
      %v2447 = vpop.f32.mrb[0].mxu0
      %v2448 = vadd.f32 0.0, %v2447
      %v2449 = vpop.f32.mrb[0].mxu0
      %v2450 = vpop.f32.mrb[0].mxu0
      %v2451 = vadd.f32 0.0, %v2450
      %v2452 = vpop.f32.mrb[0].mxu0
      %2453 = vmatprep.mubr.bf16.mxu0 0
      %2454 = vmatmul.mubr.bf16.gmra.mrb[0].mxu0 %v2311
      %v2455 = vpop.f32.mrb[0].mxu0
      %v2456 = vadd.f32 0.0, %v2455
      %v2457 = vpop.f32.mrb[0].mxu0
      %v2458 = vpop.f32.mrb[0].mxu0
      %v2459 = vadd.f32 0.0, %v2458
      %v2460 = vpop.f32.mrb[0].mxu0
      %2461 = vmatprep.mubr.bf16.mxu0 0
      %2462 = vmatmul.mubr.bf16.gmra.mrb[0].mxu0 %v2312
      %v2463 = vpop.f32.mrb[0].mxu0
      %v2464 = vadd.f32 0.0, %v2463
      %v2465 = vpop.f32.mrb[0].mxu0
      %v2466 = vpop.f32.mrb[0].mxu0
      %v2467 = vadd.f32 0.0, %v2466
      %v2468 = vpop.f32.mrb[0].mxu0
      %2469 = vmatprep.mubr.bf16.mxu0 0
      %2470 = vmatmul.mubr.bf16.gmra.mrb[0].mxu0 %v2313
      %v2471 = vpop.f32.mrb[0].mxu0
      %v2472 = vadd.f32 0.0, %v2471
      %v2473 = vpop.f32.mrb[0].mxu0
      %v2474 = vpop.f32.mrb[0].mxu0
      %v2475 = vadd.f32 0.0, %v2474
      %v2476 = vpop.f32.mrb[0].mxu0
      %2477 = vmatprep.mubr.bf16.mxu0 0
      %2478 = vmatmul.mubr.bf16.gmra.mrb[0].mxu0 %v2314
      %v2479 = vpop.f32.mrb[0].mxu0
      %v2480 = vadd.f32 0.0, %v2479
      %v2481 = vpop.f32.mrb[0].mxu0
      %v2482 = vpop.f32.mrb[0].mxu0
      %v2483 = vadd.f32 0.0, %v2482
      %v2484 = vpop.f32.mrb[0].mxu0
      %2485 = vmatprep.mubr.bf16.mxu0 0
      %2486 = vmatmul.mubr.bf16.gmra.mrb[0].mxu0 %v2315
      %v2487 = vpop.f32.mrb[0].mxu0
      %v2488 = vadd.f32 0.0, %v2487
      %v2489 = vpop.f32.mrb[0].mxu0
      %v2490 = vpop.f32.mrb[0].mxu0
      %v2491 = vadd.f32 0.0, %v2490
      %v2492 = vpop.f32.mrb[0].mxu0
      %2493 = vmatprep.mubr.bf16.mxu0 0
      %2494 = vmatmul.mubr.bf16.gmra.mrb[0].mxu0 %v2316
      %v2495 = vpop.f32.mrb[0].mxu0
      %v2496 = vadd.f32 0.0, %v2495
      %v2497 = vpop.f32.mrb[0].mxu0
      %v2498 = vpop.f32.mrb[0].mxu0
      %v2499 = vadd.f32 0.0, %v2498
      %v2500 = vpop.f32.mrb[0].mxu0
      %2501 = vmatprep.mubr.bf16.mxu0 0
      %2502 = vmatmul.mubr.bf16.gmra.mrb[0].mxu0 %v2317
      %v2503 = vpop.f32.mrb[0].mxu0
      %v2504 = vadd.f32 0.0, %v2503
      %v2505 = vpop.f32.mrb[0].mxu0
      %v2506 = vpop.f32.mrb[0].mxu0
      %v2507 = vadd.f32 0.0, %v2506
      %v2508 = vpop.f32.mrb[0].mxu0
      %2509 = vmatprep.mubr.bf16.mxu0 0
      %2510 = vmatmul.mubr.bf16.gmra.mrb[0].mxu0 %v2318
      %v2511 = vpop.f32.mrb[0].mxu0
      %v2512 = vadd.f32 0.0, %v2511
      %v2513 = vpop.f32.mrb[0].mxu0
      %v2514 = vpop.f32.mrb[0].mxu0
      %v2515 = vadd.f32 0.0, %v2514
      %v2516 = vpop.f32.mrb[0].mxu0
      %2517 = vmatprep.mubr.bf16.mxu0 0
      %2518 = vmatmul.mubr.bf16.gmra.mrb[0].mxu0 %v2319
      %v2519 = vpop.f32.mrb[0].mxu0
      %v2520 = vadd.f32 0.0, %v2519
      %v2521 = vpop.f32.mrb[0].mxu0
      %v2522 = vpop.f32.mrb[0].mxu0
      %v2523 = vadd.f32 0.0, %v2522
      %v2524 = vpop.f32.mrb[0].mxu0
      %2525 = vmatprep.mubr.bf16.mxu0 0
      %2526 = vmatmul.mubr.bf16.gmra.mrb[0].mxu0 %v2320
      %v2527 = vpop.f32.mrb[0].mxu0
      %v2528 = vadd.f32 0.0, %v2527
      %v2529 = vpop.f32.mrb[0].mxu0
      %v2530 = vpop.f32.mrb[0].mxu0
      %v2531 = vadd.f32 0.0, %v2530
      %v2532 = vpop.f32.mrb[0].mxu0
      %2533 = vmatprep.mubr.bf16.mxu0 0
      %2534 = vmatmul.mubr.bf16.gmra.mrb[0].mxu0 %v2321
      %v2535 = vpop.f32.mrb[0].mxu0
      %v2536 = vadd.f32 0.0, %v2535
      %v2537 = vpop.f32.mrb[0].mxu0
      %v2538 = vpop.f32.mrb[0].mxu0
      %v2539 = vadd.f32 0.0, %v2538
      %v2540 = vpop.f32.mrb[0].mxu0
      %2541 = vmatprep.mubr.bf16.mxu0 0
      %2542 = vmatmul.mubr.bf16.gmra.mrb[0].mxu0 %v2322
      %v2543 = vpop.f32.mrb[0].mxu0
      %v2544 = vadd.f32 0.0, %v2543
      %v2545 = vpop.f32.mrb[0].mxu0
      %v2546 = vpop.f32.mrb[0].mxu0
      %v2547 = vadd.f32 0.0, %v2546
      %v2548 = vpop.f32.mrb[0].mxu0
      %2549 = vmatprep.mubr.bf16.mxu0 0
      %2550 = vmatmul.mubr.bf16.gmra.mrb[0].mxu0 %v2323
      %v2551 = vpop.f32.mrb[0].mxu0
      %v2552 = vadd.f32 0.0, %v2551
      %v2553 = vpop.f32.mrb[0].mxu0
      %v2554 = vpop.f32.mrb[0].mxu0
      %v2555 = vadd.f32 0.0, %v2554
      %v2556 = vpop.f32.mrb[0].mxu0
      %2557 = vmatprep.mubr.bf16.mxu0 0
      %2558 = vmatmul.mubr.bf16.gmra.mrb[0].mxu0 %v2324
      %v2559 = vpop.f32.mrb[0].mxu0
      %v2560 = vadd.f32 0.0, %v2559
      %v2561 = vpop.f32.mrb[0].mxu0
      %v2562 = vpop.f32.mrb[0].mxu0
      %v2563 = vadd.f32 0.0, %v2562
      %v2564 = vpop.f32.mrb[0].mxu0
      %2565 = vmatprep.mubr.bf16.mxu0 0
      %2566 = vmatmul.mubr.bf16.gmra.mrb[0].mxu0 %v2325
      %v2567 = vpop.f32.mrb[0].mxu0
      %v2568 = vadd.f32 0.0, %v2567
      %v2569 = vpop.f32.mrb[0].mxu0
      %v2570 = vpop.f32.mrb[0].mxu0
      %v2571 = vadd.f32 0.0, %v2570
      %v2572 = vpop.f32.mrb[0].mxu0
      %2573 = vmatprep.mubr.bf16.mxu0 0
      %2574 = vmatmul.mubr.bf16.gmra.mrb[0].mxu0 %v2326
      %v2575 = vpop.f32.mrb[0].mxu0
      %v2576 = vadd.f32 0.0, %v2575
      %v2577 = vpop.f32.mrb[0].mxu0
      %v2578 = vpop.f32.mrb[0].mxu0
      %v2579 = vadd.f32 0.0, %v2578
      %v2580 = vpop.f32.mrb[0].mxu0
      %2581 = vmatprep.mubr.bf16.mxu0 0
      %2582 = vmatmul.mubr.bf16.gmra.mrb[0].mxu0 %v2327
      %v2583 = vpop.f32.mrb[0].mxu0
      %v2584 = vadd.f32 0.0, %v2583
      %v2585 = vpop.f32.mrb[0].mxu0
      %v2586 = vpop.f32.mrb[0].mxu0
      %v2587 = vadd.f32 0.0, %v2586
      %v2588 = vpop.f32.mrb[0].mxu0
      %2589 = vmatprep.mubr.bf16.mxu0 0
      %2590 = vmatmul.mubr.bf16.gmra.mrb[0].mxu0 %v2328
      %v2591 = vpop.f32.mrb[0].mxu0
      %v2592 = vadd.f32 0.0, %v2591
      %v2593 = vpop.f32.mrb[0].mxu0
      %v2594 = vpop.f32.mrb[0].mxu0
      %v2595 = vadd.f32 0.0, %v2594
      %v2596 = vpop.f32.mrb[0].mxu0
      %2597 = vmatprep.mubr.bf16.mxu0 0
      %2598 = vmatmul.mubr.bf16.gmra.mrb[0].mxu0 %v2329
      %v2599 = vpop.f32.mrb[0].mxu0
      %v2600 = vadd.f32 0.0, %v2599
      %v2601 = vpop.f32.mrb[0].mxu0
      %v2602 = vpop.f32.mrb[0].mxu0
      %v2603 = vadd.f32 0.0, %v2602
      %v2604 = vpop.f32.mrb[0].mxu0
      %2605 = vmatprep.mubr.bf16.mxu0 0
      %2606 = vmatmul.mubr.bf16.gmra.mrb[0].mxu0 %v2330
      %v2607 = vpop.f32.mrb[0].mxu0
      %v2608 = vadd.f32 0.0, %v2607
      %v2609 = vpop.f32.mrb[0].mxu0
      %v2610 = vpop.f32.mrb[0].mxu0
      %v2611 = vadd.f32 0.0, %v2610
      %v2612 = vpop.f32.mrb[0].mxu0
      %2613 = vmatprep.mubr.bf16.mxu0 0
      %2614 = vmatmul.mubr.bf16.gmra.mrb[0].mxu0 %v2331
      %v2615 = vpop.f32.mrb[0].mxu0
      %v2616 = vadd.f32 0.0, %v2615
      %v2617 = vpop.f32.mrb[0].mxu0
      %v2618 = vpop.f32.mrb[0].mxu0
      %v2619 = vadd.f32 0.0, %v2618
      %v2620 = vpop.f32.mrb[0].mxu0
      %2621 = vmatprep.mubr.bf16.mxu0 0
      %2622 = vmatmul.mubr.bf16.gmra.mrb[0].mxu0 %v2332
      %v2623 = vpop.f32.mrb[0].mxu0
      %v2624 = vadd.f32 0.0, %v2623
      %v2625 = vpop.f32.mrb[0].mxu0
      %v2626 = vpop.f32.mrb[0].mxu0
      %v2627 = vadd.f32 0.0, %v2626
      %v2628 = vpop.f32.mrb[0].mxu0
      %2629 = vmatprep.mubr.bf16.mxu0 0
      %2630 = vmatmul.mubr.bf16.gmra.mrb[0].mxu0 %v2333
      %v2631 = vpop.f32.mrb[0].mxu0
      %v2632 = vadd.f32 0.0, %v2631
      %v2633 = vpop.f32.mrb[0].mxu0
      %v2634 = vpop.f32.mrb[0].mxu0
      %v2635 = vadd.f32 0.0, %v2634
      %v2636 = vpop.f32.mrb[0].mxu0
      %2637 = vmatprep.mubr.bf16.mxu0 0
      %2638 = vmatmul.mubr.bf16.gmra.mrb[0].mxu0 %v2334
      %v2639 = vpop.f32.mrb[0].mxu0
      %v2640 = vadd.f32 0.0, %v2639
      %v2641 = vpop.f32.mrb[0].mxu0
      %v2642 = vpop.f32.mrb[0].mxu0
      %v2643 = vadd.f32 0.0, %v2642
      %v2644 = vpop.f32.mrb[0].mxu0
      %2645 = vmatprep.mubr.bf16.mxu0 0
      %2646 = vmatmul.mubr.bf16.gmra.mrb[0].mxu0 %v2335
      %v2647 = vpop.f32.mrb[0].mxu0
      %v2648 = vadd.f32 0.0, %v2647
      %v2649 = vpop.f32.mrb[0].mxu0
      %v2650 = vpop.f32.mrb[0].mxu0
      %v2651 = vadd.f32 0.0, %v2650
      %v2652 = vpop.f32.mrb[0].mxu0
      %2653 = vmatprep.mubr.bf16.mxu0 0
      %2654 = vmatmul.mubr.bf16.gmra.mrb[0].mxu0 %v2336
      %v2655 = vpop.f32.mrb[0].mxu0
      %v2656 = vadd.f32 0.0, %v2655
      %v2657 = vpop.f32.mrb[0].mxu0
      %v2658 = vpop.f32.mrb[0].mxu0
      %v2659 = vadd.f32 0.0, %v2658
      %v2660 = vpop.f32.mrb[0].mxu0
      %2661 = vmatprep.mubr.bf16.mxu0 0
      %2662 = vmatmul.mubr.bf16.gmra.mrb[0].mxu0 %v2337
      %v2663 = vpop.f32.mrb[0].mxu0
      %v2664 = vadd.f32 0.0, %v2663
      %v2665 = vpop.f32.mrb[0].mxu0
      %v2666 = vpop.f32.mrb[0].mxu0
      %v2667 = vadd.f32 0.0, %v2666
      %v2668 = vpop.f32.mrb[0].mxu0
      %2669 = vmatprep.mubr.bf16.mxu0 0
      %2670 = vmatmul.mubr.bf16.gmra.mrb[0].mxu0 %v2338
      %v2671 = vpop.f32.mrb[0].mxu0
      %v2672 = vadd.f32 0.0, %v2671
      %v2673 = vpop.f32.mrb[0].mxu0
      %v2674 = vpop.f32.mrb[0].mxu0
      %v2675 = vadd.f32 0.0, %v2674
      %v2676 = vpop.f32.mrb[0].mxu0
      %2677 = vmatprep.mubr.bf16.mxu0 0
      %2678 = vmatmul.mubr.bf16.gmra.mrb[0].mxu0 %v2339
      %v2679 = vpop.f32.mrb[0].mxu0
      %v2680 = vadd.f32 0.0, %v2679
      %v2681 = vpop.f32.mrb[0].mxu0
      %v2682 = vpop.f32.mrb[0].mxu0
      %v2683 = vadd.f32 0.0, %v2682
      %v2684 = vpop.f32.mrb[0].mxu0
      %2685 = vmatprep.mubr.bf16.mxu0 0
      %2686 = vmatmul.mubr.bf16.gmra.mrb[0].mxu0 %v2340
      %v2687 = vpop.f32.mrb[0].mxu0
      %v2688 = vadd.f32 0.0, %v2687
      %v2689 = vpop.f32.mrb[0].mxu0
      %v2690 = vpop.f32.mrb[0].mxu0
      %v2691 = vadd.f32 0.0, %v2690
      %v2692 = vpop.f32.mrb[0].mxu0
      %2693 = vdwg.mxu0
      %s2694 = sld [smem:[#allocation2]]
      %v2695 = vstv %s2694
      %v2696 = vadd.f32 %v2440, %v2695
      %v2697 = vadd.f32 %v2443, %v2695
      %v2698 = vadd.f32 %v2448, %v2695
      %v2699 = vadd.f32 %v2451, %v2695
      %v2700 = vadd.f32 %v2456, %v2695
      %v2701 = vadd.f32 %v2459, %v2695
      %v2702 = vadd.f32 %v2464, %v2695
      %v2703 = vadd.f32 %v2467, %v2695
      %v2704 = vadd.f32 %v2472, %v2695
      %v2705 = vadd.f32 %v2475, %v2695
      %v2706 = vadd.f32 %v2480, %v2695
      %v2707 = vadd.f32 %v2483, %v2695
      %v2708 = vadd.f32 %v2488, %v2695
      %v2709 = vadd.f32 %v2491, %v2695
      %v2710 = vadd.f32 %v2496, %v2695
      %v2711 = vadd.f32 %v2499, %v2695
      %v2712 = vadd.f32 %v2504, %v2695
      %v2713 = vadd.f32 %v2507, %v2695
      %v2714 = vadd.f32 %v2512, %v2695
      %v2715 = vadd.f32 %v2515, %v2695
      %v2716 = vadd.f32 %v2520, %v2695
      %v2717 = vadd.f32 %v2523, %v2695
      %v2718 = vadd.f32 %v2528, %v2695
      %v2719 = vadd.f32 %v2531, %v2695
      %v2720 = vadd.f32 %v2536, %v2695
      %v2721 = vadd.f32 %v2539, %v2695
      %v2722 = vadd.f32 %v2544, %v2695
      %v2723 = vadd.f32 %v2547, %v2695
      %v2724 = vadd.f32 %v2552, %v2695
      %v2725 = vadd.f32 %v2555, %v2695
      %v2726 = vadd.f32 %v2560, %v2695
      %v2727 = vadd.f32 %v2563, %v2695
      %v2728 = vadd.f32 %v2568, %v2695
      %v2729 = vadd.f32 %v2571, %v2695
      %v2730 = vadd.f32 %v2576, %v2695
      %v2731 = vadd.f32 %v2579, %v2695
      %v2732 = vadd.f32 %v2584, %v2695
      %v2733 = vadd.f32 %v2587, %v2695
      %v2734 = vadd.f32 %v2592, %v2695
      %v2735 = vadd.f32 %v2595, %v2695
      %v2736 = vadd.f32 %v2600, %v2695
      %v2737 = vadd.f32 %v2603, %v2695
      %v2738 = vadd.f32 %v2608, %v2695
      %v2739 = vadd.f32 %v2611, %v2695
      %v2740 = vadd.f32 %v2616, %v2695
      %v2741 = vadd.f32 %v2619, %v2695
      %v2742 = vadd.f32 %v2624, %v2695
      %v2743 = vadd.f32 %v2627, %v2695
      %v2744 = vadd.f32 %v2632, %v2695
      %v2745 = vadd.f32 %v2635, %v2695
      %v2746 = vadd.f32 %v2640, %v2695
      %v2747 = vadd.f32 %v2643, %v2695
      %v2748 = vadd.f32 %v2648, %v2695
      %v2749 = vadd.f32 %v2651, %v2695
      %v2750 = vadd.f32 %v2656, %v2695
      %v2751 = vadd.f32 %v2659, %v2695
      %v2752 = vadd.f32 %v2664, %v2695
      %v2753 = vadd.f32 %v2667, %v2695
      %v2754 = vadd.f32 %v2672, %v2695
      %v2755 = vadd.f32 %v2675, %v2695
      %v2756 = vadd.f32 %v2680, %v2695
      %v2757 = vadd.f32 %v2683, %v2695
      %v2758 = vadd.f32 %v2688, %v2695
      %v2759 = vadd.f32 %v2691, %v2695
      %v2760 = vsub.f32 0.0, %v2696
      %v2761 = vsub.f32 0.0, %v2697
      %v2762 = vsub.f32 0.0, %v2698
      %v2763 = vsub.f32 0.0, %v2699
      %v2764 = vsub.f32 0.0, %v2700
      %v2765 = vsub.f32 0.0, %v2701
      %v2766 = vsub.f32 0.0, %v2702
      %v2767 = vsub.f32 0.0, %v2703
      %v2768 = vsub.f32 0.0, %v2704
      %v2769 = vsub.f32 0.0, %v2705
      %v2770 = vsub.f32 0.0, %v2706
      %v2771 = vsub.f32 0.0, %v2707
      %v2772 = vsub.f32 0.0, %v2708
      %v2773 = vsub.f32 0.0, %v2709
      %v2774 = vsub.f32 0.0, %v2710
      %v2775 = vsub.f32 0.0, %v2711
      %v2776 = vsub.f32 0.0, %v2712
      %v2777 = vsub.f32 0.0, %v2713
      %v2778 = vsub.f32 0.0, %v2714
      %v2779 = vsub.f32 0.0, %v2715
      %v2780 = vsub.f32 0.0, %v2716
      %v2781 = vsub.f32 0.0, %v2717
      %v2782 = vsub.f32 0.0, %v2718
      %v2783 = vsub.f32 0.0, %v2719
      %v2784 = vsub.f32 0.0, %v2720
      %v2785 = vsub.f32 0.0, %v2721
      %v2786 = vsub.f32 0.0, %v2722
      %v2787 = vsub.f32 0.0, %v2723
      %v2788 = vsub.f32 0.0, %v2724
      %v2789 = vsub.f32 0.0, %v2725
      %v2790 = vsub.f32 0.0, %v2726
      %v2791 = vsub.f32 0.0, %v2727
      %v2792 = vsub.f32 0.0, %v2728
      %v2793 = vsub.f32 0.0, %v2729
      %v2794 = vsub.f32 0.0, %v2730
      %v2795 = vsub.f32 0.0, %v2731
      %v2796 = vsub.f32 0.0, %v2732
      %v2797 = vsub.f32 0.0, %v2733
      %v2798 = vsub.f32 0.0, %v2734
      %v2799 = vsub.f32 0.0, %v2735
      %v2800 = vsub.f32 0.0, %v2736
      %v2801 = vsub.f32 0.0, %v2737
      %v2802 = vsub.f32 0.0, %v2738
      %v2803 = vsub.f32 0.0, %v2739
      %v2804 = vsub.f32 0.0, %v2740
      %v2805 = vsub.f32 0.0, %v2741
      %v2806 = vsub.f32 0.0, %v2742
      %v2807 = vsub.f32 0.0, %v2743
      %v2808 = vsub.f32 0.0, %v2744
      %v2809 = vsub.f32 0.0, %v2745
      %v2810 = vsub.f32 0.0, %v2746
      %v2811 = vsub.f32 0.0, %v2747
      %v2812 = vsub.f32 0.0, %v2748
      %v2813 = vsub.f32 0.0, %v2749
      %v2814 = vsub.f32 0.0, %v2750
      %v2815 = vsub.f32 0.0, %v2751
      %v2816 = vsub.f32 0.0, %v2752
      %v2817 = vsub.f32 0.0, %v2753
      %v2818 = vsub.f32 0.0, %v2754
      %v2819 = vsub.f32 0.0, %v2755
      %v2820 = vsub.f32 0.0, %v2756
      %v2821 = vsub.f32 0.0, %v2757
      %v2822 = vsub.f32 0.0, %v2758
      %v2823 = vsub.f32 0.0, %v2759
      %v2824 = vmul.f32 %v2760, 1.442695
      %v2825 = vpow.pop %v2824
      %v2826 = vmul.f32 %v2761, 1.442695
      %v2827 = vpow.pop %v2826
      %v2828 = vmul.f32 %v2762, 1.442695
      %v2829 = vpow.pop %v2828
      %v2830 = vmul.f32 %v2763, 1.442695
      %v2831 = vpow.pop %v2830
      %v2832 = vmul.f32 %v2764, 1.442695
      %v2833 = vpow.pop %v2832
      %v2834 = vmul.f32 %v2765, 1.442695
      %v2835 = vpow.pop %v2834
      %v2836 = vmul.f32 %v2766, 1.442695
      %v2837 = vpow.pop %v2836
      %v2838 = vmul.f32 %v2767, 1.442695
      %v2839 = vpow.pop %v2838
      %v2840 = vmul.f32 %v2768, 1.442695
      %v2841 = vpow.pop %v2840
      %v2842 = vmul.f32 %v2769, 1.442695
      %v2843 = vpow.pop %v2842
      %v2844 = vmul.f32 %v2770, 1.442695
      %v2845 = vpow.pop %v2844
      %v2846 = vmul.f32 %v2771, 1.442695
      %v2847 = vpow.pop %v2846
      %v2848 = vmul.f32 %v2772, 1.442695
      %v2849 = vpow.pop %v2848
      %v2850 = vmul.f32 %v2773, 1.442695
      %v2851 = vpow.pop %v2850
      %v2852 = vmul.f32 %v2774, 1.442695
      %v2853 = vpow.pop %v2852
      %v2854 = vmul.f32 %v2775, 1.442695
      %v2855 = vpow.pop %v2854
      %v2856 = vmul.f32 %v2776, 1.442695
      %v2857 = vpow.pop %v2856
      %v2858 = vmul.f32 %v2777, 1.442695
      %v2859 = vpow.pop %v2858
      %v2860 = vmul.f32 %v2778, 1.442695
      %v2861 = vpow.pop %v2860
      %v2862 = vmul.f32 %v2779, 1.442695
      %v2863 = vpow.pop %v2862
      %v2864 = vmul.f32 %v2780, 1.442695
      %v2865 = vpow.pop %v2864
      %v2866 = vmul.f32 %v2781, 1.442695
      %v2867 = vpow.pop %v2866
      %v2868 = vmul.f32 %v2782, 1.442695
      %v2869 = vpow.pop %v2868
      %v2870 = vmul.f32 %v2783, 1.442695
      %v2871 = vpow.pop %v2870
      %v2872 = vmul.f32 %v2784, 1.442695
      %v2873 = vpow.pop %v2872
      %v2874 = vmul.f32 %v2785, 1.442695
      %v2875 = vpow.pop %v2874
      %v2876 = vmul.f32 %v2786, 1.442695
      %v2877 = vpow.pop %v2876
      %v2878 = vmul.f32 %v2787, 1.442695
      %v2879 = vpow.pop %v2878
      %v2880 = vmul.f32 %v2788, 1.442695
      %v2881 = vpow.pop %v2880
      %v2882 = vmul.f32 %v2789, 1.442695
      %v2883 = vpow.pop %v2882
      %v2884 = vmul.f32 %v2790, 1.442695
      %v2885 = vpow.pop %v2884
      %v2886 = vmul.f32 %v2791, 1.442695
      %v2887 = vpow.pop %v2886
      %v2888 = vmul.f32 %v2792, 1.442695
      %v2889 = vpow.pop %v2888
      %v2890 = vmul.f32 %v2793, 1.442695
      %v2891 = vpow.pop %v2890
      %v2892 = vmul.f32 %v2794, 1.442695
      %v2893 = vpow.pop %v2892
      %v2894 = vmul.f32 %v2795, 1.442695
      %v2895 = vpow.pop %v2894
      %v2896 = vmul.f32 %v2796, 1.442695
      %v2897 = vpow.pop %v2896
      %v2898 = vmul.f32 %v2797, 1.442695
      %v2899 = vpow.pop %v2898
      %v2900 = vmul.f32 %v2798, 1.442695
      %v2901 = vpow.pop %v2900
      %v2902 = vmul.f32 %v2799, 1.442695
      %v2903 = vpow.pop %v2902
      %v2904 = vmul.f32 %v2800, 1.442695
      %v2905 = vpow.pop %v2904
      %v2906 = vmul.f32 %v2801, 1.442695
      %v2907 = vpow.pop %v2906
      %v2908 = vmul.f32 %v2802, 1.442695
      %v2909 = vpow.pop %v2908
      %v2910 = vmul.f32 %v2803, 1.442695
      %v2911 = vpow.pop %v2910
      %v2912 = vmul.f32 %v2804, 1.442695
      %v2913 = vpow.pop %v2912
      %v2914 = vmul.f32 %v2805, 1.442695
      %v2915 = vpow.pop %v2914
      %v2916 = vmul.f32 %v2806, 1.442695
      %v2917 = vpow.pop %v2916
      %v2918 = vmul.f32 %v2807, 1.442695
      %v2919 = vpow.pop %v2918
      %v2920 = vmul.f32 %v2808, 1.442695
      %v2921 = vpow.pop %v2920
      %v2922 = vmul.f32 %v2809, 1.442695
      %v2923 = vpow.pop %v2922
      %v2924 = vmul.f32 %v2810, 1.442695
      %v2925 = vpow.pop %v2924
      %v2926 = vmul.f32 %v2811, 1.442695
      %v2927 = vpow.pop %v2926
      %v2928 = vmul.f32 %v2812, 1.442695
      %v2929 = vpow.pop %v2928
      %v2930 = vmul.f32 %v2813, 1.442695
      %v2931 = vpow.pop %v2930
      %v2932 = vmul.f32 %v2814, 1.442695
      %v2933 = vpow.pop %v2932
      %v2934 = vmul.f32 %v2815, 1.442695
      %v2935 = vpow.pop %v2934
      %v2936 = vmul.f32 %v2816, 1.442695
      %v2937 = vpow.pop %v2936
      %v2938 = vmul.f32 %v2817, 1.442695
      %v2939 = vpow.pop %v2938
      %v2940 = vmul.f32 %v2818, 1.442695
      %v2941 = vpow.pop %v2940
      %v2942 = vmul.f32 %v2819, 1.442695
      %v2943 = vpow.pop %v2942
      %v2944 = vmul.f32 %v2820, 1.442695
      %v2945 = vpow.pop %v2944
      %v2946 = vmul.f32 %v2821, 1.442695
      %v2947 = vpow.pop %v2946
      %v2948 = vmul.f32 %v2822, 1.442695
      %v2949 = vpow.pop %v2948
      %v2950 = vmul.f32 %v2823, 1.442695
      %v2951 = vpow.pop %v2950
      %v2952 = vadd.f32 %v2825, 1.0
      %v2953 = vadd.f32 %v2827, 1.0
      %v2954 = vadd.f32 %v2829, 1.0
      %v2955 = vadd.f32 %v2831, 1.0
      %v2956 = vadd.f32 %v2833, 1.0
      %v2957 = vadd.f32 %v2835, 1.0
      %v2958 = vadd.f32 %v2837, 1.0
      %v2959 = vadd.f32 %v2839, 1.0
      %v2960 = vadd.f32 %v2841, 1.0
      %v2961 = vadd.f32 %v2843, 1.0
      %v2962 = vadd.f32 %v2845, 1.0
      %v2963 = vadd.f32 %v2847, 1.0
      %v2964 = vadd.f32 %v2849, 1.0
      %v2965 = vadd.f32 %v2851, 1.0
      %v2966 = vadd.f32 %v2853, 1.0
      %v2967 = vadd.f32 %v2855, 1.0
      %v2968 = vadd.f32 %v2857, 1.0
      %v2969 = vadd.f32 %v2859, 1.0
      %v2970 = vadd.f32 %v2861, 1.0
      %v2971 = vadd.f32 %v2863, 1.0
      %v2972 = vadd.f32 %v2865, 1.0
      %v2973 = vadd.f32 %v2867, 1.0
      %v2974 = vadd.f32 %v2869, 1.0
      %v2975 = vadd.f32 %v2871, 1.0
      %v2976 = vadd.f32 %v2873, 1.0
      %v2977 = vadd.f32 %v2875, 1.0
      %v2978 = vadd.f32 %v2877, 1.0
      %v2979 = vadd.f32 %v2879, 1.0
      %v2980 = vadd.f32 %v2881, 1.0
      %v2981 = vadd.f32 %v2883, 1.0
      %v2982 = vadd.f32 %v2885, 1.0
      %v2983 = vadd.f32 %v2887, 1.0
      %v2984 = vadd.f32 %v2889, 1.0
      %v2985 = vadd.f32 %v2891, 1.0
      %v2986 = vadd.f32 %v2893, 1.0
      %v2987 = vadd.f32 %v2895, 1.0
      %v2988 = vadd.f32 %v2897, 1.0
      %v2989 = vadd.f32 %v2899, 1.0
      %v2990 = vadd.f32 %v2901, 1.0
      %v2991 = vadd.f32 %v2903, 1.0
      %v2992 = vadd.f32 %v2905, 1.0
      %v2993 = vadd.f32 %v2907, 1.0
      %v2994 = vadd.f32 %v2909, 1.0
      %v2995 = vadd.f32 %v2911, 1.0
      %v2996 = vadd.f32 %v2913, 1.0
      %v2997 = vadd.f32 %v2915, 1.0
      %v2998 = vadd.f32 %v2917, 1.0
      %v2999 = vadd.f32 %v2919, 1.0
      %v3000 = vadd.f32 %v2921, 1.0
      %v3001 = vadd.f32 %v2923, 1.0
      %v3002 = vadd.f32 %v2925, 1.0
      %v3003 = vadd.f32 %v2927, 1.0
      %v3004 = vadd.f32 %v2929, 1.0
      %v3005 = vadd.f32 %v2931, 1.0
      %v3006 = vadd.f32 %v2933, 1.0
      %v3007 = vadd.f32 %v2935, 1.0
      %v3008 = vadd.f32 %v2937, 1.0
      %v3009 = vadd.f32 %v2939, 1.0
      %v3010 = vadd.f32 %v2941, 1.0
      %v3011 = vadd.f32 %v2943, 1.0
      %v3012 = vadd.f32 %v2945, 1.0
      %v3013 = vadd.f32 %v2947, 1.0
      %v3014 = vadd.f32 %v2949, 1.0
      %v3015 = vadd.f32 %v2951, 1.0
      %v3016 = vrcp.pop %v2952
      %v3017 = vrcp.pop %v2953
      %v3018 = vrcp.pop %v2954
      %v3019 = vrcp.pop %v2955
      %v3020 = vrcp.pop %v2956
      %v3021 = vrcp.pop %v2957
      %v3022 = vrcp.pop %v2958
      %v3023 = vrcp.pop %v2959
      %v3024 = vrcp.pop %v2960
      %v3025 = vrcp.pop %v2961
      %v3026 = vrcp.pop %v2962
      %v3027 = vrcp.pop %v2963
      %v3028 = vrcp.pop %v2964
      %v3029 = vrcp.pop %v2965
      %v3030 = vrcp.pop %v2966
      %v3031 = vrcp.pop %v2967
      %v3032 = vrcp.pop %v2968
      %v3033 = vrcp.pop %v2969
      %v3034 = vrcp.pop %v2970
      %v3035 = vrcp.pop %v2971
      %v3036 = vrcp.pop %v2972
      %v3037 = vrcp.pop %v2973
      %v3038 = vrcp.pop %v2974
      %v3039 = vrcp.pop %v2975
      %v3040 = vrcp.pop %v2976
      %v3041 = vrcp.pop %v2977
      %v3042 = vrcp.pop %v2978
      %v3043 = vrcp.pop %v2979
      %v3044 = vrcp.pop %v2980
      %v3045 = vrcp.pop %v2981
      %v3046 = vrcp.pop %v2982
      %v3047 = vrcp.pop %v2983
      %v3048 = vrcp.pop %v2984
      %v3049 = vrcp.pop %v2985
      %v3050 = vrcp.pop %v2986
      %v3051 = vrcp.pop %v2987
      %v3052 = vrcp.pop %v2988
      %v3053 = vrcp.pop %v2989
      %v3054 = vrcp.pop %v2990
      %v3055 = vrcp.pop %v2991
      %v3056 = vrcp.pop %v2992
      %v3057 = vrcp.pop %v2993
      %v3058 = vrcp.pop %v2994
      %v3059 = vrcp.pop %v2995
      %v3060 = vrcp.pop %v2996
      %v3061 = vrcp.pop %v2997
      %v3062 = vrcp.pop %v2998
      %v3063 = vrcp.pop %v2999
      %v3064 = vrcp.pop %v3000
      %v3065 = vrcp.pop %v3001
      %v3066 = vrcp.pop %v3002
      %v3067 = vrcp.pop %v3003
      %v3068 = vrcp.pop %v3004
      %v3069 = vrcp.pop %v3005
      %v3070 = vrcp.pop %v3006
      %v3071 = vrcp.pop %v3007
      %v3072 = vrcp.pop %v3008
      %v3073 = vrcp.pop %v3009
      %v3074 = vrcp.pop %v3010
      %v3075 = vrcp.pop %v3011
      %v3076 = vrcp.pop %v3012
      %v3077 = vrcp.pop %v3013
      %v3078 = vrcp.pop %v3014
      %v3079 = vrcp.pop %v3015
      %vm3080 = vcmask 7168
      %3081 = vst.msk [vmem:[%s363] sm:$0xff] %vm3080, %v3016
      %3082 = vst.msk [vmem:[%s363 + $0x8] sm:$0xff] %vm3080, %v3017
      %3083 = vst.msk [vmem:[%s363 + $0x10] sm:$0xff] %vm3080, %v3018
      %3084 = vst.msk [vmem:[%s363 + $0x18] sm:$0xff] %vm3080, %v3019
      %3085 = vst.msk [vmem:[%s363 + $0x20] sm:$0xff] %vm3080, %v3020
      %3086 = vst.msk [vmem:[%s363 + $0x28] sm:$0xff] %vm3080, %v3021
      %3087 = vst.msk [vmem:[%s363 + $0x30] sm:$0xff] %vm3080, %v3022
      %3088 = vst.msk [vmem:[%s363 + $0x38] sm:$0xff] %vm3080, %v3023
      %3089 = vst.msk [vmem:[%s363 + $0x40] sm:$0xff] %vm3080, %v3024
      %3090 = vst.msk [vmem:[%s363 + $0x48] sm:$0xff] %vm3080, %v3025
      %3091 = vst.msk [vmem:[%s363 + $0x50] sm:$0xff] %vm3080, %v3026
      %3092 = vst.msk [vmem:[%s363 + $0x58] sm:$0xff] %vm3080, %v3027
      %3093 = vst.msk [vmem:[%s363 + $0x60] sm:$0xff] %vm3080, %v3028
      %3094 = vst.msk [vmem:[%s363 + $0x68] sm:$0xff] %vm3080, %v3029
      %3095 = vst.msk [vmem:[%s363 + $0x70] sm:$0xff] %vm3080, %v3030
      %3096 = vst.msk [vmem:[%s363 + $0x78] sm:$0xff] %vm3080, %v3031
      %3097 = vst.msk [vmem:[%s363 + $0x80] sm:$0xff] %vm3080, %v3032
      %3098 = vst.msk [vmem:[%s363 + $0x88] sm:$0xff] %vm3080, %v3033
      %3099 = vst.msk [vmem:[%s363 + $0x90] sm:$0xff] %vm3080, %v3034
      %3100 = vst.msk [vmem:[%s363 + $0x98] sm:$0xff] %vm3080, %v3035
      %3101 = vst.msk [vmem:[%s363 + $0xa0] sm:$0xff] %vm3080, %v3036
      %3102 = vst.msk [vmem:[%s363 + $0xa8] sm:$0xff] %vm3080, %v3037
      %3103 = vst.msk [vmem:[%s363 + $0xb0] sm:$0xff] %vm3080, %v3038
      %3104 = vst.msk [vmem:[%s363 + $0xb8] sm:$0xff] %vm3080, %v3039
      %3105 = vst.msk [vmem:[%s363 + $0xc0] sm:$0xff] %vm3080, %v3040
      %3106 = vst.msk [vmem:[%s363 + $0xc8] sm:$0xff] %vm3080, %v3041
      %3107 = vst.msk [vmem:[%s363 + $0xd0] sm:$0xff] %vm3080, %v3042
      %3108 = vst.msk [vmem:[%s363 + $0xd8] sm:$0xff] %vm3080, %v3043
      %3109 = vst.msk [vmem:[%s363 + $0xe0] sm:$0xff] %vm3080, %v3044
      %3110 = vst.msk [vmem:[%s363 + $0xe8] sm:$0xff] %vm3080, %v3045
      %3111 = vst.msk [vmem:[%s363 + $0xf0] sm:$0xff] %vm3080, %v3046
      %3112 = vst.msk [vmem:[%s363 + $0xf8] sm:$0xff] %vm3080, %v3047
      %3113 = vst.msk [vmem:[%s363 + $0x100] sm:$0xff] %vm3080, %v3048
      %3114 = vst.msk [vmem:[%s363 + $0x108] sm:$0xff] %vm3080, %v3049
      %3115 = vst.msk [vmem:[%s363 + $0x110] sm:$0xff] %vm3080, %v3050
      %3116 = vst.msk [vmem:[%s363 + $0x118] sm:$0xff] %vm3080, %v3051
      %3117 = vst.msk [vmem:[%s363 + $0x120] sm:$0xff] %vm3080, %v3052
      %3118 = vst.msk [vmem:[%s363 + $0x128] sm:$0xff] %vm3080, %v3053
      %3119 = vst.msk [vmem:[%s363 + $0x130] sm:$0xff] %vm3080, %v3054
      %3120 = vst.msk [vmem:[%s363 + $0x138] sm:$0xff] %vm3080, %v3055
      %3121 = vst.msk [vmem:[%s363 + $0x140] sm:$0xff] %vm3080, %v3056
      %3122 = vst.msk [vmem:[%s363 + $0x148] sm:$0xff] %vm3080, %v3057
      %3123 = vst.msk [vmem:[%s363 + $0x150] sm:$0xff] %vm3080, %v3058
      %3124 = vst.msk [vmem:[%s363 + $0x158] sm:$0xff] %vm3080, %v3059
      %3125 = vst.msk [vmem:[%s363 + $0x160] sm:$0xff] %vm3080, %v3060
      %3126 = vst.msk [vmem:[%s363 + $0x168] sm:$0xff] %vm3080, %v3061
      %3127 = vst.msk [vmem:[%s363 + $0x170] sm:$0xff] %vm3080, %v3062
      %3128 = vst.msk [vmem:[%s363 + $0x178] sm:$0xff] %vm3080, %v3063
      %3129 = vst.msk [vmem:[%s363 + $0x180] sm:$0xff] %vm3080, %v3064
      %3130 = vst.msk [vmem:[%s363 + $0x188] sm:$0xff] %vm3080, %v3065
      %3131 = vst.msk [vmem:[%s363 + $0x190] sm:$0xff] %vm3080, %v3066
      %3132 = vst.msk [vmem:[%s363 + $0x198] sm:$0xff] %vm3080, %v3067
      %3133 = vst.msk [vmem:[%s363 + $0x1a0] sm:$0xff] %vm3080, %v3068
      %3134 = vst.msk [vmem:[%s363 + $0x1a8] sm:$0xff] %vm3080, %v3069
      %3135 = vst.msk [vmem:[%s363 + $0x1b0] sm:$0xff] %vm3080, %v3070
      %3136 = vst.msk [vmem:[%s363 + $0x1b8] sm:$0xff] %vm3080, %v3071
      %3137 = vst.msk [vmem:[%s363 + $0x1c0] sm:$0xff] %vm3080, %v3072
      %3138 = vst.msk [vmem:[%s363 + $0x1c8] sm:$0xff] %vm3080, %v3073
      %3139 = vst.msk [vmem:[%s363 + $0x1d0] sm:$0xff] %vm3080, %v3074
      %3140 = vst.msk [vmem:[%s363 + $0x1d8] sm:$0xff] %vm3080, %v3075
      %3141 = vst.msk [vmem:[%s363 + $0x1e0] sm:$0xff] %vm3080, %v3076
      %3142 = vst.msk [vmem:[%s363 + $0x1e8] sm:$0xff] %vm3080, %v3077
      %3143 = vst.msk [vmem:[%s363 + $0x1f0] sm:$0xff] %vm3080, %v3078
      %3144 = vst.msk [vmem:[%s363 + $0x1f8] sm:$0xff] %vm3080, %v3079
      %s3145 = smul.u32 64, %s21
      %p3146 = scmp.lt.s32.totalorder %s3145, 127
      %s3147 = scalar_select %p3146, %s3145, 127
      %s3148 = smul.addr %s3147, 8
      %s3149 = scalar_lea.vmem %s9, %s3148
      // Predicated region
      $region57: #{tpu_custom_call.1} parent=55 // pred_check
        %p3150 = pneg %p238
      $region58: #{tpu_custom_call.1} parent=55 // pred_check_branch
        %3152 = sbr.rel (%p3150) target = $region60
      $region59: #{tpu_custom_call.1} parent=55 // pred_region
        %s3153 = smul.u32 64, %s21
      $region60: #{tpu_custom_call.1} parent=55 // pred_fallthru
        _
    $region56: #{tpu_custom_call.1} parent=5 // pred_fallthru
      _
    %p3154 = scmp.le.s32.totalorder 2, %s16
    // Predicated region
    $region61: #{tpu_custom_call.1} parent=5 // pred_check
      %p3155 = pneg %p3154
    $region62: #{tpu_custom_call.1} parent=5 // pred_check_branch
      %3157 = sbr.rel (%p3155) target = $region64
    $region63: #{tpu_custom_call.1} parent=5 // pred_region
      %s3158 = ssub.s32 %s16, 2
      // Predicated region
      $region65: #{tpu_custom_call.1} parent=63 // pred_check
        %p3159 = pneg %p244
      $region66: #{tpu_custom_call.1} parent=63 // pred_check_branch
        %3161 = sbr.rel (%p3159) target = $region68
      $region67: #{tpu_custom_call.1} parent=63 // pred_region
        %s3162 = smul.u32 64, %s22
        %p3163 = scmp.lt.s32.totalorder %s3162, 127
        %s3164 = scalar_select %p3163, %s3162, 127
        %s3165 = smul.addr %s3164, 8
        %s3166 = scalar_lea.vmem %s9, %s3165
      $region68: #{tpu_custom_call.1} parent=63 // pred_fallthru
        _
    $region64: #{tpu_custom_call.1} parent=5 // pred_fallthru
      _
  $region6: #{tpu_custom_call.1} parent=0 // loop_footer
    %s20 = sadd.s32 1, %s16
  $region7: #{tpu_custom_call.1} parent=0 // loop_footer_branch
    %15 = sbr.rel target = $region3
  $region8: #{tpu_custom_call.1} parent=0 // loop_exit
    _

</llo_original>
